<compile_context>
chip_gen: v7x
topology: tpu7x:2x2x1
jax: 0.10.0
libtpu: 0.0.40
codegen_flags: <defaults>
</compile_context>

<pallas_src>
import functools
import math

import jax
import jax.numpy as jnp
from jax import lax
from jax.experimental import pallas as pl
from jax.experimental.pallas import tpu as pltpu


# -----------------------------------------------------------------------------
# Small helpers
# -----------------------------------------------------------------------------
def _nbytes(shape, dtype):
    return math.prod(shape) * jnp.dtype(dtype).itemsize


def _vmem_limit(step_io_bytes, scratch_bytes):
    """Scoped-VMEM budget: double-buffered per-step blocks + scratch + headroom,
    clamped to a range that is legal on every TPU generation (v7x phys = 64MiB).
    """
    need = 2 * step_io_bytes + scratch_bytes + (1 << 20)
    return int(min(64 << 20, max(16 << 20, need)))


# -----------------------------------------------------------------------------
# Pallas kernels
# -----------------------------------------------------------------------------
def _zero_halo(xp_ref, H, W, C):
    """Zero only the 1-pixel halo of the padded image (interior is always fully
    overwritten afterwards) -- saves most of the zeroing store traffic."""
    z = xp_ref.dtype
    xp_ref[:, 0:1, :, :] = jnp.zeros((1, 1, W + 2, C), z)
    xp_ref[:, H + 1:H + 2, :, :] = jnp.zeros((1, 1, W + 2, C), z)
    xp_ref[:, 1:H + 1, 0:1, :] = jnp.zeros((1, H, 1, C), z)
    xp_ref[:, 1:H + 1, W + 1:W + 2, :] = jnp.zeros((1, H, 1, C), z)


def _im2col(xp_ref, patch_ref, H, W, C):
    """patch[:, (3*dy+dx)*C : +C] = padded image shifted by (dy, dx) (bf16)."""
    M = H * W
    # TODO(synk): at C=32 these tap copies are 25% lane-dense; packing W with C
    # onto the lane axis (pltpu.roll for the dx shift) would cut the vst cost.
    for dy in range(3):
        for dx in range(3):
            c0 = (dy * 3 + dx) * C
            patch_ref[:, c0:c0 + C] = (
                xp_ref[:, dy:dy + H, dx:dx + W, :]
                .reshape(M, C).astype(patch_ref.dtype))


def _head_kernel(*refs, num_res_blocks):
    """Fused [Conv2d(z,n,3,pad=1)] + num_res_blocks x ResidualLayer.

    One batch element per grid step; all inter-layer activations stay on-chip.
    refs = (x, w_in, b_in, [w1, b1, w2, b2] * R, out, xp_in, patch_in, xp, patch)
    """
    x_ref = refs[0]
    w_in_ref, b_in_ref = refs[1], refs[2]
    res_refs = refs[3:3 + 4 * num_res_blocks]
    o_ref = refs[3 + 4 * num_res_blocks]
    xp_in_ref, patch_in_ref, xp_ref, patch_ref = refs[-4:]

    _, H, W, Zc = x_ref.shape
    C = w_in_ref.shape[1]
    M = H * W

    # ---- conv_in: 3x3 'same' conv as one deep matmul (depth 9*Zc) ----
    xp_in_ref[...] = jnp.zeros_like(xp_in_ref)
    xp_in_ref[:, 1:H + 1, 1:W + 1, :] = x_ref[...]
    _im2col(xp_in_ref, patch_in_ref, H, W, Zc)
    act = jnp.dot(patch_in_ref[...], w_in_ref[...],
                  preferred_element_type=jnp.float32) + b_in_ref[...]
    # (M, C) f32 -- no ReLU after conv_in (matches the module).

    # ---- residual blocks: relu(x + conv1x1(relu(conv3x3(x)))) ----
    _zero_halo(xp_ref, H, W, C)          # interior rewritten per block
    for r in range(num_res_blocks):
        w1_ref, b1_ref, w2_ref, b2_ref = res_refs[4 * r:4 * r + 4]
        xp_ref[:, 1:H + 1, 1:W + 1, :] = act.reshape(1, H, W, C)
        _im2col(xp_ref, patch_ref, H, W, C)
        h = jnp.dot(patch_ref[...], w1_ref[...],
                    preferred_element_type=jnp.float32)
        h = jnp.maximum(h + b1_ref[...], 0.0)
        # TODO(synk): Dropout2d -> identity (inference / eval mode).
        y = jnp.dot(h.astype(jnp.bfloat16), w2_ref[...],
                    preferred_element_type=jnp.float32)
        y = y + b2_ref[...]
        act = jnp.maximum(act + y, 0.0)

    o_ref[...] = act.reshape(1, H, W, C).astype(o_ref.dtype)


def _convT_kernel(x_ref, w_ref, b_ref, o_ref, xp_ref, patch_ref, *, apply_relu):
    """ConvTranspose2d(k=4, s=2, p=1) via fused phase decomposition.

    One deep matmul of the 3x3 im2col matrix against a (9*Cin, 4*Cpad) weight:
    phase p=(py,px) occupies output columns [p*Cpad:(p+1)*Cpad] and produces
    output parity (2y+py, 2x+px).  The store is 4*Cpad >= 128 lanes wide.
    """
    _, H, W, Cin = x_ref.shape
    P = w_ref.shape[1]
    M = H * W

    _zero_halo(xp_ref, H, W, Cin)
    xp_ref[:, 1:H + 1, 1:W + 1, :] = x_ref[...]
    _im2col(xp_ref, patch_ref, H, W, Cin)

    acc = jnp.dot(patch_ref[...], w_ref[...],
                  preferred_element_type=jnp.float32) + b_ref[...]
    if apply_relu:
        acc = jnp.maximum(acc, 0.0)
    o_ref[...] = acc.reshape(1, M, P).astype(o_ref.dtype)


# -----------------------------------------------------------------------------
# pallas_call wrappers (grid over batch, marked "parallel" for v7x's 2 TCs)
# -----------------------------------------------------------------------------
def head_conv_res(x, conv_in_wb, res_wb):
    """x: (N, H, W, Zc) f32 -> (N, H, W, C) f32."""
    N, H, W, Zc = x.shape
    w_in, b_in = conv_in_wb
    C = w_in.shape[1]
    M = H * W
    R = len(res_wb)

    inputs = [x, w_in, b_in.reshape(1, -1)]
    in_specs = [
        pl.BlockSpec((1, H, W, Zc), lambda n: (n, 0, 0, 0)),
        pl.BlockSpec((9 * Zc, C), lambda n: (0, 0)),
        pl.BlockSpec((1, C), lambda n: (0, 0)),
    ]
    for (w1, b1, w2, b2) in res_wb:
        inputs += [w1, b1.reshape(1, -1), w2, b2.reshape(1, -1)]
        in_specs += [
            pl.BlockSpec((9 * C, C), lambda n: (0, 0)),
            pl.BlockSpec((1, C), lambda n: (0, 0)),
            pl.BlockSpec((C, C), lambda n: (0, 0)),
            pl.BlockSpec((1, C), lambda n: (0, 0)),
        ]

    scratch_defs = [
        ((1, H + 2, W + 2, Zc), jnp.float32),   # padded conv_in input
        ((M, 9 * Zc), jnp.bfloat16),            # conv_in im2col (bf16 operand)
        ((1, H + 2, W + 2, C), jnp.float32),    # padded res-block input
        ((M, 9 * C), jnp.bfloat16),             # res-block im2col (bf16 operand)
    ]
    step_io = (sum(_nbytes(a.shape, a.dtype) for a in inputs[1:])
               + _nbytes((1, H, W, Zc), x.dtype)
               + _nbytes((1, H, W, C), jnp.float32))
    scratch_bytes = sum(_nbytes(s, d) for s, d in scratch_defs)
    cost = pl.CostEstimate(
        flops=int(2 * N * M * (9 * Zc * C + R * (9 * C * C + C * C))),
        transcendentals=0,
        bytes_accessed=int(N * step_io))

    return pl.pallas_call(
        functools.partial(_head_kernel, num_res_blocks=R),
        out_shape=jax.ShapeDtypeStruct((N, H, W, C), jnp.float32),
        grid=(N,),
        in_specs=in_specs,
        out_specs=pl.BlockSpec((1, H, W, C), lambda n: (n, 0, 0, 0)),
        scratch_shapes=[pltpu.VMEM(s, d) for s, d in scratch_defs],
        cost_estimate=cost,
        compiler_params=pltpu.CompilerParams(
            dimension_semantics=("parallel",),
            vmem_limit_bytes=_vmem_limit(step_io, scratch_bytes)),
    )(*inputs)


def conv_transpose_4x4_s2(x, w_fused, b_fused, cout, apply_relu):
    """x: (N,H,W,Cin) f32; w_fused: (9*Cin, 4*Cpad) bf16; b_fused: (4*Cpad,) f32.
    Returns (N, 2H, 2W, cout) f32."""
    N, H, W, Cin = x.shape
    P = w_fused.shape[1]
    cpad = P // 4
    M = H * W

    scratch_defs = [
        ((1, H + 2, W + 2, Cin), jnp.float32),
        ((M, 9 * Cin), jnp.bfloat16),
    ]
    step_io = (_nbytes((1, H, W, Cin), x.dtype)
               + _nbytes(w_fused.shape, w_fused.dtype)
               + _nbytes((1, P), jnp.float32)
               + _nbytes((1, M, P), jnp.float32))
    scratch_bytes = sum(_nbytes(s, d) for s, d in scratch_defs)
    cost = pl.CostEstimate(
        flops=int(2 * N * M * 9 * Cin * P),
        transcendentals=0,
        bytes_accessed=int(N * step_io))

    y = pl.pallas_call(
        functools.partial(_convT_kernel, apply_relu=apply_relu),
        out_shape=jax.ShapeDtypeStruct((N, M, P), jnp.float32),
        grid=(N,),
        in_specs=[
            pl.BlockSpec((1, H, W, Cin), lambda n: (n, 0, 0, 0)),
            pl.BlockSpec((9 * Cin, P), lambda n: (0, 0)),
            pl.BlockSpec((1, P), lambda n: (0, 0)),
        ],
        out_specs=pl.BlockSpec((1, M, P), lambda n: (n, 0, 0)),
        scratch_shapes=[pltpu.VMEM(s, d) for s, d in scratch_defs],
        cost_estimate=cost,
        compiler_params=pltpu.CompilerParams(
            dimension_semantics=("parallel",),
            vmem_limit_bytes=_vmem_limit(step_io, scratch_bytes)),
    )(x, w_fused, b_fused.reshape(1, -1))

    # Phase un-interleave (pure layout): (N, H*W, 4*Cpad) -> (N, 2H, 2W, cout).
    # TODO(synk): fold this into the consumer kernel to save one HBM round trip.
    y = y.reshape(N, H, W, 2, 2, cpad)
    y = jnp.transpose(y, (0, 1, 3, 2, 4, 5)).reshape(N, 2 * H, 2 * W, cpad)
    return y[..., :cout]


# -----------------------------------------------------------------------------
# Parameter construction (deterministic; reference HWIO layouts)
# -----------------------------------------------------------------------------
def init_params(key, n_channels, z_channels, out_channels, num_res_blocks,
                num_downsamplings):
    def conv_w(key, cout, cin, k):
        scale = 1.0 / jnp.sqrt(cin * k * k)
        return jax.random.normal(key, (cout, cin, k, k), jnp.float32) * scale

    def convT_w(key, cin, cout, k):
        scale = 1.0 / jnp.sqrt(cin * k * k)
        return jax.random.normal(key, (cin, cout, k, k), jnp.float32) * scale

    def bias(key, c):
        return jax.random.normal(key, (c,), jnp.float32) * 0.01

    keys = iter(jax.random.split(key, 64))
    params = {}

    # Conv2d(z, n, 3, pad=1) -> HWIO (3,3,Cin,Cout)
    w = conv_w(next(keys), n_channels, z_channels, 3)
    params["conv_in"] = (jnp.transpose(w, (2, 3, 1, 0)),
                         bias(next(keys), n_channels))

    params["res"] = []
    for _ in range(num_res_blocks):
        w1 = conv_w(next(keys), n_channels, n_channels, 3)
        b1 = bias(next(keys), n_channels)
        w2 = conv_w(next(keys), n_channels, n_channels, 1)
        b2 = bias(next(keys), n_channels)
        params["res"].append((jnp.transpose(w1, (2, 3, 1, 0)), b1,
                              jnp.transpose(w2[:, :, 0, 0], (1, 0)), b2))

    # ConvTranspose2d(.., 4, 2, 1): store the equivalent flipped HWIO 4x4 conv.
    params["ups"] = []
    for _ in range(num_downsamplings - 1):
        wt = convT_w(next(keys), n_channels, n_channels, 4)
        w_eq = jnp.transpose(jnp.flip(wt, axis=(2, 3)), (2, 3, 0, 1))
        params["ups"].append((w_eq, bias(next(keys), n_channels)))

    wt = convT_w(next(keys), n_channels, out_channels, 4)
    params["conv_out"] = (jnp.transpose(jnp.flip(wt, axis=(2, 3)), (2, 3, 0, 1)),
                          bias(next(keys), out_channels))
    return params


def _fuse_transpose_conv_weight(w_eq, b):
    """(4,4,Cin,Cout) equivalent-conv weight -> ((9*Cin, 4*Cpad), (4*Cpad,)).

    out[2y+py, 2x+px, co] = sum_{dy,dx,ci} xpad1[y+py+dy, x+px+dx, ci]
                                           * w_eq[2dy+py, 2dx+px, ci, co]
    Cpad rounds Cout up to a multiple of 32 so 4*Cpad is a multiple of 128
    (lane-dense stores, full MXU output columns); padded columns are zero and
    are sliced off by the wrapper.
    """
    cin, cout = w_eq.shape[2], w_eq.shape[3]
    cpad = ((cout + 31) // 32) * 32
    wf = jnp.zeros((3, 3, cin, 4, cpad), jnp.float32)
    for py in range(2):
        for px in range(2):
            p = 2 * py + px
            for dy in range(2):
                for dx in range(2):
                    wf = wf.at[py + dy, px + dx, :, p, :cout].set(
                        w_eq[2 * dy + py, 2 * dx + px])
    bf = jnp.zeros((4, cpad), jnp.float32).at[:, :cout].set(b).reshape(-1)
    return wf.reshape(9 * cin, 4 * cpad), bf


def pack_params(params):
    """Reference-layout params -> kernel-side bf16 matmul weights + f32 biases."""
    bt = jnp.bfloat16
    packed = {}
    w, b = params["conv_in"]
    packed["conv_in"] = (w.reshape(-1, w.shape[-1]).astype(bt), b)
    packed["res"] = [(w1.reshape(-1, w1.shape[-1]).astype(bt), b1,
                      w2.astype(bt), b2)
                     for (w1, b1, w2, b2) in params["res"]]
    packed["ups"] = []
    for (w, b) in params["ups"]:
        wf, bf = _fuse_transpose_conv_weight(w, b)
        packed["ups"].append((wf.astype(bt), bf))
    w, b = params["conv_out"]
    wf, bf = _fuse_transpose_conv_weight(w, b)
    packed["conv_out"] = (wf.astype(bt), bf)
    return packed


# -----------------------------------------------------------------------------
# Decoder forward (Pallas) and pure-JAX reference (mirrors bf16 MXU operands)
# -----------------------------------------------------------------------------
def decoder_forward(packed, x_nchw, *, n_channels, out_channels):
    x = jnp.transpose(x_nchw, (0, 2, 3, 1))   # NCHW -> NHWC

    x = head_conv_res(x, packed["conv_in"], packed["res"])

    for (w, b) in packed["ups"]:
        x = conv_transpose_4x4_s2(x, w, b, n_channels, apply_relu=True)

    w, b = packed["conv_out"]
    x = conv_transpose_4x4_s2(x, w, b, out_channels, apply_relu=False)

    return jnp.transpose(x, (0, 3, 1, 2))     # NHWC -> NCHW


def _conv_ref(x, w, b, pad):
    y = lax.conv_general_dilated(
        x.astype(jnp.bfloat16), w.astype(jnp.bfloat16),
        window_strides=(1, 1), padding=((pad, pad), (pad, pad)),
        dimension_numbers=("NHWC", "HWIO", "NHWC"),
        preferred_element_type=jnp.float32)
    return y + b[None, None, None, :]


def _convT_ref(x, w_eq, b):
    y = lax.conv_general_dilated(
        x.astype(jnp.bfloat16), w_eq.astype(jnp.bfloat16),
        window_strides=(1, 1), padding=((2, 2), (2, 2)),
        lhs_dilation=(2, 2), dimension_numbers=("NHWC", "HWIO", "NHWC"),
        preferred_element_type=jnp.float32)
    return y + b[None, None, None, :]


def decoder_reference(params, x_nchw):
    x = jnp.transpose(x_nchw, (0, 2, 3, 1))
    w, b = params["conv_in"]
    x = _conv_ref(x, w, b, pad=1)
    for (w1, b1, w2, b2) in params["res"]:
        h = jax.nn.relu(_conv_ref(x, w1, b1, pad=1))
        h = _conv_ref(h, w2[None, None, :, :], b2, pad=0)
        x = jax.nn.relu(x + h)
    for (w, b) in params["ups"]:
        x = jax.nn.relu(_convT_ref(x, w, b))
    w, b = params["conv_out"]
    x = _convT_ref(x, w, b)
    return jnp.transpose(x, (0, 3, 1, 2))


# -----------------------------------------------------------------------------
if __name__ == "__main__":
    # Small config: n_channels=32, z_channels=4, out_channels=3,
    # num_res_blocks=2, num_downsamplings=2, latent input 2x4x8x8 (NCHW).
    n_channels, z_channels, out_channels = 32, 4, 3
    num_res_blocks, num_downsamplings = 2, 2

    key = jax.random.PRNGKey(0)
    k_param, k_x = jax.random.split(key)
    params = init_params(k_param, n_channels, z_channels, out_channels,
                         num_res_blocks, num_downsamplings)
    packed = pack_params(params)

    x = jax.random.normal(k_x, (2, z_channels, 8, 8), jnp.float32)  # NCHW

    fwd = jax.jit(functools.partial(decoder_forward,
                                    n_channels=n_channels,
                                    out_channels=out_channels))
    out = jax.block_until_ready(fwd(packed, x))

    expected_hw = 8 * (2 ** num_downsamplings)
    assert out.shape == (2, out_channels, expected_hw, expected_hw), out.shape

    # Reference mirrors the kernel's bf16 MXU operands (f32 accumulation), so
    # remaining differences are accumulation-order only; tolerance reflects the
    # bf16-operand numerics of the fast path.
    ref = jax.block_until_ready(decoder_reference(params, x))
    max_err = float(jnp.max(jnp.abs(out - ref)))
    assert jnp.allclose(out, ref, atol=1e-2, rtol=1e-2), max_err

    print("KERNEL_OK")
</pallas_src>

<mosaic_0001>
module attributes {stable_mosaic.version = 11 : i64} {
  func.func @_head_kernel(%arg0: i32, %arg1: memref<1x8x8x4xf32, #tpu.memory_space<vmem>>, %arg2: memref<36x32xbf16, #tpu.memory_space<vmem>>, %arg3: memref<1x32xf32, #tpu.memory_space<vmem>>, %arg4: memref<288x32xbf16, #tpu.memory_space<vmem>>, %arg5: memref<1x32xf32, #tpu.memory_space<vmem>>, %arg6: memref<32x32xbf16, #tpu.memory_space<vmem>>, %arg7: memref<1x32xf32, #tpu.memory_space<vmem>>, %arg8: memref<288x32xbf16, #tpu.memory_space<vmem>>, %arg9: memref<1x32xf32, #tpu.memory_space<vmem>>, %arg10: memref<32x32xbf16, #tpu.memory_space<vmem>>, %arg11: memref<1x32xf32, #tpu.memory_space<vmem>>, %arg12: memref<1x8x8x32xf32, #tpu.memory_space<vmem>>, %arg13: memref<1x10x10x4xf32, #tpu.memory_space<vmem>>, %arg14: memref<64x36xbf16, #tpu.memory_space<vmem>>, %arg15: memref<1x10x10x32xf32, #tpu.memory_space<vmem>>, %arg16: memref<64x288xbf16, #tpu.memory_space<vmem>>) attributes {dimension_semantics = [#tpu.dimension_semantics<parallel>], iteration_bounds = array<i64: 2>, scalar_prefetch = 0 : i64, scratch_operands = 4 : i64, tpu.core_type = #tpu.core_type<tc>, window_params = [{transform_indices = @transform_0, window_bounds = array<i64: 1, 8, 8, 4>}, {pipeline_mode = #tpu.pipeline_mode<synchronous>, transform_indices = @transform_1, window_bounds = array<i64: 36, 32>}, {pipeline_mode = #tpu.pipeline_mode<synchronous>, transform_indices = @transform_2, window_bounds = array<i64: 1, 32>}, {pipeline_mode = #tpu.pipeline_mode<synchronous>, transform_indices = @transform_3, window_bounds = array<i64: 288, 32>}, {pipeline_mode = #tpu.pipeline_mode<synchronous>, transform_indices = @transform_4, window_bounds = array<i64: 1, 32>}, {pipeline_mode = #tpu.pipeline_mode<synchronous>, transform_indices = @transform_5, window_bounds = array<i64: 32, 32>}, {pipeline_mode = #tpu.pipeline_mode<synchronous>, transform_indices = @transform_6, window_bounds = array<i64: 1, 32>}, {pipeline_mode = #tpu.pipeline_mode<synchronous>, transform_indices = @transform_7, window_bounds = array<i64: 288, 32>}, {pipeline_mode = #tpu.pipeline_mode<synchronous>, transform_indices = @transform_8, window_bounds = array<i64: 1, 32>}, {pipeline_mode = #tpu.pipeline_mode<synchronous>, transform_indices = @transform_9, window_bounds = array<i64: 32, 32>}, {pipeline_mode = #tpu.pipeline_mode<synchronous>, transform_indices = @transform_10, window_bounds = array<i64: 1, 32>}, {transform_indices = @transform_11, window_bounds = array<i64: 1, 8, 8, 32>}]} {
    %cst = arith.constant 0.000000e+00 : f32
    %0 = vector.broadcast %cst : f32 to vector<1x10x10x4xf32>
    %c0 = arith.constant 0 : index
    %c0_0 = arith.constant 0 : index
    %c0_1 = arith.constant 0 : index
    %c0_2 = arith.constant 0 : index
    %1 = vector.load %arg13[%c0, %c0_0, %c0_1, %c0_2] : memref<1x10x10x4xf32, #tpu.memory_space<vmem>>, vector<1x10x10x4xf32>
    tpu.vector_store %arg13[%c0, %c0_0, %c0_1, %c0_2], %0 {strides = array<i32>} : memref<1x10x10x4xf32, #tpu.memory_space<vmem>>, vector<1x10x10x4xf32>,
    %c0_3 = arith.constant 0 : index
    %c0_4 = arith.constant 0 : index
    %c0_5 = arith.constant 0 : index
    %c0_6 = arith.constant 0 : index
    %2 = vector.load %arg1[%c0_3, %c0_4, %c0_5, %c0_6] : memref<1x8x8x4xf32, #tpu.memory_space<vmem>>, vector<1x8x8x4xf32>
    %c0_7 = arith.constant 0 : index
    %c1 = arith.constant 1 : index
    %c1_8 = arith.constant 1 : index
    %c0_9 = arith.constant 0 : index
    %3 = vector.load %arg13[%c0_7, %c1, %c1_8, %c0_9] : memref<1x10x10x4xf32, #tpu.memory_space<vmem>>, vector<1x8x8x4xf32>
    tpu.vector_store %arg13[%c0_7, %c1, %c1_8, %c0_9], %2 {strides = array<i32>} : memref<1x10x10x4xf32, #tpu.memory_space<vmem>>, vector<1x8x8x4xf32>,
    %c0_10 = arith.constant 0 : index
    %c0_11 = arith.constant 0 : index
    %c0_12 = arith.constant 0 : index
    %c0_13 = arith.constant 0 : index
    %4 = vector.load %arg13[%c0_10, %c0_11, %c0_12, %c0_13] : memref<1x10x10x4xf32, #tpu.memory_space<vmem>>, vector<1x8x8x4xf32>
    %5 = vector.shape_cast %4 : vector<1x8x8x4xf32> to vector<64x4xf32>
    %6 = arith.truncf %5 : vector<64x4xf32> to vector<64x4xbf16>
    %c0_14 = arith.constant 0 : index
    %c0_15 = arith.constant 0 : index
    %7 = vector.load %arg14[%c0_14, %c0_15] : memref<64x36xbf16, #tpu.memory_space<vmem>>, vector<64x4xbf16>
    tpu.vector_store %arg14[%c0_14, %c0_15], %6 {strides = array<i32>} : memref<64x36xbf16, #tpu.memory_space<vmem>>, vector<64x4xbf16>,
    %c0_16 = arith.constant 0 : index
    %c0_17 = arith.constant 0 : index
    %c1_18 = arith.constant 1 : index
    %c0_19 = arith.constant 0 : index
    %8 = vector.load %arg13[%c0_16, %c0_17, %c1_18, %c0_19] : memref<1x10x10x4xf32, #tpu.memory_space<vmem>>, vector<1x8x8x4xf32>
    %9 = vector.shape_cast %8 : vector<1x8x8x4xf32> to vector<64x4xf32>
    %10 = arith.truncf %9 : vector<64x4xf32> to vector<64x4xbf16>
    %c0_20 = arith.constant 0 : index
    %c4 = arith.constant 4 : index
    %11 = vector.load %arg14[%c0_20, %c4] : memref<64x36xbf16, #tpu.memory_space<vmem>>, vector<64x4xbf16>
    tpu.vector_store %arg14[%c0_20, %c4], %10 {strides = array<i32>} : memref<64x36xbf16, #tpu.memory_space<vmem>>, vector<64x4xbf16>,
    %c0_21 = arith.constant 0 : index
    %c0_22 = arith.constant 0 : index
    %c2 = arith.constant 2 : index
    %c0_23 = arith.constant 0 : index
    %12 = vector.load %arg13[%c0_21, %c0_22, %c2, %c0_23] : memref<1x10x10x4xf32, #tpu.memory_space<vmem>>, vector<1x8x8x4xf32>
    %13 = vector.shape_cast %12 : vector<1x8x8x4xf32> to vector<64x4xf32>
    %14 = arith.truncf %13 : vector<64x4xf32> to vector<64x4xbf16>
    %c0_24 = arith.constant 0 : index
    %c8 = arith.constant 8 : index
    %15 = vector.load %arg14[%c0_24, %c8] : memref<64x36xbf16, #tpu.memory_space<vmem>>, vector<64x4xbf16>
    tpu.vector_store %arg14[%c0_24, %c8], %14 {strides = array<i32>} : memref<64x36xbf16, #tpu.memory_space<vmem>>, vector<64x4xbf16>,
    %c0_25 = arith.constant 0 : index
    %c1_26 = arith.constant 1 : index
    %c0_27 = arith.constant 0 : index
    %c0_28 = arith.constant 0 : index
    %16 = vector.load %arg13[%c0_25, %c1_26, %c0_27, %c0_28] : memref<1x10x10x4xf32, #tpu.memory_space<vmem>>, vector<1x8x8x4xf32>
    %17 = vector.shape_cast %16 : vector<1x8x8x4xf32> to vector<64x4xf32>
    %18 = arith.truncf %17 : vector<64x4xf32> to vector<64x4xbf16>
    %c0_29 = arith.constant 0 : index
    %c12 = arith.constant 12 : index
    %19 = vector.load %arg14[%c0_29, %c12] : memref<64x36xbf16, #tpu.memory_space<vmem>>, vector<64x4xbf16>
    tpu.vector_store %arg14[%c0_29, %c12], %18 {strides = array<i32>} : memref<64x36xbf16, #tpu.memory_space<vmem>>, vector<64x4xbf16>,
    %c0_30 = arith.constant 0 : index
    %c1_31 = arith.constant 1 : index
    %c1_32 = arith.constant 1 : index
    %c0_33 = arith.constant 0 : index
    %20 = vector.load %arg13[%c0_30, %c1_31, %c1_32, %c0_33] : memref<1x10x10x4xf32, #tpu.memory_space<vmem>>, vector<1x8x8x4xf32>
    %21 = vector.shape_cast %20 : vector<1x8x8x4xf32> to vector<64x4xf32>
    %22 = arith.truncf %21 : vector<64x4xf32> to vector<64x4xbf16>
    %c0_34 = arith.constant 0 : index
    %c16 = arith.constant 16 : index
    %23 = vector.load %arg14[%c0_34, %c16] : memref<64x36xbf16, #tpu.memory_space<vmem>>, vector<64x4xbf16>
    tpu.vector_store %arg14[%c0_34, %c16], %22 {strides = array<i32>} : memref<64x36xbf16, #tpu.memory_space<vmem>>, vector<64x4xbf16>,
    %c0_35 = arith.constant 0 : index
    %c1_36 = arith.constant 1 : index
    %c2_37 = arith.constant 2 : index
    %c0_38 = arith.constant 0 : index
    %24 = vector.load %arg13[%c0_35, %c1_36, %c2_37, %c0_38] : memref<1x10x10x4xf32, #tpu.memory_space<vmem>>, vector<1x8x8x4xf32>
    %25 = vector.shape_cast %24 : vector<1x8x8x4xf32> to vector<64x4xf32>
    %26 = arith.truncf %25 : vector<64x4xf32> to vector<64x4xbf16>
    %c0_39 = arith.constant 0 : index
    %c20 = arith.constant 20 : index
    %27 = vector.load %arg14[%c0_39, %c20] : memref<64x36xbf16, #tpu.memory_space<vmem>>, vector<64x4xbf16>
    tpu.vector_store %arg14[%c0_39, %c20], %26 {strides = array<i32>} : memref<64x36xbf16, #tpu.memory_space<vmem>>, vector<64x4xbf16>,
    %c0_40 = arith.constant 0 : index
    %c2_41 = arith.constant 2 : index
    %c0_42 = arith.constant 0 : index
    %c0_43 = arith.constant 0 : index
    %28 = vector.load %arg13[%c0_40, %c2_41, %c0_42, %c0_43] : memref<1x10x10x4xf32, #tpu.memory_space<vmem>>, vector<1x8x8x4xf32>
    %29 = vector.shape_cast %28 : vector<1x8x8x4xf32> to vector<64x4xf32>
    %30 = arith.truncf %29 : vector<64x4xf32> to vector<64x4xbf16>
    %c0_44 = arith.constant 0 : index
    %c24 = arith.constant 24 : index
    %31 = vector.load %arg14[%c0_44, %c24] : memref<64x36xbf16, #tpu.memory_space<vmem>>, vector<64x4xbf16>
    tpu.vector_store %arg14[%c0_44, %c24], %30 {strides = array<i32>} : memref<64x36xbf16, #tpu.memory_space<vmem>>, vector<64x4xbf16>,
    %c0_45 = arith.constant 0 : index
    %c2_46 = arith.constant 2 : index
    %c1_47 = arith.constant 1 : index
    %c0_48 = arith.constant 0 : index
    %32 = vector.load %arg13[%c0_45, %c2_46, %c1_47, %c0_48] : memref<1x10x10x4xf32, #tpu.memory_space<vmem>>, vector<1x8x8x4xf32>
    %33 = vector.shape_cast %32 : vector<1x8x8x4xf32> to vector<64x4xf32>
    %34 = arith.truncf %33 : vector<64x4xf32> to vector<64x4xbf16>
    %c0_49 = arith.constant 0 : index
    %c28 = arith.constant 28 : index
    %35 = vector.load %arg14[%c0_49, %c28] : memref<64x36xbf16, #tpu.memory_space<vmem>>, vector<64x4xbf16>
    tpu.vector_store %arg14[%c0_49, %c28], %34 {strides = array<i32>} : memref<64x36xbf16, #tpu.memory_space<vmem>>, vector<64x4xbf16>,
    %c0_50 = arith.constant 0 : index
    %c2_51 = arith.constant 2 : index
    %c2_52 = arith.constant 2 : index
    %c0_53 = arith.constant 0 : index
    %36 = vector.load %arg13[%c0_50, %c2_51, %c2_52, %c0_53] : memref<1x10x10x4xf32, #tpu.memory_space<vmem>>, vector<1x8x8x4xf32>
    %37 = vector.shape_cast %36 : vector<1x8x8x4xf32> to vector<64x4xf32>
    %38 = arith.truncf %37 : vector<64x4xf32> to vector<64x4xbf16>
    %c0_54 = arith.constant 0 : index
    %c32 = arith.constant 32 : index
    %39 = vector.load %arg14[%c0_54, %c32] : memref<64x36xbf16, #tpu.memory_space<vmem>>, vector<64x4xbf16>
    tpu.vector_store %arg14[%c0_54, %c32], %38 {strides = array<i32>} : memref<64x36xbf16, #tpu.memory_space<vmem>>, vector<64x4xbf16>,
    %c0_55 = arith.constant 0 : index
    %c0_56 = arith.constant 0 : index
    %40 = vector.load %arg14[%c0_55, %c0_56] : memref<64x36xbf16, #tpu.memory_space<vmem>>, vector<64x36xbf16>
    %c0_57 = arith.constant 0 : index
    %c0_58 = arith.constant 0 : index
    %41 = vector.load %arg2[%c0_57, %c0_58] : memref<36x32xbf16, #tpu.memory_space<vmem>>, vector<36x32xbf16>
    %cst_59 = arith.constant dense<0.000000e+00> : vector<64x32xf32>
    %42 = tpu.matmul %40, %41, %cst_59 {dimension_numbers = #tpu.dot_dimension_numbers<[1], [0], [0], [1], [0, 0, 1, 1], [], []>} : vector<64x36xbf16>, vector<36x32xbf16>, vector<64x32xf32> -> vector<64x32xf32>
    %c0_60 = arith.constant 0 : index
    %c0_61 = arith.constant 0 : index
    %43 = vector.load %arg3[%c0_60, %c0_61] : memref<1x32xf32, #tpu.memory_space<vmem>>, vector<1x32xf32>
    %44 = vector.broadcast %43 : vector<1x32xf32> to vector<64x32xf32>
    %45 = arith.addf %42, %44 : vector<64x32xf32>
    %cst_62 = arith.constant 0.000000e+00 : f32
    %46 = vector.broadcast %cst_62 : f32 to vector<1x1x10x32xf32>
    %c0_63 = arith.constant 0 : index
    %c0_64 = arith.constant 0 : index
    %c0_65 = arith.constant 0 : index
    %c0_66 = arith.constant 0 : index
    %47 = vector.load %arg15[%c0_63, %c0_64, %c0_65, %c0_66] : memref<1x10x10x32xf32, #tpu.memory_space<vmem>>, vector<1x1x10x32xf32>
    tpu.vector_store %arg15[%c0_63, %c0_64, %c0_65, %c0_66], %46 {strides = array<i32>} : memref<1x10x10x32xf32, #tpu.memory_space<vmem>>, vector<1x1x10x32xf32>,
    %cst_67 = arith.constant 0.000000e+00 : f32
    %48 = vector.broadcast %cst_67 : f32 to vector<1x1x10x32xf32>
    %c0_68 = arith.constant 0 : index
    %c9 = arith.constant 9 : index
    %c0_69 = arith.constant 0 : index
    %c0_70 = arith.constant 0 : index
    %49 = vector.load %arg15[%c0_68, %c9, %c0_69, %c0_70] : memref<1x10x10x32xf32, #tpu.memory_space<vmem>>, vector<1x1x10x32xf32>
    tpu.vector_store %arg15[%c0_68, %c9, %c0_69, %c0_70], %48 {strides = array<i32>} : memref<1x10x10x32xf32, #tpu.memory_space<vmem>>, vector<1x1x10x32xf32>,
    %cst_71 = arith.constant 0.000000e+00 : f32
    %50 = vector.broadcast %cst_71 : f32 to vector<1x8x1x32xf32>
    %c0_72 = arith.constant 0 : index
    %c1_73 = arith.constant 1 : index
    %c0_74 = arith.constant 0 : index
    %c0_75 = arith.constant 0 : index
    %51 = vector.load %arg15[%c0_72, %c1_73, %c0_74, %c0_75] : memref<1x10x10x32xf32, #tpu.memory_space<vmem>>, vector<1x8x1x32xf32>
    tpu.vector_store %arg15[%c0_72, %c1_73, %c0_74, %c0_75], %50 {strides = array<i32>} : memref<1x10x10x32xf32, #tpu.memory_space<vmem>>, vector<1x8x1x32xf32>,
    %cst_76 = arith.constant 0.000000e+00 : f32
    %52 = vector.broadcast %cst_76 : f32 to vector<1x8x1x32xf32>
    %c0_77 = arith.constant 0 : index
    %c1_78 = arith.constant 1 : index
    %c9_79 = arith.constant 9 : index
    %c0_80 = arith.constant 0 : index
    %53 = vector.load %arg15[%c0_77, %c1_78, %c9_79, %c0_80] : memref<1x10x10x32xf32, #tpu.memory_space<vmem>>, vector<1x8x1x32xf32>
    tpu.vector_store %arg15[%c0_77, %c1_78, %c9_79, %c0_80], %52 {strides = array<i32>} : memref<1x10x10x32xf32, #tpu.memory_space<vmem>>, vector<1x8x1x32xf32>,
    %54 = vector.shape_cast %45 : vector<64x32xf32> to vector<1x8x8x32xf32>
    %c0_81 = arith.constant 0 : index
    %c1_82 = arith.constant 1 : index
    %c1_83 = arith.constant 1 : index
    %c0_84 = arith.constant 0 : index
    %55 = vector.load %arg15[%c0_81, %c1_82, %c1_83, %c0_84] : memref<1x10x10x32xf32, #tpu.memory_space<vmem>>, vector<1x8x8x32xf32>
    tpu.vector_store %arg15[%c0_81, %c1_82, %c1_83, %c0_84], %54 {strides = array<i32>} : memref<1x10x10x32xf32, #tpu.memory_space<vmem>>, vector<1x8x8x32xf32>,
    %c0_85 = arith.constant 0 : index
    %c0_86 = arith.constant 0 : index
    %c0_87 = arith.constant 0 : index
    %c0_88 = arith.constant 0 : index
    %56 = vector.load %arg15[%c0_85, %c0_86, %c0_87, %c0_88] : memref<1x10x10x32xf32, #tpu.memory_space<vmem>>, vector<1x8x8x32xf32>
    %57 = vector.shape_cast %56 : vector<1x8x8x32xf32> to vector<64x32xf32>
    %58 = arith.truncf %57 : vector<64x32xf32> to vector<64x32xbf16>
    %c0_89 = arith.constant 0 : index
    %c0_90 = arith.constant 0 : index
    %59 = vector.load %arg16[%c0_89, %c0_90] : memref<64x288xbf16, #tpu.memory_space<vmem>>, vector<64x32xbf16>
    tpu.vector_store %arg16[%c0_89, %c0_90], %58 {strides = array<i32>} : memref<64x288xbf16, #tpu.memory_space<vmem>>, vector<64x32xbf16>,
    %c0_91 = arith.constant 0 : index
    %c0_92 = arith.constant 0 : index
    %c1_93 = arith.constant 1 : index
    %c0_94 = arith.constant 0 : index
    %60 = vector.load %arg15[%c0_91, %c0_92, %c1_93, %c0_94] : memref<1x10x10x32xf32, #tpu.memory_space<vmem>>, vector<1x8x8x32xf32>
    %61 = vector.shape_cast %60 : vector<1x8x8x32xf32> to vector<64x32xf32>
    %62 = arith.truncf %61 : vector<64x32xf32> to vector<64x32xbf16>
    %c0_95 = arith.constant 0 : index
    %c32_96 = arith.constant 32 : index
    %63 = vector.load %arg16[%c0_95, %c32_96] : memref<64x288xbf16, #tpu.memory_space<vmem>>, vector<64x32xbf16>
    tpu.vector_store %arg16[%c0_95, %c32_96], %62 {strides = array<i32>} : memref<64x288xbf16, #tpu.memory_space<vmem>>, vector<64x32xbf16>,
    %c0_97 = arith.constant 0 : index
    %c0_98 = arith.constant 0 : index
    %c2_99 = arith.constant 2 : index
    %c0_100 = arith.constant 0 : index
    %64 = vector.load %arg15[%c0_97, %c0_98, %c2_99, %c0_100] : memref<1x10x10x32xf32, #tpu.memory_space<vmem>>, vector<1x8x8x32xf32>
    %65 = vector.shape_cast %64 : vector<1x8x8x32xf32> to vector<64x32xf32>
    %66 = arith.truncf %65 : vector<64x32xf32> to vector<64x32xbf16>
    %c0_101 = arith.constant 0 : index
    %c64 = arith.constant 64 : index
    %67 = vector.load %arg16[%c0_101, %c64] : memref<64x288xbf16, #tpu.memory_space<vmem>>, vector<64x32xbf16>
    tpu.vector_store %arg16[%c0_101, %c64], %66 {strides = array<i32>} : memref<64x288xbf16, #tpu.memory_space<vmem>>, vector<64x32xbf16>,
    %c0_102 = arith.constant 0 : index
    %c1_103 = arith.constant 1 : index
    %c0_104 = arith.constant 0 : index
    %c0_105 = arith.constant 0 : index
    %68 = vector.load %arg15[%c0_102, %c1_103, %c0_104, %c0_105] : memref<1x10x10x32xf32, #tpu.memory_space<vmem>>, vector<1x8x8x32xf32>
    %69 = vector.shape_cast %68 : vector<1x8x8x32xf32> to vector<64x32xf32>
    %70 = arith.truncf %69 : vector<64x32xf32> to vector<64x32xbf16>
    %c0_106 = arith.constant 0 : index
    %c96 = arith.constant 96 : index
    %71 = vector.load %arg16[%c0_106, %c96] : memref<64x288xbf16, #tpu.memory_space<vmem>>, vector<64x32xbf16>
    tpu.vector_store %arg16[%c0_106, %c96], %70 {strides = array<i32>} : memref<64x288xbf16, #tpu.memory_space<vmem>>, vector<64x32xbf16>,
    %c0_107 = arith.constant 0 : index
    %c1_108 = arith.constant 1 : index
    %c1_109 = arith.constant 1 : index
    %c0_110 = arith.constant 0 : index
    %72 = vector.load %arg15[%c0_107, %c1_108, %c1_109, %c0_110] : memref<1x10x10x32xf32, #tpu.memory_space<vmem>>, vector<1x8x8x32xf32>
    %73 = vector.shape_cast %72 : vector<1x8x8x32xf32> to vector<64x32xf32>
    %74 = arith.truncf %73 : vector<64x32xf32> to vector<64x32xbf16>
    %c0_111 = arith.constant 0 : index
    %c128 = arith.constant 128 : index
    %75 = vector.load %arg16[%c0_111, %c128] : memref<64x288xbf16, #tpu.memory_space<vmem>>, vector<64x32xbf16>
    tpu.vector_store %arg16[%c0_111, %c128], %74 {strides = array<i32>} : memref<64x288xbf16, #tpu.memory_space<vmem>>, vector<64x32xbf16>,
    %c0_112 = arith.constant 0 : index
    %c1_113 = arith.constant 1 : index
    %c2_114 = arith.constant 2 : index
    %c0_115 = arith.constant 0 : index
    %76 = vector.load %arg15[%c0_112, %c1_113, %c2_114, %c0_115] : memref<1x10x10x32xf32, #tpu.memory_space<vmem>>, vector<1x8x8x32xf32>
    %77 = vector.shape_cast %76 : vector<1x8x8x32xf32> to vector<64x32xf32>
    %78 = arith.truncf %77 : vector<64x32xf32> to vector<64x32xbf16>
    %c0_116 = arith.constant 0 : index
    %c160 = arith.constant 160 : index
    %79 = vector.load %arg16[%c0_116, %c160] : memref<64x288xbf16, #tpu.memory_space<vmem>>, vector<64x32xbf16>
    tpu.vector_store %arg16[%c0_116, %c160], %78 {strides = array<i32>} : memref<64x288xbf16, #tpu.memory_space<vmem>>, vector<64x32xbf16>,
    %c0_117 = arith.constant 0 : index
    %c2_118 = arith.constant 2 : index
    %c0_119 = arith.constant 0 : index
    %c0_120 = arith.constant 0 : index
    %80 = vector.load %arg15[%c0_117, %c2_118, %c0_119, %c0_120] : memref<1x10x10x32xf32, #tpu.memory_space<vmem>>, vector<1x8x8x32xf32>
    %81 = vector.shape_cast %80 : vector<1x8x8x32xf32> to vector<64x32xf32>
    %82 = arith.truncf %81 : vector<64x32xf32> to vector<64x32xbf16>
    %c0_121 = arith.constant 0 : index
    %c192 = arith.constant 192 : index
    %83 = vector.load %arg16[%c0_121, %c192] : memref<64x288xbf16, #tpu.memory_space<vmem>>, vector<64x32xbf16>
    tpu.vector_store %arg16[%c0_121, %c192], %82 {strides = array<i32>} : memref<64x288xbf16, #tpu.memory_space<vmem>>, vector<64x32xbf16>,
    %c0_122 = arith.constant 0 : index
    %c2_123 = arith.constant 2 : index
    %c1_124 = arith.constant 1 : index
    %c0_125 = arith.constant 0 : index
    %84 = vector.load %arg15[%c0_122, %c2_123, %c1_124, %c0_125] : memref<1x10x10x32xf32, #tpu.memory_space<vmem>>, vector<1x8x8x32xf32>
    %85 = vector.shape_cast %84 : vector<1x8x8x32xf32> to vector<64x32xf32>
    %86 = arith.truncf %85 : vector<64x32xf32> to vector<64x32xbf16>
    %c0_126 = arith.constant 0 : index
    %c224 = arith.constant 224 : index
    %87 = vector.load %arg16[%c0_126, %c224] : memref<64x288xbf16, #tpu.memory_space<vmem>>, vector<64x32xbf16>
    tpu.vector_store %arg16[%c0_126, %c224], %86 {strides = array<i32>} : memref<64x288xbf16, #tpu.memory_space<vmem>>, vector<64x32xbf16>,
    %c0_127 = arith.constant 0 : index
    %c2_128 = arith.constant 2 : index
    %c2_129 = arith.constant 2 : index
    %c0_130 = arith.constant 0 : index
    %88 = vector.load %arg15[%c0_127, %c2_128, %c2_129, %c0_130] : memref<1x10x10x32xf32, #tpu.memory_space<vmem>>, vector<1x8x8x32xf32>
    %89 = vector.shape_cast %88 : vector<1x8x8x32xf32> to vector<64x32xf32>
    %90 = arith.truncf %89 : vector<64x32xf32> to vector<64x32xbf16>
    %c0_131 = arith.constant 0 : index
    %c256 = arith.constant 256 : index
    %91 = vector.load %arg16[%c0_131, %c256] : memref<64x288xbf16, #tpu.memory_space<vmem>>, vector<64x32xbf16>
    tpu.vector_store %arg16[%c0_131, %c256], %90 {strides = array<i32>} : memref<64x288xbf16, #tpu.memory_space<vmem>>, vector<64x32xbf16>,
    %c0_132 = arith.constant 0 : index
    %c0_133 = arith.constant 0 : index
    %92 = vector.load %arg16[%c0_132, %c0_133] : memref<64x288xbf16, #tpu.memory_space<vmem>>, vector<64x288xbf16>
    %c0_134 = arith.constant 0 : index
    %c0_135 = arith.constant 0 : index
    %93 = vector.load %arg4[%c0_134, %c0_135] : memref<288x32xbf16, #tpu.memory_space<vmem>>, vector<288x32xbf16>
    %cst_136 = arith.constant dense<0.000000e+00> : vector<64x32xf32>
    %94 = tpu.matmul %92, %93, %cst_136 {dimension_numbers = #tpu.dot_dimension_numbers<[1], [0], [0], [1], [0, 0, 1, 1], [], []>} : vector<64x288xbf16>, vector<288x32xbf16>, vector<64x32xf32> -> vector<64x32xf32>
    %c0_137 = arith.constant 0 : index
    %c0_138 = arith.constant 0 : index
    %95 = vector.load %arg5[%c0_137, %c0_138] : memref<1x32xf32, #tpu.memory_space<vmem>>, vector<1x32xf32>
    %96 = vector.broadcast %95 : vector<1x32xf32> to vector<64x32xf32>
    %97 = arith.addf %94, %96 : vector<64x32xf32>
    %cst_139 = arith.constant 0.000000e+00 : f32
    %98 = vector.broadcast %cst_139 : f32 to vector<64x32xf32>
    %99 = arith.maximumf %97, %98 : vector<64x32xf32>
    %100 = arith.truncf %99 : vector<64x32xf32> to vector<64x32xbf16>
    %c0_140 = arith.constant 0 : index
    %c0_141 = arith.constant 0 : index
    %101 = vector.load %arg6[%c0_140, %c0_141] : memref<32x32xbf16, #tpu.memory_space<vmem>>, vector<32x32xbf16>
    %cst_142 = arith.constant dense<0.000000e+00> : vector<64x32xf32>
    %102 = tpu.matmul %100, %101, %cst_142 {dimension_numbers = #tpu.dot_dimension_numbers<[1], [0], [0], [1], [0, 0, 1, 1], [], []>} : vector<64x32xbf16>, vector<32x32xbf16>, vector<64x32xf32> -> vector<64x32xf32>
    %c0_143 = arith.constant 0 : index
    %c0_144 = arith.constant 0 : index
    %103 = vector.load %arg7[%c0_143, %c0_144] : memref<1x32xf32, #tpu.memory_space<vmem>>, vector<1x32xf32>
    %104 = vector.broadcast %103 : vector<1x32xf32> to vector<64x32xf32>
    %105 = arith.addf %102, %104 : vector<64x32xf32>
    %106 = arith.addf %45, %105 : vector<64x32xf32>
    %cst_145 = arith.constant 0.000000e+00 : f32
    %107 = vector.broadcast %cst_145 : f32 to vector<64x32xf32>
    %108 = arith.maximumf %106, %107 : vector<64x32xf32>
    %109 = vector.shape_cast %108 : vector<64x32xf32> to vector<1x8x8x32xf32>
    %c0_146 = arith.constant 0 : index
    %c1_147 = arith.constant 1 : index
    %c1_148 = arith.constant 1 : index
    %c0_149 = arith.constant 0 : index
    %110 = vector.load %arg15[%c0_146, %c1_147, %c1_148, %c0_149] : memref<1x10x10x32xf32, #tpu.memory_space<vmem>>, vector<1x8x8x32xf32>
    tpu.vector_store %arg15[%c0_146, %c1_147, %c1_148, %c0_149], %109 {strides = array<i32>} : memref<1x10x10x32xf32, #tpu.memory_space<vmem>>, vector<1x8x8x32xf32>,
    %c0_150 = arith.constant 0 : index
    %c0_151 = arith.constant 0 : index
    %c0_152 = arith.constant 0 : index
    %c0_153 = arith.constant 0 : index
    %111 = vector.load %arg15[%c0_150, %c0_151, %c0_152, %c0_153] : memref<1x10x10x32xf32, #tpu.memory_space<vmem>>, vector<1x8x8x32xf32>
    %112 = vector.shape_cast %111 : vector<1x8x8x32xf32> to vector<64x32xf32>
    %113 = arith.truncf %112 : vector<64x32xf32> to vector<64x32xbf16>
    %c0_154 = arith.constant 0 : index
    %c0_155 = arith.constant 0 : index
    %114 = vector.load %arg16[%c0_154, %c0_155] : memref<64x288xbf16, #tpu.memory_space<vmem>>, vector<64x32xbf16>
    tpu.vector_store %arg16[%c0_154, %c0_155], %113 {strides = array<i32>} : memref<64x288xbf16, #tpu.memory_space<vmem>>, vector<64x32xbf16>,
    %c0_156 = arith.constant 0 : index
    %c0_157 = arith.constant 0 : index
    %c1_158 = arith.constant 1 : index
    %c0_159 = arith.constant 0 : index
    %115 = vector.load %arg15[%c0_156, %c0_157, %c1_158, %c0_159] : memref<1x10x10x32xf32, #tpu.memory_space<vmem>>, vector<1x8x8x32xf32>
    %116 = vector.shape_cast %115 : vector<1x8x8x32xf32> to vector<64x32xf32>
    %117 = arith.truncf %116 : vector<64x32xf32> to vector<64x32xbf16>
    %c0_160 = arith.constant 0 : index
    %c32_161 = arith.constant 32 : index
    %118 = vector.load %arg16[%c0_160, %c32_161] : memref<64x288xbf16, #tpu.memory_space<vmem>>, vector<64x32xbf16>
    tpu.vector_store %arg16[%c0_160, %c32_161], %117 {strides = array<i32>} : memref<64x288xbf16, #tpu.memory_space<vmem>>, vector<64x32xbf16>,
    %c0_162 = arith.constant 0 : index
    %c0_163 = arith.constant 0 : index
    %c2_164 = arith.constant 2 : index
    %c0_165 = arith.constant 0 : index
    %119 = vector.load %arg15[%c0_162, %c0_163, %c2_164, %c0_165] : memref<1x10x10x32xf32, #tpu.memory_space<vmem>>, vector<1x8x8x32xf32>
    %120 = vector.shape_cast %119 : vector<1x8x8x32xf32> to vector<64x32xf32>
    %121 = arith.truncf %120 : vector<64x32xf32> to vector<64x32xbf16>
    %c0_166 = arith.constant 0 : index
    %c64_167 = arith.constant 64 : index
    %122 = vector.load %arg16[%c0_166, %c64_167] : memref<64x288xbf16, #tpu.memory_space<vmem>>, vector<64x32xbf16>
    tpu.vector_store %arg16[%c0_166, %c64_167], %121 {strides = array<i32>} : memref<64x288xbf16, #tpu.memory_space<vmem>>, vector<64x32xbf16>,
    %c0_168 = arith.constant 0 : index
    %c1_169 = arith.constant 1 : index
    %c0_170 = arith.constant 0 : index
    %c0_171 = arith.constant 0 : index
    %123 = vector.load %arg15[%c0_168, %c1_169, %c0_170, %c0_171] : memref<1x10x10x32xf32, #tpu.memory_space<vmem>>, vector<1x8x8x32xf32>
    %124 = vector.shape_cast %123 : vector<1x8x8x32xf32> to vector<64x32xf32>
    %125 = arith.truncf %124 : vector<64x32xf32> to vector<64x32xbf16>
    %c0_172 = arith.constant 0 : index
    %c96_173 = arith.constant 96 : index
    %126 = vector.load %arg16[%c0_172, %c96_173] : memref<64x288xbf16, #tpu.memory_space<vmem>>, vector<64x32xbf16>
    tpu.vector_store %arg16[%c0_172, %c96_173], %125 {strides = array<i32>} : memref<64x288xbf16, #tpu.memory_space<vmem>>, vector<64x32xbf16>,
    %c0_174 = arith.constant 0 : index
    %c1_175 = arith.constant 1 : index
    %c1_176 = arith.constant 1 : index
    %c0_177 = arith.constant 0 : index
    %127 = vector.load %arg15[%c0_174, %c1_175, %c1_176, %c0_177] : memref<1x10x10x32xf32, #tpu.memory_space<vmem>>, vector<1x8x8x32xf32>
    %128 = vector.shape_cast %127 : vector<1x8x8x32xf32> to vector<64x32xf32>
    %129 = arith.truncf %128 : vector<64x32xf32> to vector<64x32xbf16>
    %c0_178 = arith.constant 0 : index
    %c128_179 = arith.constant 128 : index
    %130 = vector.load %arg16[%c0_178, %c128_179] : memref<64x288xbf16, #tpu.memory_space<vmem>>, vector<64x32xbf16>
    tpu.vector_store %arg16[%c0_178, %c128_179], %129 {strides = array<i32>} : memref<64x288xbf16, #tpu.memory_space<vmem>>, vector<64x32xbf16>,
    %c0_180 = arith.constant 0 : index
    %c1_181 = arith.constant 1 : index
    %c2_182 = arith.constant 2 : index
    %c0_183 = arith.constant 0 : index
    %131 = vector.load %arg15[%c0_180, %c1_181, %c2_182, %c0_183] : memref<1x10x10x32xf32, #tpu.memory_space<vmem>>, vector<1x8x8x32xf32>
    %132 = vector.shape_cast %131 : vector<1x8x8x32xf32> to vector<64x32xf32>
    %133 = arith.truncf %132 : vector<64x32xf32> to vector<64x32xbf16>
    %c0_184 = arith.constant 0 : index
    %c160_185 = arith.constant 160 : index
    %134 = vector.load %arg16[%c0_184, %c160_185] : memref<64x288xbf16, #tpu.memory_space<vmem>>, vector<64x32xbf16>
    tpu.vector_store %arg16[%c0_184, %c160_185], %133 {strides = array<i32>} : memref<64x288xbf16, #tpu.memory_space<vmem>>, vector<64x32xbf16>,
    %c0_186 = arith.constant 0 : index
    %c2_187 = arith.constant 2 : index
    %c0_188 = arith.constant 0 : index
    %c0_189 = arith.constant 0 : index
    %135 = vector.load %arg15[%c0_186, %c2_187, %c0_188, %c0_189] : memref<1x10x10x32xf32, #tpu.memory_space<vmem>>, vector<1x8x8x32xf32>
    %136 = vector.shape_cast %135 : vector<1x8x8x32xf32> to vector<64x32xf32>
    %137 = arith.truncf %136 : vector<64x32xf32> to vector<64x32xbf16>
    %c0_190 = arith.constant 0 : index
    %c192_191 = arith.constant 192 : index
    %138 = vector.load %arg16[%c0_190, %c192_191] : memref<64x288xbf16, #tpu.memory_space<vmem>>, vector<64x32xbf16>
    tpu.vector_store %arg16[%c0_190, %c192_191], %137 {strides = array<i32>} : memref<64x288xbf16, #tpu.memory_space<vmem>>, vector<64x32xbf16>,
    %c0_192 = arith.constant 0 : index
    %c2_193 = arith.constant 2 : index
    %c1_194 = arith.constant 1 : index
    %c0_195 = arith.constant 0 : index
    %139 = vector.load %arg15[%c0_192, %c2_193, %c1_194, %c0_195] : memref<1x10x10x32xf32, #tpu.memory_space<vmem>>, vector<1x8x8x32xf32>
    %140 = vector.shape_cast %139 : vector<1x8x8x32xf32> to vector<64x32xf32>
    %141 = arith.truncf %140 : vector<64x32xf32> to vector<64x32xbf16>
    %c0_196 = arith.constant 0 : index
    %c224_197 = arith.constant 224 : index
    %142 = vector.load %arg16[%c0_196, %c224_197] : memref<64x288xbf16, #tpu.memory_space<vmem>>, vector<64x32xbf16>
    tpu.vector_store %arg16[%c0_196, %c224_197], %141 {strides = array<i32>} : memref<64x288xbf16, #tpu.memory_space<vmem>>, vector<64x32xbf16>,
    %c0_198 = arith.constant 0 : index
    %c2_199 = arith.constant 2 : index
    %c2_200 = arith.constant 2 : index
    %c0_201 = arith.constant 0 : index
    %143 = vector.load %arg15[%c0_198, %c2_199, %c2_200, %c0_201] : memref<1x10x10x32xf32, #tpu.memory_space<vmem>>, vector<1x8x8x32xf32>
    %144 = vector.shape_cast %143 : vector<1x8x8x32xf32> to vector<64x32xf32>
    %145 = arith.truncf %144 : vector<64x32xf32> to vector<64x32xbf16>
    %c0_202 = arith.constant 0 : index
    %c256_203 = arith.constant 256 : index
    %146 = vector.load %arg16[%c0_202, %c256_203] : memref<64x288xbf16, #tpu.memory_space<vmem>>, vector<64x32xbf16>
    tpu.vector_store %arg16[%c0_202, %c256_203], %145 {strides = array<i32>} : memref<64x288xbf16, #tpu.memory_space<vmem>>, vector<64x32xbf16>,
    %c0_204 = arith.constant 0 : index
    %c0_205 = arith.constant 0 : index
    %147 = vector.load %arg16[%c0_204, %c0_205] : memref<64x288xbf16, #tpu.memory_space<vmem>>, vector<64x288xbf16>
    %c0_206 = arith.constant 0 : index
    %c0_207 = arith.constant 0 : index
    %148 = vector.load %arg8[%c0_206, %c0_207] : memref<288x32xbf16, #tpu.memory_space<vmem>>, vector<288x32xbf16>
    %cst_208 = arith.constant dense<0.000000e+00> : vector<64x32xf32>
    %149 = tpu.matmul %147, %148, %cst_208 {dimension_numbers = #tpu.dot_dimension_numbers<[1], [0], [0], [1], [0, 0, 1, 1], [], []>} : vector<64x288xbf16>, vector<288x32xbf16>, vector<64x32xf32> -> vector<64x32xf32>
    %c0_209 = arith.constant 0 : index
    %c0_210 = arith.constant 0 : index
    %150 = vector.load %arg9[%c0_209, %c0_210] : memref<1x32xf32, #tpu.memory_space<vmem>>, vector<1x32xf32>
    %151 = vector.broadcast %150 : vector<1x32xf32> to vector<64x32xf32>
    %152 = arith.addf %149, %151 : vector<64x32xf32>
    %cst_211 = arith.constant 0.000000e+00 : f32
    %153 = vector.broadcast %cst_211 : f32 to vector<64x32xf32>
    %154 = arith.maximumf %152, %153 : vector<64x32xf32>
    %155 = arith.truncf %154 : vector<64x32xf32> to vector<64x32xbf16>
    %c0_212 = arith.constant 0 : index
    %c0_213 = arith.constant 0 : index
    %156 = vector.load %arg10[%c0_212, %c0_213] : memref<32x32xbf16, #tpu.memory_space<vmem>>, vector<32x32xbf16>
    %cst_214 = arith.constant dense<0.000000e+00> : vector<64x32xf32>
    %157 = tpu.matmul %155, %156, %cst_214 {dimension_numbers = #tpu.dot_dimension_numbers<[1], [0], [0], [1], [0, 0, 1, 1], [], []>} : vector<64x32xbf16>, vector<32x32xbf16>, vector<64x32xf32> -> vector<64x32xf32>
    %c0_215 = arith.constant 0 : index
    %c0_216 = arith.constant 0 : index
    %158 = vector.load %arg11[%c0_215, %c0_216] : memref<1x32xf32, #tpu.memory_space<vmem>>, vector<1x32xf32>
    %159 = vector.broadcast %158 : vector<1x32xf32> to vector<64x32xf32>
    %160 = arith.addf %157, %159 : vector<64x32xf32>
    %161 = arith.addf %108, %160 : vector<64x32xf32>
    %cst_217 = arith.constant 0.000000e+00 : f32
    %162 = vector.broadcast %cst_217 : f32 to vector<64x32xf32>
    %163 = arith.maximumf %161, %162 : vector<64x32xf32>
    %164 = vector.shape_cast %163 : vector<64x32xf32> to vector<1x8x8x32xf32>
    %c0_218 = arith.constant 0 : index
    %c0_219 = arith.constant 0 : index
    %c0_220 = arith.constant 0 : index
    %c0_221 = arith.constant 0 : index
    %165 = vector.load %arg12[%c0_218, %c0_219, %c0_220, %c0_221] : memref<1x8x8x32xf32, #tpu.memory_space<vmem>>, vector<1x8x8x32xf32>
    tpu.vector_store %arg12[%c0_218, %c0_219, %c0_220, %c0_221], %164 {strides = array<i32>} : memref<1x8x8x32xf32, #tpu.memory_space<vmem>>, vector<1x8x8x32xf32>,
    return
  }
  func.func @transform_0(%arg0: i32) -> (i32, i32, i32, i32) {
    %c0_i32 = arith.constant 0 : i32
    %c0_i32_0 = arith.constant 0 : i32
    %c0_i32_1 = arith.constant 0 : i32
    %c0_i32_2 = arith.constant 0 : i32
    return %arg0, %c0_i32, %c0_i32_0, %c0_i32_1 : i32, i32, i32, i32
  }
  func.func @transform_1(%arg0: i32) -> (i32, i32) {
    %c0_i32 = arith.constant 0 : i32
    %c0_i32_0 = arith.constant 0 : i32
    %c0_i32_1 = arith.constant 0 : i32
    return %c0_i32, %c0_i32_0 : i32, i32
  }
  func.func @transform_2(%arg0: i32) -> (i32, i32) {
    %c0_i32 = arith.constant 0 : i32
    %c0_i32_0 = arith.constant 0 : i32
    %c0_i32_1 = arith.constant 0 : i32
    return %c0_i32, %c0_i32_0 : i32, i32
  }
  func.func @transform_3(%arg0: i32) -> (i32, i32) {
    %c0_i32 = arith.constant 0 : i32
    %c0_i32_0 = arith.constant 0 : i32
    %c0_i32_1 = arith.constant 0 : i32
    return %c0_i32, %c0_i32_0 : i32, i32
  }
  func.func @transform_4(%arg0: i32) -> (i32, i32) {
    %c0_i32 = arith.constant 0 : i32
    %c0_i32_0 = arith.constant 0 : i32
    %c0_i32_1 = arith.constant 0 : i32
    return %c0_i32, %c0_i32_0 : i32, i32
  }
  func.func @transform_5(%arg0: i32) -> (i32, i32) {
    %c0_i32 = arith.constant 0 : i32
    %c0_i32_0 = arith.constant 0 : i32
    %c0_i32_1 = arith.constant 0 : i32
    return %c0_i32, %c0_i32_0 : i32, i32
  }
  func.func @transform_6(%arg0: i32) -> (i32, i32) {
    %c0_i32 = arith.constant 0 : i32
    %c0_i32_0 = arith.constant 0 : i32
    %c0_i32_1 = arith.constant 0 : i32
    return %c0_i32, %c0_i32_0 : i32, i32
  }
  func.func @transform_7(%arg0: i32) -> (i32, i32) {
    %c0_i32 = arith.constant 0 : i32
    %c0_i32_0 = arith.constant 0 : i32
    %c0_i32_1 = arith.constant 0 : i32
    return %c0_i32, %c0_i32_0 : i32, i32
  }
  func.func @transform_8(%arg0: i32) -> (i32, i32) {
    %c0_i32 = arith.constant 0 : i32
    %c0_i32_0 = arith.constant 0 : i32
    %c0_i32_1 = arith.constant 0 : i32
    return %c0_i32, %c0_i32_0 : i32, i32
  }
  func.func @transform_9(%arg0: i32) -> (i32, i32) {
    %c0_i32 = arith.constant 0 : i32
    %c0_i32_0 = arith.constant 0 : i32
    %c0_i32_1 = arith.constant 0 : i32
    return %c0_i32, %c0_i32_0 : i32, i32
  }
  func.func @transform_10(%arg0: i32) -> (i32, i32) {
    %c0_i32 = arith.constant 0 : i32
    %c0_i32_0 = arith.constant 0 : i32
    %c0_i32_1 = arith.constant 0 : i32
    return %c0_i32, %c0_i32_0 : i32, i32
  }
  func.func @transform_11(%arg0: i32) -> (i32, i32, i32, i32) {
    %c0_i32 = arith.constant 0 : i32
    %c0_i32_0 = arith.constant 0 : i32
    %c0_i32_1 = arith.constant 0 : i32
    %c0_i32_2 = arith.constant 0 : i32
    return %arg0, %c0_i32, %c0_i32_0, %c0_i32_1 : i32, i32, i32, i32
  }
}

module attributes {stable_mosaic.version = 11 : i64} {
  func.func @_convT_kernel(%arg0: i32, %arg1: memref<1x8x8x32xf32, #tpu.memory_space<vmem>>, %arg2: memref<288x128xbf16, #tpu.memory_space<vmem>>, %arg3: memref<1x128xf32, #tpu.memory_space<vmem>>, %arg4: memref<1x64x128xf32, #tpu.memory_space<vmem>>, %arg5: memref<1x10x10x32xf32, #tpu.memory_space<vmem>>, %arg6: memref<64x288xbf16, #tpu.memory_space<vmem>>) attributes {dimension_semantics = [#tpu.dimension_semantics<parallel>], iteration_bounds = array<i64: 2>, scalar_prefetch = 0 : i64, scratch_operands = 2 : i64, tpu.core_type = #tpu.core_type<tc>, window_params = [{transform_indices = @transform_0, window_bounds = array<i64: 1, 8, 8, 32>}, {pipeline_mode = #tpu.pipeline_mode<synchronous>, transform_indices = @transform_1, window_bounds = array<i64: 288, 128>}, {pipeline_mode = #tpu.pipeline_mode<synchronous>, transform_indices = @transform_2, window_bounds = array<i64: 1, 128>}, {transform_indices = @transform_3, window_bounds = array<i64: 1, 64, 128>}]} {
    %cst = arith.constant 0.000000e+00 : f32
    %0 = vector.broadcast %cst : f32 to vector<1x1x10x32xf32>
    %c0 = arith.constant 0 : index
    %c0_0 = arith.constant 0 : index
    %c0_1 = arith.constant 0 : index
    %c0_2 = arith.constant 0 : index
    %1 = vector.load %arg5[%c0, %c0_0, %c0_1, %c0_2] : memref<1x10x10x32xf32, #tpu.memory_space<vmem>>, vector<1x1x10x32xf32>
    tpu.vector_store %arg5[%c0, %c0_0, %c0_1, %c0_2], %0 {strides = array<i32>} : memref<1x10x10x32xf32, #tpu.memory_space<vmem>>, vector<1x1x10x32xf32>,
    %cst_3 = arith.constant 0.000000e+00 : f32
    %2 = vector.broadcast %cst_3 : f32 to vector<1x1x10x32xf32>
    %c0_4 = arith.constant 0 : index
    %c9 = arith.constant 9 : index
    %c0_5 = arith.constant 0 : index
    %c0_6 = arith.constant 0 : index
    %3 = vector.load %arg5[%c0_4, %c9, %c0_5, %c0_6] : memref<1x10x10x32xf32, #tpu.memory_space<vmem>>, vector<1x1x10x32xf32>
    tpu.vector_store %arg5[%c0_4, %c9, %c0_5, %c0_6], %2 {strides = array<i32>} : memref<1x10x10x32xf32, #tpu.memory_space<vmem>>, vector<1x1x10x32xf32>,
    %cst_7 = arith.constant 0.000000e+00 : f32
    %4 = vector.broadcast %cst_7 : f32 to vector<1x8x1x32xf32>
    %c0_8 = arith.constant 0 : index
    %c1 = arith.constant 1 : index
    %c0_9 = arith.constant 0 : index
    %c0_10 = arith.constant 0 : index
    %5 = vector.load %arg5[%c0_8, %c1, %c0_9, %c0_10] : memref<1x10x10x32xf32, #tpu.memory_space<vmem>>, vector<1x8x1x32xf32>
    tpu.vector_store %arg5[%c0_8, %c1, %c0_9, %c0_10], %4 {strides = array<i32>} : memref<1x10x10x32xf32, #tpu.memory_space<vmem>>, vector<1x8x1x32xf32>,
    %cst_11 = arith.constant 0.000000e+00 : f32
    %6 = vector.broadcast %cst_11 : f32 to vector<1x8x1x32xf32>
    %c0_12 = arith.constant 0 : index
    %c1_13 = arith.constant 1 : index
    %c9_14 = arith.constant 9 : index
    %c0_15 = arith.constant 0 : index
    %7 = vector.load %arg5[%c0_12, %c1_13, %c9_14, %c0_15] : memref<1x10x10x32xf32, #tpu.memory_space<vmem>>, vector<1x8x1x32xf32>
    tpu.vector_store %arg5[%c0_12, %c1_13, %c9_14, %c0_15], %6 {strides = array<i32>} : memref<1x10x10x32xf32, #tpu.memory_space<vmem>>, vector<1x8x1x32xf32>,
    %c0_16 = arith.constant 0 : index
    %c0_17 = arith.constant 0 : index
    %c0_18 = arith.constant 0 : index
    %c0_19 = arith.constant 0 : index
    %8 = vector.load %arg1[%c0_16, %c0_17, %c0_18, %c0_19] : memref<1x8x8x32xf32, #tpu.memory_space<vmem>>, vector<1x8x8x32xf32>
    %c0_20 = arith.constant 0 : index
    %c1_21 = arith.constant 1 : index
    %c1_22 = arith.constant 1 : index
    %c0_23 = arith.constant 0 : index
    %9 = vector.load %arg5[%c0_20, %c1_21, %c1_22, %c0_23] : memref<1x10x10x32xf32, #tpu.memory_space<vmem>>, vector<1x8x8x32xf32>
    tpu.vector_store %arg5[%c0_20, %c1_21, %c1_22, %c0_23], %8 {strides = array<i32>} : memref<1x10x10x32xf32, #tpu.memory_space<vmem>>, vector<1x8x8x32xf32>,
    %c0_24 = arith.constant 0 : index
    %c0_25 = arith.constant 0 : index
    %c0_26 = arith.constant 0 : index
    %c0_27 = arith.constant 0 : index
    %10 = vector.load %arg5[%c0_24, %c0_25, %c0_26, %c0_27] : memref<1x10x10x32xf32, #tpu.memory_space<vmem>>, vector<1x8x8x32xf32>
    %11 = vector.shape_cast %10 : vector<1x8x8x32xf32> to vector<64x32xf32>
    %12 = arith.truncf %11 : vector<64x32xf32> to vector<64x32xbf16>
    %c0_28 = arith.constant 0 : index
    %c0_29 = arith.constant 0 : index
    %13 = vector.load %arg6[%c0_28, %c0_29] : memref<64x288xbf16, #tpu.memory_space<vmem>>, vector<64x32xbf16>
    tpu.vector_store %arg6[%c0_28, %c0_29], %12 {strides = array<i32>} : memref<64x288xbf16, #tpu.memory_space<vmem>>, vector<64x32xbf16>,
    %c0_30 = arith.constant 0 : index
    %c0_31 = arith.constant 0 : index
    %c1_32 = arith.constant 1 : index
    %c0_33 = arith.constant 0 : index
    %14 = vector.load %arg5[%c0_30, %c0_31, %c1_32, %c0_33] : memref<1x10x10x32xf32, #tpu.memory_space<vmem>>, vector<1x8x8x32xf32>
    %15 = vector.shape_cast %14 : vector<1x8x8x32xf32> to vector<64x32xf32>
    %16 = arith.truncf %15 : vector<64x32xf32> to vector<64x32xbf16>
    %c0_34 = arith.constant 0 : index
    %c32 = arith.constant 32 : index
    %17 = vector.load %arg6[%c0_34, %c32] : memref<64x288xbf16, #tpu.memory_space<vmem>>, vector<64x32xbf16>
    tpu.vector_store %arg6[%c0_34, %c32], %16 {strides = array<i32>} : memref<64x288xbf16, #tpu.memory_space<vmem>>, vector<64x32xbf16>,
    %c0_35 = arith.constant 0 : index
    %c0_36 = arith.constant 0 : index
    %c2 = arith.constant 2 : index
    %c0_37 = arith.constant 0 : index
    %18 = vector.load %arg5[%c0_35, %c0_36, %c2, %c0_37] : memref<1x10x10x32xf32, #tpu.memory_space<vmem>>, vector<1x8x8x32xf32>
    %19 = vector.shape_cast %18 : vector<1x8x8x32xf32> to vector<64x32xf32>
    %20 = arith.truncf %19 : vector<64x32xf32> to vector<64x32xbf16>
    %c0_38 = arith.constant 0 : index
    %c64 = arith.constant 64 : index
    %21 = vector.load %arg6[%c0_38, %c64] : memref<64x288xbf16, #tpu.memory_space<vmem>>, vector<64x32xbf16>
    tpu.vector_store %arg6[%c0_38, %c64], %20 {strides = array<i32>} : memref<64x288xbf16, #tpu.memory_space<vmem>>, vector<64x32xbf16>,
    %c0_39 = arith.constant 0 : index
    %c1_40 = arith.constant 1 : index
    %c0_41 = arith.constant 0 : index
    %c0_42 = arith.constant 0 : index
    %22 = vector.load %arg5[%c0_39, %c1_40, %c0_41, %c0_42] : memref<1x10x10x32xf32, #tpu.memory_space<vmem>>, vector<1x8x8x32xf32>
    %23 = vector.shape_cast %22 : vector<1x8x8x32xf32> to vector<64x32xf32>
    %24 = arith.truncf %23 : vector<64x32xf32> to vector<64x32xbf16>
    %c0_43 = arith.constant 0 : index
    %c96 = arith.constant 96 : index
    %25 = vector.load %arg6[%c0_43, %c96] : memref<64x288xbf16, #tpu.memory_space<vmem>>, vector<64x32xbf16>
    tpu.vector_store %arg6[%c0_43, %c96], %24 {strides = array<i32>} : memref<64x288xbf16, #tpu.memory_space<vmem>>, vector<64x32xbf16>,
    %c0_44 = arith.constant 0 : index
    %c1_45 = arith.constant 1 : index
    %c1_46 = arith.constant 1 : index
    %c0_47 = arith.constant 0 : index
    %26 = vector.load %arg5[%c0_44, %c1_45, %c1_46, %c0_47] : memref<1x10x10x32xf32, #tpu.memory_space<vmem>>, vector<1x8x8x32xf32>
    %27 = vector.shape_cast %26 : vector<1x8x8x32xf32> to vector<64x32xf32>
    %28 = arith.truncf %27 : vector<64x32xf32> to vector<64x32xbf16>
    %c0_48 = arith.constant 0 : index
    %c128 = arith.constant 128 : index
    %29 = vector.load %arg6[%c0_48, %c128] : memref<64x288xbf16, #tpu.memory_space<vmem>>, vector<64x32xbf16>
    tpu.vector_store %arg6[%c0_48, %c128], %28 {strides = array<i32>} : memref<64x288xbf16, #tpu.memory_space<vmem>>, vector<64x32xbf16>,
    %c0_49 = arith.constant 0 : index
    %c1_50 = arith.constant 1 : index
    %c2_51 = arith.constant 2 : index
    %c0_52 = arith.constant 0 : index
    %30 = vector.load %arg5[%c0_49, %c1_50, %c2_51, %c0_52] : memref<1x10x10x32xf32, #tpu.memory_space<vmem>>, vector<1x8x8x32xf32>
    %31 = vector.shape_cast %30 : vector<1x8x8x32xf32> to vector<64x32xf32>
    %32 = arith.truncf %31 : vector<64x32xf32> to vector<64x32xbf16>
    %c0_53 = arith.constant 0 : index
    %c160 = arith.constant 160 : index
    %33 = vector.load %arg6[%c0_53, %c160] : memref<64x288xbf16, #tpu.memory_space<vmem>>, vector<64x32xbf16>
    tpu.vector_store %arg6[%c0_53, %c160], %32 {strides = array<i32>} : memref<64x288xbf16, #tpu.memory_space<vmem>>, vector<64x32xbf16>,
    %c0_54 = arith.constant 0 : index
    %c2_55 = arith.constant 2 : index
    %c0_56 = arith.constant 0 : index
    %c0_57 = arith.constant 0 : index
    %34 = vector.load %arg5[%c0_54, %c2_55, %c0_56, %c0_57] : memref<1x10x10x32xf32, #tpu.memory_space<vmem>>, vector<1x8x8x32xf32>
    %35 = vector.shape_cast %34 : vector<1x8x8x32xf32> to vector<64x32xf32>
    %36 = arith.truncf %35 : vector<64x32xf32> to vector<64x32xbf16>
    %c0_58 = arith.constant 0 : index
    %c192 = arith.constant 192 : index
    %37 = vector.load %arg6[%c0_58, %c192] : memref<64x288xbf16, #tpu.memory_space<vmem>>, vector<64x32xbf16>
    tpu.vector_store %arg6[%c0_58, %c192], %36 {strides = array<i32>} : memref<64x288xbf16, #tpu.memory_space<vmem>>, vector<64x32xbf16>,
    %c0_59 = arith.constant 0 : index
    %c2_60 = arith.constant 2 : index
    %c1_61 = arith.constant 1 : index
    %c0_62 = arith.constant 0 : index
    %38 = vector.load %arg5[%c0_59, %c2_60, %c1_61, %c0_62] : memref<1x10x10x32xf32, #tpu.memory_space<vmem>>, vector<1x8x8x32xf32>
    %39 = vector.shape_cast %38 : vector<1x8x8x32xf32> to vector<64x32xf32>
    %40 = arith.truncf %39 : vector<64x32xf32> to vector<64x32xbf16>
    %c0_63 = arith.constant 0 : index
    %c224 = arith.constant 224 : index
    %41 = vector.load %arg6[%c0_63, %c224] : memref<64x288xbf16, #tpu.memory_space<vmem>>, vector<64x32xbf16>
    tpu.vector_store %arg6[%c0_63, %c224], %40 {strides = array<i32>} : memref<64x288xbf16, #tpu.memory_space<vmem>>, vector<64x32xbf16>,
    %c0_64 = arith.constant 0 : index
    %c2_65 = arith.constant 2 : index
    %c2_66 = arith.constant 2 : index
    %c0_67 = arith.constant 0 : index
    %42 = vector.load %arg5[%c0_64, %c2_65, %c2_66, %c0_67] : memref<1x10x10x32xf32, #tpu.memory_space<vmem>>, vector<1x8x8x32xf32>
    %43 = vector.shape_cast %42 : vector<1x8x8x32xf32> to vector<64x32xf32>
    %44 = arith.truncf %43 : vector<64x32xf32> to vector<64x32xbf16>
    %c0_68 = arith.constant 0 : index
    %c256 = arith.constant 256 : index
    %45 = vector.load %arg6[%c0_68, %c256] : memref<64x288xbf16, #tpu.memory_space<vmem>>, vector<64x32xbf16>
    tpu.vector_store %arg6[%c0_68, %c256], %44 {strides = array<i32>} : memref<64x288xbf16, #tpu.memory_space<vmem>>, vector<64x32xbf16>,
    %c0_69 = arith.constant 0 : index
    %c0_70 = arith.constant 0 : index
    %46 = vector.load %arg6[%c0_69, %c0_70] : memref<64x288xbf16, #tpu.memory_space<vmem>>, vector<64x288xbf16>
    %c0_71 = arith.constant 0 : index
    %c0_72 = arith.constant 0 : index
    %47 = vector.load %arg2[%c0_71, %c0_72] : memref<288x128xbf16, #tpu.memory_space<vmem>>, vector<288x128xbf16>
    %cst_73 = arith.constant dense<0.000000e+00> : vector<64x128xf32>
    %48 = tpu.matmul %46, %47, %cst_73 {dimension_numbers = #tpu.dot_dimension_numbers<[1], [0], [0], [1], [0, 0, 1, 1], [], []>} : vector<64x288xbf16>, vector<288x128xbf16>, vector<64x128xf32> -> vector<64x128xf32>
    %c0_74 = arith.constant 0 : index
    %c0_75 = arith.constant 0 : index
    %49 = vector.load %arg3[%c0_74, %c0_75] : memref<1x128xf32, #tpu.memory_space<vmem>>, vector<1x128xf32>
    %50 = vector.broadcast %49 : vector<1x128xf32> to vector<64x128xf32>
    %51 = arith.addf %48, %50 : vector<64x128xf32>
    %cst_76 = arith.constant 0.000000e+00 : f32
    %52 = vector.broadcast %cst_76 : f32 to vector<64x128xf32>
    %53 = arith.maximumf %51, %52 : vector<64x128xf32>
    %54 = vector.shape_cast %53 : vector<64x128xf32> to vector<1x64x128xf32>
    %c0_77 = arith.constant 0 : index
    %c0_78 = arith.constant 0 : index
    %c0_79 = arith.constant 0 : index
    %55 = vector.load %arg4[%c0_77, %c0_78, %c0_79] : memref<1x64x128xf32, #tpu.memory_space<vmem>>, vector<1x64x128xf32>
    tpu.vector_store %arg4[%c0_77, %c0_78, %c0_79], %54 {strides = array<i32>} : memref<1x64x128xf32, #tpu.memory_space<vmem>>, vector<1x64x128xf32>,
    return
  }
  func.func @transform_0(%arg0: i32) -> (i32, i32, i32, i32) {
    %c0_i32 = arith.constant 0 : i32
    %c0_i32_0 = arith.constant 0 : i32
    %c0_i32_1 = arith.constant 0 : i32
    %c0_i32_2 = arith.constant 0 : i32
    return %arg0, %c0_i32, %c0_i32_0, %c0_i32_1 : i32, i32, i32, i32
  }
  func.func @transform_1(%arg0: i32) -> (i32, i32) {
    %c0_i32 = arith.constant 0 : i32
    %c0_i32_0 = arith.constant 0 : i32
    %c0_i32_1 = arith.constant 0 : i32
    return %c0_i32, %c0_i32_0 : i32, i32
  }
  func.func @transform_2(%arg0: i32) -> (i32, i32) {
    %c0_i32 = arith.constant 0 : i32
    %c0_i32_0 = arith.constant 0 : i32
    %c0_i32_1 = arith.constant 0 : i32
    return %c0_i32, %c0_i32_0 : i32, i32
  }
  func.func @transform_3(%arg0: i32) -> (i32, i32, i32) {
    %c0_i32 = arith.constant 0 : i32
    %c0_i32_0 = arith.constant 0 : i32
    %c0_i32_1 = arith.constant 0 : i32
    return %arg0, %c0_i32, %c0_i32_0 : i32, i32, i32
  }
}

module attributes {stable_mosaic.version = 11 : i64} {
  func.func @_convT_kernel(%arg0: i32, %arg1: memref<1x16x16x32xf32, #tpu.memory_space<vmem>>, %arg2: memref<288x128xbf16, #tpu.memory_space<vmem>>, %arg3: memref<1x128xf32, #tpu.memory_space<vmem>>, %arg4: memref<1x256x128xf32, #tpu.memory_space<vmem>>, %arg5: memref<1x18x18x32xf32, #tpu.memory_space<vmem>>, %arg6: memref<256x288xbf16, #tpu.memory_space<vmem>>) attributes {dimension_semantics = [#tpu.dimension_semantics<parallel>], iteration_bounds = array<i64: 2>, scalar_prefetch = 0 : i64, scratch_operands = 2 : i64, tpu.core_type = #tpu.core_type<tc>, window_params = [{transform_indices = @transform_0, window_bounds = array<i64: 1, 16, 16, 32>}, {pipeline_mode = #tpu.pipeline_mode<synchronous>, transform_indices = @transform_1, window_bounds = array<i64: 288, 128>}, {pipeline_mode = #tpu.pipeline_mode<synchronous>, transform_indices = @transform_2, window_bounds = array<i64: 1, 128>}, {transform_indices = @transform_3, window_bounds = array<i64: 1, 256, 128>}]} {
    %cst = arith.constant 0.000000e+00 : f32
    %0 = vector.broadcast %cst : f32 to vector<1x1x18x32xf32>
    %c0 = arith.constant 0 : index
    %c0_0 = arith.constant 0 : index
    %c0_1 = arith.constant 0 : index
    %c0_2 = arith.constant 0 : index
    %1 = vector.load %arg5[%c0, %c0_0, %c0_1, %c0_2] : memref<1x18x18x32xf32, #tpu.memory_space<vmem>>, vector<1x1x18x32xf32>
    tpu.vector_store %arg5[%c0, %c0_0, %c0_1, %c0_2], %0 {strides = array<i32>} : memref<1x18x18x32xf32, #tpu.memory_space<vmem>>, vector<1x1x18x32xf32>,
    %cst_3 = arith.constant 0.000000e+00 : f32
    %2 = vector.broadcast %cst_3 : f32 to vector<1x1x18x32xf32>
    %c0_4 = arith.constant 0 : index
    %c17 = arith.constant 17 : index
    %c0_5 = arith.constant 0 : index
    %c0_6 = arith.constant 0 : index
    %3 = vector.load %arg5[%c0_4, %c17, %c0_5, %c0_6] : memref<1x18x18x32xf32, #tpu.memory_space<vmem>>, vector<1x1x18x32xf32>
    tpu.vector_store %arg5[%c0_4, %c17, %c0_5, %c0_6], %2 {strides = array<i32>} : memref<1x18x18x32xf32, #tpu.memory_space<vmem>>, vector<1x1x18x32xf32>,
    %cst_7 = arith.constant 0.000000e+00 : f32
    %4 = vector.broadcast %cst_7 : f32 to vector<1x16x1x32xf32>
    %c0_8 = arith.constant 0 : index
    %c1 = arith.constant 1 : index
    %c0_9 = arith.constant 0 : index
    %c0_10 = arith.constant 0 : index
    %5 = vector.load %arg5[%c0_8, %c1, %c0_9, %c0_10] : memref<1x18x18x32xf32, #tpu.memory_space<vmem>>, vector<1x16x1x32xf32>
    tpu.vector_store %arg5[%c0_8, %c1, %c0_9, %c0_10], %4 {strides = array<i32>} : memref<1x18x18x32xf32, #tpu.memory_space<vmem>>, vector<1x16x1x32xf32>,
    %cst_11 = arith.constant 0.000000e+00 : f32
    %6 = vector.broadcast %cst_11 : f32 to vector<1x16x1x32xf32>
    %c0_12 = arith.constant 0 : index
    %c1_13 = arith.constant 1 : index
    %c17_14 = arith.constant 17 : index
    %c0_15 = arith.constant 0 : index
    %7 = vector.load %arg5[%c0_12, %c1_13, %c17_14, %c0_15] : memref<1x18x18x32xf32, #tpu.memory_space<vmem>>, vector<1x16x1x32xf32>
    tpu.vector_store %arg5[%c0_12, %c1_13, %c17_14, %c0_15], %6 {strides = array<i32>} : memref<1x18x18x32xf32, #tpu.memory_space<vmem>>, vector<1x16x1x32xf32>,
    %c0_16 = arith.constant 0 : index
    %c0_17 = arith.constant 0 : index
    %c0_18 = arith.constant 0 : index
    %c0_19 = arith.constant 0 : index
    %8 = vector.load %arg1[%c0_16, %c0_17, %c0_18, %c0_19] : memref<1x16x16x32xf32, #tpu.memory_space<vmem>>, vector<1x16x16x32xf32>
    %c0_20 = arith.constant 0 : index
    %c1_21 = arith.constant 1 : index
    %c1_22 = arith.constant 1 : index
    %c0_23 = arith.constant 0 : index
    %9 = vector.load %arg5[%c0_20, %c1_21, %c1_22, %c0_23] : memref<1x18x18x32xf32, #tpu.memory_space<vmem>>, vector<1x16x16x32xf32>
    tpu.vector_store %arg5[%c0_20, %c1_21, %c1_22, %c0_23], %8 {strides = array<i32>} : memref<1x18x18x32xf32, #tpu.memory_space<vmem>>, vector<1x16x16x32xf32>,
    %c0_24 = arith.constant 0 : index
    %c0_25 = arith.constant 0 : index
    %c0_26 = arith.constant 0 : index
    %c0_27 = arith.constant 0 : index
    %10 = vector.load %arg5[%c0_24, %c0_25, %c0_26, %c0_27] : memref<1x18x18x32xf32, #tpu.memory_space<vmem>>, vector<1x16x16x32xf32>
    %11 = vector.shape_cast %10 : vector<1x16x16x32xf32> to vector<256x32xf32>
    %12 = arith.truncf %11 : vector<256x32xf32> to vector<256x32xbf16>
    %c0_28 = arith.constant 0 : index
    %c0_29 = arith.constant 0 : index
    %13 = vector.load %arg6[%c0_28, %c0_29] : memref<256x288xbf16, #tpu.memory_space<vmem>>, vector<256x32xbf16>
    tpu.vector_store %arg6[%c0_28, %c0_29], %12 {strides = array<i32>} : memref<256x288xbf16, #tpu.memory_space<vmem>>, vector<256x32xbf16>,
    %c0_30 = arith.constant 0 : index
    %c0_31 = arith.constant 0 : index
    %c1_32 = arith.constant 1 : index
    %c0_33 = arith.constant 0 : index
    %14 = vector.load %arg5[%c0_30, %c0_31, %c1_32, %c0_33] : memref<1x18x18x32xf32, #tpu.memory_space<vmem>>, vector<1x16x16x32xf32>
    %15 = vector.shape_cast %14 : vector<1x16x16x32xf32> to vector<256x32xf32>
    %16 = arith.truncf %15 : vector<256x32xf32> to vector<256x32xbf16>
    %c0_34 = arith.constant 0 : index
    %c32 = arith.constant 32 : index
    %17 = vector.load %arg6[%c0_34, %c32] : memref<256x288xbf16, #tpu.memory_space<vmem>>, vector<256x32xbf16>
    tpu.vector_store %arg6[%c0_34, %c32], %16 {strides = array<i32>} : memref<256x288xbf16, #tpu.memory_space<vmem>>, vector<256x32xbf16>,
    %c0_35 = arith.constant 0 : index
    %c0_36 = arith.constant 0 : index
    %c2 = arith.constant 2 : index
    %c0_37 = arith.constant 0 : index
    %18 = vector.load %arg5[%c0_35, %c0_36, %c2, %c0_37] : memref<1x18x18x32xf32, #tpu.memory_space<vmem>>, vector<1x16x16x32xf32>
    %19 = vector.shape_cast %18 : vector<1x16x16x32xf32> to vector<256x32xf32>
    %20 = arith.truncf %19 : vector<256x32xf32> to vector<256x32xbf16>
    %c0_38 = arith.constant 0 : index
    %c64 = arith.constant 64 : index
    %21 = vector.load %arg6[%c0_38, %c64] : memref<256x288xbf16, #tpu.memory_space<vmem>>, vector<256x32xbf16>
    tpu.vector_store %arg6[%c0_38, %c64], %20 {strides = array<i32>} : memref<256x288xbf16, #tpu.memory_space<vmem>>, vector<256x32xbf16>,
    %c0_39 = arith.constant 0 : index
    %c1_40 = arith.constant 1 : index
    %c0_41 = arith.constant 0 : index
    %c0_42 = arith.constant 0 : index
    %22 = vector.load %arg5[%c0_39, %c1_40, %c0_41, %c0_42] : memref<1x18x18x32xf32, #tpu.memory_space<vmem>>, vector<1x16x16x32xf32>
    %23 = vector.shape_cast %22 : vector<1x16x16x32xf32> to vector<256x32xf32>
    %24 = arith.truncf %23 : vector<256x32xf32> to vector<256x32xbf16>
    %c0_43 = arith.constant 0 : index
    %c96 = arith.constant 96 : index
    %25 = vector.load %arg6[%c0_43, %c96] : memref<256x288xbf16, #tpu.memory_space<vmem>>, vector<256x32xbf16>
    tpu.vector_store %arg6[%c0_43, %c96], %24 {strides = array<i32>} : memref<256x288xbf16, #tpu.memory_space<vmem>>, vector<256x32xbf16>,
    %c0_44 = arith.constant 0 : index
    %c1_45 = arith.constant 1 : index
    %c1_46 = arith.constant 1 : index
    %c0_47 = arith.constant 0 : index
    %26 = vector.load %arg5[%c0_44, %c1_45, %c1_46, %c0_47] : memref<1x18x18x32xf32, #tpu.memory_space<vmem>>, vector<1x16x16x32xf32>
    %27 = vector.shape_cast %26 : vector<1x16x16x32xf32> to vector<256x32xf32>
    %28 = arith.truncf %27 : vector<256x32xf32> to vector<256x32xbf16>
    %c0_48 = arith.constant 0 : index
    %c128 = arith.constant 128 : index
    %29 = vector.load %arg6[%c0_48, %c128] : memref<256x288xbf16, #tpu.memory_space<vmem>>, vector<256x32xbf16>
    tpu.vector_store %arg6[%c0_48, %c128], %28 {strides = array<i32>} : memref<256x288xbf16, #tpu.memory_space<vmem>>, vector<256x32xbf16>,
    %c0_49 = arith.constant 0 : index
    %c1_50 = arith.constant 1 : index
    %c2_51 = arith.constant 2 : index
    %c0_52 = arith.constant 0 : index
    %30 = vector.load %arg5[%c0_49, %c1_50, %c2_51, %c0_52] : memref<1x18x18x32xf32, #tpu.memory_space<vmem>>, vector<1x16x16x32xf32>
    %31 = vector.shape_cast %30 : vector<1x16x16x32xf32> to vector<256x32xf32>
    %32 = arith.truncf %31 : vector<256x32xf32> to vector<256x32xbf16>
    %c0_53 = arith.constant 0 : index
    %c160 = arith.constant 160 : index
    %33 = vector.load %arg6[%c0_53, %c160] : memref<256x288xbf16, #tpu.memory_space<vmem>>, vector<256x32xbf16>
    tpu.vector_store %arg6[%c0_53, %c160], %32 {strides = array<i32>} : memref<256x288xbf16, #tpu.memory_space<vmem>>, vector<256x32xbf16>,
    %c0_54 = arith.constant 0 : index
    %c2_55 = arith.constant 2 : index
    %c0_56 = arith.constant 0 : index
    %c0_57 = arith.constant 0 : index
    %34 = vector.load %arg5[%c0_54, %c2_55, %c0_56, %c0_57] : memref<1x18x18x32xf32, #tpu.memory_space<vmem>>, vector<1x16x16x32xf32>
    %35 = vector.shape_cast %34 : vector<1x16x16x32xf32> to vector<256x32xf32>
    %36 = arith.truncf %35 : vector<256x32xf32> to vector<256x32xbf16>
    %c0_58 = arith.constant 0 : index
    %c192 = arith.constant 192 : index
    %37 = vector.load %arg6[%c0_58, %c192] : memref<256x288xbf16, #tpu.memory_space<vmem>>, vector<256x32xbf16>
    tpu.vector_store %arg6[%c0_58, %c192], %36 {strides = array<i32>} : memref<256x288xbf16, #tpu.memory_space<vmem>>, vector<256x32xbf16>,
    %c0_59 = arith.constant 0 : index
    %c2_60 = arith.constant 2 : index
    %c1_61 = arith.constant 1 : index
    %c0_62 = arith.constant 0 : index
    %38 = vector.load %arg5[%c0_59, %c2_60, %c1_61, %c0_62] : memref<1x18x18x32xf32, #tpu.memory_space<vmem>>, vector<1x16x16x32xf32>
    %39 = vector.shape_cast %38 : vector<1x16x16x32xf32> to vector<256x32xf32>
    %40 = arith.truncf %39 : vector<256x32xf32> to vector<256x32xbf16>
    %c0_63 = arith.constant 0 : index
    %c224 = arith.constant 224 : index
    %41 = vector.load %arg6[%c0_63, %c224] : memref<256x288xbf16, #tpu.memory_space<vmem>>, vector<256x32xbf16>
    tpu.vector_store %arg6[%c0_63, %c224], %40 {strides = array<i32>} : memref<256x288xbf16, #tpu.memory_space<vmem>>, vector<256x32xbf16>,
    %c0_64 = arith.constant 0 : index
    %c2_65 = arith.constant 2 : index
    %c2_66 = arith.constant 2 : index
    %c0_67 = arith.constant 0 : index
    %42 = vector.load %arg5[%c0_64, %c2_65, %c2_66, %c0_67] : memref<1x18x18x32xf32, #tpu.memory_space<vmem>>, vector<1x16x16x32xf32>
    %43 = vector.shape_cast %42 : vector<1x16x16x32xf32> to vector<256x32xf32>
    %44 = arith.truncf %43 : vector<256x32xf32> to vector<256x32xbf16>
    %c0_68 = arith.constant 0 : index
    %c256 = arith.constant 256 : index
    %45 = vector.load %arg6[%c0_68, %c256] : memref<256x288xbf16, #tpu.memory_space<vmem>>, vector<256x32xbf16>
    tpu.vector_store %arg6[%c0_68, %c256], %44 {strides = array<i32>} : memref<256x288xbf16, #tpu.memory_space<vmem>>, vector<256x32xbf16>,
    %c0_69 = arith.constant 0 : index
    %c0_70 = arith.constant 0 : index
    %46 = vector.load %arg6[%c0_69, %c0_70] : memref<256x288xbf16, #tpu.memory_space<vmem>>, vector<256x288xbf16>
    %c0_71 = arith.constant 0 : index
    %c0_72 = arith.constant 0 : index
    %47 = vector.load %arg2[%c0_71, %c0_72] : memref<288x128xbf16, #tpu.memory_space<vmem>>, vector<288x128xbf16>
    %cst_73 = arith.constant dense<0.000000e+00> : vector<256x128xf32>
    %48 = tpu.matmul %46, %47, %cst_73 {dimension_numbers = #tpu.dot_dimension_numbers<[1], [0], [0], [1], [0, 0, 1, 1], [], []>} : vector<256x288xbf16>, vector<288x128xbf16>, vector<256x128xf32> -> vector<256x128xf32>
    %c0_74 = arith.constant 0 : index
    %c0_75 = arith.constant 0 : index
    %49 = vector.load %arg3[%c0_74, %c0_75] : memref<1x128xf32, #tpu.memory_space<vmem>>, vector<1x128xf32>
    %50 = vector.broadcast %49 : vector<1x128xf32> to vector<256x128xf32>
    %51 = arith.addf %48, %50 : vector<256x128xf32>
    %52 = vector.shape_cast %51 : vector<256x128xf32> to vector<1x256x128xf32>
    %c0_76 = arith.constant 0 : index
    %c0_77 = arith.constant 0 : index
    %c0_78 = arith.constant 0 : index
    %53 = vector.load %arg4[%c0_76, %c0_77, %c0_78] : memref<1x256x128xf32, #tpu.memory_space<vmem>>, vector<1x256x128xf32>
    tpu.vector_store %arg4[%c0_76, %c0_77, %c0_78], %52 {strides = array<i32>} : memref<1x256x128xf32, #tpu.memory_space<vmem>>, vector<1x256x128xf32>,
    return
  }
  func.func @transform_0(%arg0: i32) -> (i32, i32, i32, i32) {
    %c0_i32 = arith.constant 0 : i32
    %c0_i32_0 = arith.constant 0 : i32
    %c0_i32_1 = arith.constant 0 : i32
    %c0_i32_2 = arith.constant 0 : i32
    return %arg0, %c0_i32, %c0_i32_0, %c0_i32_1 : i32, i32, i32, i32
  }
  func.func @transform_1(%arg0: i32) -> (i32, i32) {
    %c0_i32 = arith.constant 0 : i32
    %c0_i32_0 = arith.constant 0 : i32
    %c0_i32_1 = arith.constant 0 : i32
    return %c0_i32, %c0_i32_0 : i32, i32
  }
  func.func @transform_2(%arg0: i32) -> (i32, i32) {
    %c0_i32 = arith.constant 0 : i32
    %c0_i32_0 = arith.constant 0 : i32
    %c0_i32_1 = arith.constant 0 : i32
    return %c0_i32, %c0_i32_0 : i32, i32
  }
  func.func @transform_3(%arg0: i32) -> (i32, i32, i32) {
    %c0_i32 = arith.constant 0 : i32
    %c0_i32_0 = arith.constant 0 : i32
    %c0_i32_1 = arith.constant 0 : i32
    return %arg0, %c0_i32, %c0_i32_0 : i32, i32, i32
  }
}

</mosaic_0001>

<llo_original>
// kernel: decoder_forward.4
$region0: #{decoder_forward.4}
  #allocation0 [shape = 'u32[]', space=smem, size = 0x4, offset = 0x4, fixed_abs, tag = 'smem constant byte address 0x4 - core index']
  #allocation1 [shape = 'u32[144,128]{1,0:T(1,128)}', space=vmem, size = 0x12000, scoped, tag = 'internal scratch']
  #allocation2 [shape = 'f32[1,10,10,32]{3,2,1,0:T(8,128)}', space=vmem, size = 0x14000, scoped, tag = 'scratch operand']
  #allocation3 [shape = 'bf16[64,288]{1,0:T(16,128)(2,1)}', space=vmem, size = 0xc000, scoped, tag = 'scratch operand']
  %s0 = inlined_call_operand.vmem [shape: f32[2,8,8,32], index: 0, kind: input, shape index: {}]
  %s1 = inlined_call_operand.vmem [shape: bf16[288,128], index: 1, kind: input, shape index: {}]
  %s2 = inlined_call_operand.vmem [shape: f32[1,128], index: 2, kind: input, shape index: {}]
  %s3 = inlined_call_operand.vmem [shape: f32[2,64,128], index: 3, kind: output, shape index: {}]
  %s4 = sld [smem:[#allocation0]]
  $region45: #{decoder_forward.4} parent=0
    _
  %s6 = ssub.s32 1, %s4
  %s7 = scalar_select 0, %s6, %s4
  loop: start=0, step=1, limit=4
  $region2: #{decoder_forward.4} parent=0 // loop_pre_header
    _
  $region3: #{decoder_forward.4} parent=0 // loop_header
    %s9 = sphi 0, %s13
    %p10 = scmp.ge.s32.totalorder %s9, 4
    %s19 = sphi 0, %s21
    %s22 = sphi 0, %s19
    %s23 = sphi 0, %s22
    %s39 = sphi 0, %s23
    %s43 = sphi 0, %s43
    %s45 = sphi 0, %s43
    %s46 = sphi 0, %s45
    %s60 = sphi 0, %s46
    %s64 = sphi 0, %s64
    %s66 = sphi 0, %s64
    %s67 = sphi 0, %s66
    %s81 = sphi 0, %s67
    %s87 = sphi 0, %s89
    %s90 = sphi 0, %s87
    %s91 = sphi 0, %s90
    %s107 = sphi 0, %s91
  $region4: #{decoder_forward.4} parent=0 // loop_header_branch
    %12 = sbr.rel (%p10) target = $region8
  $region5: #{decoder_forward.4} parent=0 // loop_body
    %s14 = ssub.s32 %s9, 1
    %s15 = ssub.s32 %s9, 2
    %s16 = sadd.s32 %s9, 1
    %s17 = ssub.s32 %s9, %s16
    %p18 = scmp.eq.s32.totalorder %s17, 0
    %s20 = sadd.s32 %s19, 1
    %s21 = scalar_select %p18, %s19, %s20
    %p24 = pneg %p18
    %p25 = scmp.eq.s32.totalorder %s9, 1
    %p26 = por %p24, %p25
    %p27 = scmp.ne.s32.totalorder %s19, %s22
    %p28 = scmp.eq.s32.totalorder %s9, 0
    %p29 = por %p27, %p28
    %p30 = scmp.ne.s32.totalorder %s19, %s22
    %p31 = scmp.eq.s32.totalorder %s14, 1
    %p32 = por %p30, %p31
    %p33 = scmp.ne.s32.totalorder %s22, %s23
    %p34 = scmp.eq.s32.totalorder %s14, 0
    %p35 = por %p33, %p34
    %p36 = scmp.ne.s32.totalorder %s22, %s23
    %p37 = scmp.eq.s32.totalorder %s15, 1
    %p38 = por %p36, %p37
    %p40 = scmp.ne.s32.totalorder %s23, %s39
    %p41 = scmp.eq.s32.totalorder %s15, 0
    %p42 = por %p40, %p41
    %s44 = sadd.s32 %s43, 1
    %p47 = scmp.eq.s32.totalorder %s9, 1
    %p48 = scmp.ne.s32.totalorder %s43, %s45
    %p49 = scmp.eq.s32.totalorder %s9, 0
    %p50 = por %p48, %p49
    %p51 = scmp.ne.s32.totalorder %s43, %s45
    %p52 = scmp.eq.s32.totalorder %s14, 1
    %p53 = por %p51, %p52
    %p54 = scmp.ne.s32.totalorder %s45, %s46
    %p55 = scmp.eq.s32.totalorder %s14, 0
    %p56 = por %p54, %p55
    %p57 = scmp.ne.s32.totalorder %s45, %s46
    %p58 = scmp.eq.s32.totalorder %s15, 1
    %p59 = por %p57, %p58
    %p61 = scmp.ne.s32.totalorder %s46, %s60
    %p62 = scmp.eq.s32.totalorder %s15, 0
    %p63 = por %p61, %p62
    %s65 = sadd.s32 %s64, 1
    %p68 = scmp.eq.s32.totalorder %s9, 1
    %p69 = scmp.ne.s32.totalorder %s64, %s66
    %p70 = scmp.eq.s32.totalorder %s9, 0
    %p71 = por %p69, %p70
    %p72 = scmp.ne.s32.totalorder %s64, %s66
    %p73 = scmp.eq.s32.totalorder %s14, 1
    %p74 = por %p72, %p73
    %p75 = scmp.ne.s32.totalorder %s66, %s67
    %p76 = scmp.eq.s32.totalorder %s14, 0
    %p77 = por %p75, %p76
    %p78 = scmp.ne.s32.totalorder %s66, %s67
    %p79 = scmp.eq.s32.totalorder %s15, 1
    %p80 = por %p78, %p79
    %p82 = scmp.ne.s32.totalorder %s67, %s81
    %p83 = scmp.eq.s32.totalorder %s15, 0
    %p84 = por %p82, %p83
    %s85 = ssub.s32 %s9, %s16
    %p86 = scmp.eq.s32.totalorder %s85, 0
    %s88 = sadd.s32 %s87, 1
    %s89 = scalar_select %p86, %s87, %s88
    %p92 = pneg %p86
    %p93 = scmp.eq.s32.totalorder %s9, 1
    %p94 = por %p92, %p93
    %p95 = scmp.ne.s32.totalorder %s87, %s90
    %p96 = scmp.eq.s32.totalorder %s9, 0
    %p97 = por %p95, %p96
    %p98 = scmp.ne.s32.totalorder %s87, %s90
    %p99 = scmp.eq.s32.totalorder %s14, 1
    %p100 = por %p98, %p99
    %p101 = scmp.ne.s32.totalorder %s90, %s91
    %p102 = scmp.eq.s32.totalorder %s14, 0
    %p103 = por %p101, %p102
    %p104 = scmp.ne.s32.totalorder %s90, %s91
    %p105 = scmp.eq.s32.totalorder %s15, 1
    %p106 = por %p104, %p105
    %p108 = scmp.ne.s32.totalorder %s91, %s107
    %p109 = scmp.eq.s32.totalorder %s15, 0
    %p110 = por %p108, %p109
    %p111 = scmp.le.s32.totalorder 1, %s9
    %p112 = scmp.lt.s32.totalorder %s9, 3
    %p113 = pnand %p111, %p112
    %p114 = pneg %p113
    // Predicated region
    $region9: #{decoder_forward.4} parent=5 // pred_check
      _
    $region10: #{decoder_forward.4} parent=5 // pred_check_branch
      %116 = sbr.rel (%p113) target = $region12
    $region11: #{decoder_forward.4} parent=5 // pred_region
      %s117 = ssub.s32 %s9, 1
      // Predicated region
      $region13: #{decoder_forward.4} parent=11 // pred_check
        %p118 = pneg %p56
      $region14: #{decoder_forward.4} parent=11 // pred_check_branch
        %120 = sbr.rel (%p118) target = $region16
      $region15: #{decoder_forward.4} parent=11 // pred_region
        _
      $region16: #{decoder_forward.4} parent=11 // pred_fallthru
        _
      // Predicated region
      $region17: #{decoder_forward.4} parent=11 // pred_check
        %p121 = pneg %p77
      $region18: #{decoder_forward.4} parent=11 // pred_check_branch
        %123 = sbr.rel (%p121) target = $region20
      $region19: #{decoder_forward.4} parent=11 // pred_region
        _
      $region20: #{decoder_forward.4} parent=11 // pred_fallthru
        _
    $region12: #{decoder_forward.4} parent=5 // pred_fallthru
      _
    %p124 = scmp.lt.s32.totalorder %s9, 2
    // Predicated region
    $region21: #{decoder_forward.4} parent=5 // pred_check
      %p125 = pneg %p124
    $region22: #{decoder_forward.4} parent=5 // pred_check_branch
      %127 = sbr.rel (%p125) target = $region24
    $region23: #{decoder_forward.4} parent=5 // pred_region
      // Predicated region
      $region25: #{decoder_forward.4} parent=23 // pred_check
        %p128 = pneg %p29
      $region26: #{decoder_forward.4} parent=23 // pred_check_branch
        %130 = sbr.rel (%p128) target = $region28
      $region27: #{decoder_forward.4} parent=23 // pred_region
        %p131 = scmp.lt.s32.totalorder %s9, 1
        %s132 = scalar_select %p131, %s9, 1
        %s133 = smul.addr %s132, 8
        %s134 = smul.addr %s133, 8
        %s135 = scalar_lea.vmem %s0, %s134
      $region28: #{decoder_forward.4} parent=23 // pred_fallthru
        _
    $region24: #{decoder_forward.4} parent=5 // pred_fallthru
      _
    %p136 = scmp.le.s32.totalorder 1, %s9
    %p137 = scmp.lt.s32.totalorder %s9, 3
    %p138 = pnand %p136, %p137
    %p139 = pneg %p138
    // Predicated region
    $region29: #{decoder_forward.4} parent=5 // pred_check
      _
    $region30: #{decoder_forward.4} parent=5 // pred_check_branch
      %141 = sbr.rel (%p138) target = $region32
    $region31: #{decoder_forward.4} parent=5 // pred_region
      %s142 = ssub.s32 %s9, 1
      %p143 = scmp.lt.s32.totalorder %s14, 1
      %s144 = scalar_select %p143, %s14, 1
      %s145 = smul.addr %s144, 8
      %s146 = smul.addr %s145, 8
      %s147 = scalar_lea.vmem %s0, %s146
      %p148 = pneg %p35
      %p149 = pneg %p32
      %p150 = pneg %p56
      %p151 = pneg %p53
      %p152 = pneg %p77
      %p153 = pneg %p74
      %p154 = pneg %p103
      %p155 = pneg %p100
      %p156 = scmp.lt.s32.totalorder %s14, 1
      %s157 = scalar_select %p156, %s14, 1
      %s158 = smul.addr %s157, 8
      %s159 = smul.addr %s158, 8
      %s160 = scalar_lea.vmem %s3, %s159
      %p161 = scmp.lt.s32.totalorder %s14, 1
      %s162 = scalar_select %p161, %s14, 1
      %s163 = smul.addr %s162, 8
      %s164 = smul.addr %s163, 8
      %s165 = scalar_lea.vmem %s0, %s164
      %p166 = scmp.lt.s32.totalorder %s14, 1
      %s167 = scalar_select %p166, %s14, 1
      %s168 = smul.addr %s167, 8
      %s169 = smul.addr %s168, 8
      %s170 = scalar_lea.vmem %s3, %s169
      %vm172 = vcmask 261120
      %173 = vst.msk [vmem:[#allocation2] sm:$0xff] %vm172, 0.0
      %vm174 = vcmask 254976
      %175 = vst.msk [vmem:[#allocation2 + $0x8] sm:$0x3] %vm174, 0.0
      %s176 = scalar_lea.vmem [#allocation2], 144
      %177 = vst.msk [vmem:[%s176] sm:$0xff] %vm172, 0.0
      %178 = vst.msk [vmem:[%s176 + $0x8] sm:$0x3] %vm174, 0.0
      %s179 = scalar_lea.vmem [#allocation2], 16
      %vm180 = vcmask 253952
      %181 = vst.msk [vmem:[%s179] sm:$0x1] %vm180, 0.0
      %182 = vst.msk [vmem:[%s179 + $0x10] sm:$0x1] %vm180, 0.0
      %183 = vst.msk [vmem:[%s179 + $0x20] sm:$0x1] %vm180, 0.0
      %184 = vst.msk [vmem:[%s179 + $0x30] sm:$0x1] %vm180, 0.0
      %185 = vst.msk [vmem:[%s179 + $0x40] sm:$0x1] %vm180, 0.0
      %186 = vst.msk [vmem:[%s179 + $0x50] sm:$0x1] %vm180, 0.0
      %187 = vst.msk [vmem:[%s179 + $0x60] sm:$0x1] %vm180, 0.0
      %188 = vst.msk [vmem:[%s179 + $0x70] sm:$0x1] %vm180, 0.0
      %189 = vst.msk [vmem:[%s179 + $0x9] sm:$0x1] %vm180, 0.0
      %190 = vst.msk [vmem:[%s179 + $0x19] sm:$0x1] %vm180, 0.0
      %191 = vst.msk [vmem:[%s179 + $0x29] sm:$0x1] %vm180, 0.0
      %192 = vst.msk [vmem:[%s179 + $0x39] sm:$0x1] %vm180, 0.0
      %193 = vst.msk [vmem:[%s179 + $0x49] sm:$0x1] %vm180, 0.0
      %194 = vst.msk [vmem:[%s179 + $0x59] sm:$0x1] %vm180, 0.0
      %195 = vst.msk [vmem:[%s179 + $0x69] sm:$0x1] %vm180, 0.0
      %196 = vst.msk [vmem:[%s179 + $0x79] sm:$0x1] %vm180, 0.0
      %v197 = vld [vmem:[%s165] sm:$0xff]
      %v198 = vld [vmem:[%s165 + $0x8] sm:$0xff]
      %v199 = vld [vmem:[%s165 + $0x10] sm:$0xff]
      %v200 = vld [vmem:[%s165 + $0x18] sm:$0xff]
      %v201 = vld [vmem:[%s165 + $0x20] sm:$0xff]
      %v202 = vld [vmem:[%s165 + $0x28] sm:$0xff]
      %v203 = vld [vmem:[%s165 + $0x30] sm:$0xff]
      %v204 = vld [vmem:[%s165 + $0x38] sm:$0xff]
      %205 = vst.msk [vmem:[%s179 + $0x1] sm:$0xff] %vm172, %v197
      %206 = vst.msk [vmem:[%s179 + $0x11] sm:$0xff] %vm172, %v198
      %207 = vst.msk [vmem:[%s179 + $0x21] sm:$0xff] %vm172, %v199
      %208 = vst.msk [vmem:[%s179 + $0x31] sm:$0xff] %vm172, %v200
      %209 = vst.msk [vmem:[%s179 + $0x41] sm:$0xff] %vm172, %v201
      %210 = vst.msk [vmem:[%s179 + $0x51] sm:$0xff] %vm172, %v202
      %211 = vst.msk [vmem:[%s179 + $0x61] sm:$0xff] %vm172, %v203
      %212 = vst.msk [vmem:[%s179 + $0x71] sm:$0xff] %vm172, %v204
      %v213 = vld [vmem:[#allocation2] sm:$0xff]
      %v214 = vld [vmem:[#allocation2 + $0x10] sm:$0xff]
      %v215 = vld [vmem:[#allocation2 + $0x20] sm:$0xff]
      %v216 = vld [vmem:[#allocation2 + $0x30] sm:$0xff]
      %v217 = vld [vmem:[#allocation2 + $0x40] sm:$0xff]
      %v218 = vld [vmem:[#allocation2 + $0x50] sm:$0xff]
      %v219 = vld [vmem:[#allocation2 + $0x60] sm:$0xff]
      %v220 = vld [vmem:[#allocation2 + $0x70] sm:$0xff]
      %v221 = vpack.c.bf16 %v214, %v213
      %v222 = vpack.c.bf16 %v216, %v215
      %v223 = vpack.c.bf16 %v218, %v217
      %v224 = vpack.c.bf16 %v220, %v219
      %225 = vst.msk [vmem:[#allocation3] sm:$0xff] %vm172, %v221
      %226 = vst.msk [vmem:[#allocation3 + $0x18] sm:$0xff] %vm172, %v222
      %227 = vst.msk [vmem:[#allocation3 + $0x30] sm:$0xff] %vm172, %v223
      %228 = vst.msk [vmem:[#allocation3 + $0x48] sm:$0xff] %vm172, %v224
      %v229 = vld [vmem:[#allocation2 + $0x1] sm:$0xff]
      %v230 = vld [vmem:[#allocation2 + $0x11] sm:$0xff]
      %v231 = vld [vmem:[#allocation2 + $0x21] sm:$0xff]
      %v232 = vld [vmem:[#allocation2 + $0x31] sm:$0xff]
      %v233 = vld [vmem:[#allocation2 + $0x41] sm:$0xff]
      %v234 = vld [vmem:[#allocation2 + $0x51] sm:$0xff]
      %v235 = vld [vmem:[#allocation2 + $0x61] sm:$0xff]
      %v236 = vld [vmem:[#allocation2 + $0x71] sm:$0xff]
      %v237 = vpack.c.bf16 %v230, %v229
      %v238 = vpack.c.bf16 %v232, %v231
      %v239 = vpack.c.bf16 %v234, %v233
      %v240 = vpack.c.bf16 %v236, %v235
      %245 = vrot.lane.b32.xlu0 %v237, 32
      %v246 = vpop.permute.xlu0 %245
      %247 = vrot.lane.b32.xlu0 %v238, 32
      %v248 = vpop.permute.xlu0 %247
      %249 = vrot.lane.b32.xlu0 %v239, 32
      %v250 = vpop.permute.xlu0 %249
      %251 = vrot.lane.b32.xlu0 %v240, 32
      %v252 = vpop.permute.xlu0 %251
      %vm257 = vcmask 523520
      %258 = vst.msk [vmem:[#allocation3] sm:$0xff] %vm257, %v246
      %259 = vst.msk [vmem:[#allocation3 + $0x18] sm:$0xff] %vm257, %v248
      %260 = vst.msk [vmem:[#allocation3 + $0x30] sm:$0xff] %vm257, %v250
      %261 = vst.msk [vmem:[#allocation3 + $0x48] sm:$0xff] %vm257, %v252
      %v262 = vld [vmem:[#allocation2 + $0x2] sm:$0xff]
      %v263 = vld [vmem:[#allocation2 + $0x12] sm:$0xff]
      %v264 = vld [vmem:[#allocation2 + $0x22] sm:$0xff]
      %v265 = vld [vmem:[#allocation2 + $0x32] sm:$0xff]
      %v266 = vld [vmem:[#allocation2 + $0x42] sm:$0xff]
      %v267 = vld [vmem:[#allocation2 + $0x52] sm:$0xff]
      %v268 = vld [vmem:[#allocation2 + $0x62] sm:$0xff]
      %v269 = vld [vmem:[#allocation2 + $0x72] sm:$0xff]
      %v270 = vpack.c.bf16 %v263, %v262
      %v271 = vpack.c.bf16 %v265, %v264
      %v272 = vpack.c.bf16 %v267, %v266
      %v273 = vpack.c.bf16 %v269, %v268
      %278 = vrot.lane.b32.xlu0 %v270, 64
      %v279 = vpop.permute.xlu0 %278
      %280 = vrot.lane.b32.xlu0 %v271, 64
      %v281 = vpop.permute.xlu0 %280
      %282 = vrot.lane.b32.xlu0 %v272, 64
      %v283 = vpop.permute.xlu0 %282
      %284 = vrot.lane.b32.xlu0 %v273, 64
      %v285 = vpop.permute.xlu0 %284
      %vm290 = vcmask 785920
      %291 = vst.msk [vmem:[#allocation3] sm:$0xff] %vm290, %v279
      %292 = vst.msk [vmem:[#allocation3 + $0x18] sm:$0xff] %vm290, %v281
      %293 = vst.msk [vmem:[#allocation3 + $0x30] sm:$0xff] %vm290, %v283
      %294 = vst.msk [vmem:[#allocation3 + $0x48] sm:$0xff] %vm290, %v285
      %v295 = vld [vmem:[%s179] sm:$0xff]
      %v296 = vld [vmem:[%s179 + $0x10] sm:$0xff]
      %v297 = vld [vmem:[%s179 + $0x20] sm:$0xff]
      %v298 = vld [vmem:[%s179 + $0x30] sm:$0xff]
      %v299 = vld [vmem:[%s179 + $0x40] sm:$0xff]
      %v300 = vld [vmem:[%s179 + $0x50] sm:$0xff]
      %v301 = vld [vmem:[%s179 + $0x60] sm:$0xff]
      %v302 = vld [vmem:[%s179 + $0x70] sm:$0xff]
      %v303 = vpack.c.bf16 %v296, %v295
      %v304 = vpack.c.bf16 %v298, %v297
      %v305 = vpack.c.bf16 %v300, %v299
      %v306 = vpack.c.bf16 %v302, %v301
      %311 = vrot.lane.b32.xlu0 %v303, 96
      %v312 = vpop.permute.xlu0 %311
      %313 = vrot.lane.b32.xlu0 %v304, 96
      %v314 = vpop.permute.xlu0 %313
      %315 = vrot.lane.b32.xlu0 %v305, 96
      %v316 = vpop.permute.xlu0 %315
      %317 = vrot.lane.b32.xlu0 %v306, 96
      %v318 = vpop.permute.xlu0 %317
      %vm323 = vcmask 1048320
      %324 = vst.msk [vmem:[#allocation3] sm:$0xff] %vm323, %v312
      %325 = vst.msk [vmem:[#allocation3 + $0x18] sm:$0xff] %vm323, %v314
      %326 = vst.msk [vmem:[#allocation3 + $0x30] sm:$0xff] %vm323, %v316
      %327 = vst.msk [vmem:[#allocation3 + $0x48] sm:$0xff] %vm323, %v318
      %v328 = vld [vmem:[%s179 + $0x1] sm:$0xff]
      %v329 = vld [vmem:[%s179 + $0x11] sm:$0xff]
      %v330 = vld [vmem:[%s179 + $0x21] sm:$0xff]
      %v331 = vld [vmem:[%s179 + $0x31] sm:$0xff]
      %v332 = vld [vmem:[%s179 + $0x41] sm:$0xff]
      %v333 = vld [vmem:[%s179 + $0x51] sm:$0xff]
      %v334 = vld [vmem:[%s179 + $0x61] sm:$0xff]
      %v335 = vld [vmem:[%s179 + $0x71] sm:$0xff]
      %v336 = vpack.c.bf16 %v329, %v328
      %v337 = vpack.c.bf16 %v331, %v330
      %v338 = vpack.c.bf16 %v333, %v332
      %v339 = vpack.c.bf16 %v335, %v334
      %340 = vst.msk [vmem:[#allocation3 + $0x8] sm:$0xff] %vm172, %v336
      %341 = vst.msk [vmem:[#allocation3 + $0x20] sm:$0xff] %vm172, %v337
      %342 = vst.msk [vmem:[#allocation3 + $0x38] sm:$0xff] %vm172, %v338
      %343 = vst.msk [vmem:[#allocation3 + $0x50] sm:$0xff] %vm172, %v339
      %v344 = vld [vmem:[%s179 + $0x2] sm:$0xff]
      %v345 = vld [vmem:[%s179 + $0x12] sm:$0xff]
      %v346 = vld [vmem:[%s179 + $0x22] sm:$0xff]
      %v347 = vld [vmem:[%s179 + $0x32] sm:$0xff]
      %v348 = vld [vmem:[%s179 + $0x42] sm:$0xff]
      %v349 = vld [vmem:[%s179 + $0x52] sm:$0xff]
      %v350 = vld [vmem:[%s179 + $0x62] sm:$0xff]
      %v351 = vld [vmem:[%s179 + $0x72] sm:$0xff]
      %v352 = vpack.c.bf16 %v345, %v344
      %v353 = vpack.c.bf16 %v347, %v346
      %v354 = vpack.c.bf16 %v349, %v348
      %v355 = vpack.c.bf16 %v351, %v350
      %360 = vrot.lane.b32.xlu0 %v352, 32
      %v361 = vpop.permute.xlu0 %360
      %362 = vrot.lane.b32.xlu0 %v353, 32
      %v363 = vpop.permute.xlu0 %362
      %364 = vrot.lane.b32.xlu0 %v354, 32
      %v365 = vpop.permute.xlu0 %364
      %366 = vrot.lane.b32.xlu0 %v355, 32
      %v367 = vpop.permute.xlu0 %366
      %372 = vst.msk [vmem:[#allocation3 + $0x8] sm:$0xff] %vm257, %v361
      %373 = vst.msk [vmem:[#allocation3 + $0x20] sm:$0xff] %vm257, %v363
      %374 = vst.msk [vmem:[#allocation3 + $0x38] sm:$0xff] %vm257, %v365
      %375 = vst.msk [vmem:[#allocation3 + $0x50] sm:$0xff] %vm257, %v367
      %s376 = scalar_lea.vmem [#allocation2], 32
      %v377 = vld [vmem:[%s376] sm:$0xff]
      %v378 = vld [vmem:[%s376 + $0x10] sm:$0xff]
      %v379 = vld [vmem:[%s376 + $0x20] sm:$0xff]
      %v380 = vld [vmem:[%s376 + $0x30] sm:$0xff]
      %v381 = vld [vmem:[%s376 + $0x40] sm:$0xff]
      %v382 = vld [vmem:[%s376 + $0x50] sm:$0xff]
      %v383 = vld [vmem:[%s376 + $0x60] sm:$0xff]
      %v384 = vld [vmem:[%s376 + $0x70] sm:$0xff]
      %v385 = vpack.c.bf16 %v378, %v377
      %v386 = vpack.c.bf16 %v380, %v379
      %v387 = vpack.c.bf16 %v382, %v381
      %v388 = vpack.c.bf16 %v384, %v383
      %393 = vrot.lane.b32.xlu0 %v385, 64
      %v394 = vpop.permute.xlu0 %393
      %395 = vrot.lane.b32.xlu0 %v386, 64
      %v396 = vpop.permute.xlu0 %395
      %397 = vrot.lane.b32.xlu0 %v387, 64
      %v398 = vpop.permute.xlu0 %397
      %399 = vrot.lane.b32.xlu0 %v388, 64
      %v400 = vpop.permute.xlu0 %399
      %405 = vst.msk [vmem:[#allocation3 + $0x8] sm:$0xff] %vm290, %v394
      %406 = vst.msk [vmem:[#allocation3 + $0x20] sm:$0xff] %vm290, %v396
      %407 = vst.msk [vmem:[#allocation3 + $0x38] sm:$0xff] %vm290, %v398
      %408 = vst.msk [vmem:[#allocation3 + $0x50] sm:$0xff] %vm290, %v400
      %v409 = vld [vmem:[%s376 + $0x1] sm:$0xff]
      %v410 = vld [vmem:[%s376 + $0x11] sm:$0xff]
      %v411 = vld [vmem:[%s376 + $0x21] sm:$0xff]
      %v412 = vld [vmem:[%s376 + $0x31] sm:$0xff]
      %v413 = vld [vmem:[%s376 + $0x41] sm:$0xff]
      %v414 = vld [vmem:[%s376 + $0x51] sm:$0xff]
      %v415 = vld [vmem:[%s376 + $0x61] sm:$0xff]
      %v416 = vld [vmem:[%s376 + $0x71] sm:$0xff]
      %v417 = vpack.c.bf16 %v410, %v409
      %v418 = vpack.c.bf16 %v412, %v411
      %v419 = vpack.c.bf16 %v414, %v413
      %v420 = vpack.c.bf16 %v416, %v415
      %425 = vrot.lane.b32.xlu0 %v417, 96
      %v426 = vpop.permute.xlu0 %425
      %427 = vrot.lane.b32.xlu0 %v418, 96
      %v428 = vpop.permute.xlu0 %427
      %429 = vrot.lane.b32.xlu0 %v419, 96
      %v430 = vpop.permute.xlu0 %429
      %431 = vrot.lane.b32.xlu0 %v420, 96
      %v432 = vpop.permute.xlu0 %431
      %437 = vst.msk [vmem:[#allocation3 + $0x8] sm:$0xff] %vm323, %v426
      %438 = vst.msk [vmem:[#allocation3 + $0x20] sm:$0xff] %vm323, %v428
      %439 = vst.msk [vmem:[#allocation3 + $0x38] sm:$0xff] %vm323, %v430
      %440 = vst.msk [vmem:[#allocation3 + $0x50] sm:$0xff] %vm323, %v432
      %v441 = vld [vmem:[%s376 + $0x2] sm:$0xff]
      %v442 = vld [vmem:[%s376 + $0x12] sm:$0xff]
      %v443 = vld [vmem:[%s376 + $0x22] sm:$0xff]
      %v444 = vld [vmem:[%s376 + $0x32] sm:$0xff]
      %v445 = vld [vmem:[%s376 + $0x42] sm:$0xff]
      %v446 = vld [vmem:[%s376 + $0x52] sm:$0xff]
      %v447 = vld [vmem:[%s376 + $0x62] sm:$0xff]
      %v448 = vld [vmem:[%s376 + $0x72] sm:$0xff]
      %v449 = vpack.c.bf16 %v442, %v441
      %v450 = vpack.c.bf16 %v444, %v443
      %v451 = vpack.c.bf16 %v446, %v445
      %v452 = vpack.c.bf16 %v448, %v447
      %453 = vst.msk [vmem:[#allocation3 + $0x10] sm:$0xff] %vm172, %v449
      %454 = vst.msk [vmem:[#allocation3 + $0x28] sm:$0xff] %vm172, %v450
      %455 = vst.msk [vmem:[#allocation3 + $0x40] sm:$0xff] %vm172, %v451
      %456 = vst.msk [vmem:[#allocation3 + $0x58] sm:$0xff] %vm172, %v452
      %v457 = vld [vmem:[#allocation3] sm:$0xff]
      %v458 = vld [vmem:[#allocation3 + $0x8] sm:$0xff]
      %v459 = vld [vmem:[#allocation3 + $0x10] sm:$0xff]
      %v460 = vld [vmem:[#allocation3 + $0x18] sm:$0xff]
      %v461 = vld [vmem:[#allocation3 + $0x20] sm:$0xff]
      %v462 = vld [vmem:[#allocation3 + $0x28] sm:$0xff]
      %v463 = vld [vmem:[#allocation3 + $0x30] sm:$0xff]
      %v464 = vld [vmem:[#allocation3 + $0x38] sm:$0xff]
      %v465 = vld [vmem:[#allocation3 + $0x40] sm:$0xff]
      %v466 = vld [vmem:[#allocation3 + $0x48] sm:$0xff]
      %v467 = vld [vmem:[#allocation3 + $0x50] sm:$0xff]
      %v468 = vld [vmem:[#allocation3 + $0x58] sm:$0xff]
      %v469 = vld [vmem:[%s1] sm:$0xf]
      %v470 = vld [vmem:[%s1 + $0x4] sm:$0xf]
      %v471 = vld [vmem:[%s1 + $0x8] sm:$0xf]
      %v472 = vld [vmem:[%s1 + $0xc] sm:$0xf]
      %v473 = vld [vmem:[%s1 + $0x10] sm:$0xf]
      %v474 = vld [vmem:[%s1 + $0x14] sm:$0xf]
      %v475 = vld [vmem:[%s1 + $0x18] sm:$0xf]
      %v476 = vld [vmem:[%s1 + $0x1c] sm:$0xf]
      %v477 = vld [vmem:[%s1 + $0x20] sm:$0xf]
      %v478 = vld [vmem:[%s1 + $0x24] sm:$0xf]
      %v479 = vld [vmem:[%s1 + $0x28] sm:$0xf]
      %v480 = vld [vmem:[%s1 + $0x2c] sm:$0xf]
      %v481 = vld [vmem:[%s1 + $0x30] sm:$0xf]
      %v482 = vld [vmem:[%s1 + $0x34] sm:$0xf]
      %v483 = vld [vmem:[%s1 + $0x38] sm:$0xf]
      %v484 = vld [vmem:[%s1 + $0x3c] sm:$0xf]
      %v485 = vld [vmem:[%s1 + $0x40] sm:$0xf]
      %v486 = vld [vmem:[%s1 + $0x44] sm:$0xf]
      %v487 = vld [vmem:[%s1 + $0x48] sm:$0xf]
      %v488 = vld [vmem:[%s1 + $0x4c] sm:$0xf]
      %v489 = vld [vmem:[%s1 + $0x50] sm:$0xf]
      %v490 = vld [vmem:[%s1 + $0x54] sm:$0xf]
      %v491 = vld [vmem:[%s1 + $0x58] sm:$0xf]
      %v492 = vld [vmem:[%s1 + $0x5c] sm:$0xf]
      %v493 = vld [vmem:[%s1 + $0x60] sm:$0xf]
      %v494 = vld [vmem:[%s1 + $0x64] sm:$0xf]
      %v495 = vld [vmem:[%s1 + $0x68] sm:$0xf]
      %v496 = vld [vmem:[%s1 + $0x6c] sm:$0xf]
      %v497 = vld [vmem:[%s1 + $0x70] sm:$0xf]
      %v498 = vld [vmem:[%s1 + $0x74] sm:$0xf]
      %v499 = vld [vmem:[%s1 + $0x78] sm:$0xf]
      %v500 = vld [vmem:[%s1 + $0x7c] sm:$0xf]
      %v501 = vld [vmem:[%s1 + $0x80] sm:$0xf]
      %v502 = vld [vmem:[%s1 + $0x84] sm:$0xf]
      %v503 = vld [vmem:[%s1 + $0x88] sm:$0xf]
      %v504 = vld [vmem:[%s1 + $0x8c] sm:$0xf]
      %v505 = vld [vmem:[%s2] sm:$0x1]
      %v507 = vlaneseq
      %v508 = vshrl.u32 %v507, 7
      %v509 = vsub.s32 0, %v508
      %v510 = vrot.slane %v505, %v509
      %v548 = vunpack.c.l.b16 %v469
      %v549 = vunpack.c.l.b16 %v470
      %v550 = vunpack.c.l.b16 %v471
      %v551 = vunpack.c.l.b16 %v472
      %v552 = vunpack.c.l.b16 %v473
      %v553 = vunpack.c.l.b16 %v474
      %v554 = vunpack.c.l.b16 %v475
      %v555 = vunpack.c.l.b16 %v476
      %v556 = vunpack.c.l.b16 %v477
      %v557 = vunpack.c.l.b16 %v478
      %v558 = vunpack.c.l.b16 %v479
      %v559 = vunpack.c.l.b16 %v480
      %v560 = vunpack.c.l.b16 %v481
      %v561 = vunpack.c.l.b16 %v482
      %v562 = vunpack.c.l.b16 %v483
      %v563 = vunpack.c.l.b16 %v484
      %v564 = vunpack.c.l.b16 %v485
      %v565 = vunpack.c.l.b16 %v486
      %v566 = vunpack.c.l.b16 %v487
      %v567 = vunpack.c.l.b16 %v488
      %v568 = vunpack.c.l.b16 %v489
      %v569 = vunpack.c.l.b16 %v490
      %v570 = vunpack.c.l.b16 %v491
      %v571 = vunpack.c.l.b16 %v492
      %v572 = vunpack.c.l.b16 %v493
      %v573 = vunpack.c.l.b16 %v494
      %v574 = vunpack.c.l.b16 %v495
      %v575 = vunpack.c.l.b16 %v496
      %v576 = vunpack.c.l.b16 %v497
      %v577 = vunpack.c.l.b16 %v498
      %v578 = vunpack.c.l.b16 %v499
      %v579 = vunpack.c.l.b16 %v500
      %v580 = vunpack.c.l.b16 %v501
      %v581 = vunpack.c.l.b16 %v502
      %v582 = vunpack.c.l.b16 %v503
      %v583 = vunpack.c.l.b16 %v504
      %v584 = vpack.c.b16 %v549, %v548
      %v585 = vpack.c.b16 %v551, %v550
      %v586 = vpack.c.b16 %v553, %v552
      %v587 = vpack.c.b16 %v555, %v554
      %v588 = vpack.c.b16 %v557, %v556
      %v589 = vpack.c.b16 %v559, %v558
      %v590 = vpack.c.b16 %v561, %v560
      %v591 = vpack.c.b16 %v563, %v562
      %v592 = vpack.c.b16 %v565, %v564
      %v593 = vpack.c.b16 %v567, %v566
      %v594 = vpack.c.b16 %v569, %v568
      %v595 = vpack.c.b16 %v571, %v570
      %v596 = vpack.c.b16 %v573, %v572
      %v597 = vpack.c.b16 %v575, %v574
      %v598 = vpack.c.b16 %v577, %v576
      %v599 = vpack.c.b16 %v579, %v578
      %v600 = vpack.c.b16 %v581, %v580
      %v601 = vpack.c.b16 %v583, %v582
      %v621 = vsel %vm172, %v459, 0
      %v624 = vsel %vm172, %v462, 0
      %v627 = vsel %vm172, %v465, 0
      %v630 = vsel %vm172, %v468, 0
      %632 = vmatprep.subr.bf16.mxu0 0
      %633 = vmatpush1.bf16.msra.mxu0 %v584
      %634 = vmatprep.subr.bf16.mxu0 0
      %635 = vmatpush1.bf16.msra.mxu0 %v585
      %636 = vmatprep.subr.bf16.mxu0 0
      %637 = vmatpush1.bf16.msra.mxu0 %v586
      %638 = vmatprep.subr.bf16.mxu0 0
      %639 = vmatpush1.bf16.msra.mxu0 %v587
      %640 = vmatprep.subr.bf16.mxu0 0
      %641 = vmatpush1.bf16.msra.mxu0 %v588
      %642 = vmatprep.subr.bf16.mxu0 0
      %643 = vmatpush1.bf16.msra.mxu0 %v589
      %644 = vmatprep.subr.bf16.mxu0 0
      %645 = vmatpush1.bf16.msra.mxu0 %v590
      %646 = vmatprep.subr.bf16.mxu0 0
      %647 = vmatpush1.bf16.msra.mxu0 %v591
      %648 = vmatprep.subr.bf16.mxu0 0
      %649 = vmatpush1.bf16.msra.mxu0 %v592
      %650 = vmatprep.subr.bf16.mxu0 0
      %651 = vmatpush1.bf16.msra.mxu0 %v593
      %652 = vmatprep.subr.bf16.mxu0 0
      %653 = vmatpush1.bf16.msra.mxu0 %v594
      %654 = vmatprep.subr.bf16.mxu0 0
      %655 = vmatpush1.bf16.msra.mxu0 %v595
      %656 = vmatprep.subr.bf16.mxu0 0
      %657 = vmatpush1.bf16.msra.mxu0 %v596
      %658 = vmatprep.subr.bf16.mxu0 0
      %659 = vmatpush1.bf16.msra.mxu0 %v597
      %660 = vmatprep.subr.bf16.mxu0 0
      %661 = vmatpush1.bf16.msra.mxu0 %v598
      %662 = vmatprep.subr.bf16.mxu0 0
      %663 = vmatpush1.bf16.msra.mxu0 %v599
      %664 = vmatprep.mubr.bf16.mxu0 %v458
      %665 = vmatmul.mubr.bf16.gmra.mrb[0].mxu0 %v457
      %v666 = vpop.f32.mrb[0].mxu0
      %v667 = vadd.f32 %v510, %v666
      %v668 = vpop.f32.mrb[0].mxu0
      %v669 = vpop.f32.mrb[0].mxu0
      %v670 = vadd.f32 %v510, %v669
      %v671 = vpop.f32.mrb[0].mxu0
      %672 = vmatprep.mubr.bf16.mxu0 %v461
      %673 = vmatmul.mubr.bf16.gmra.mrb[0].mxu0 %v460
      %v674 = vpop.f32.mrb[0].mxu0
      %v675 = vadd.f32 %v510, %v674
      %v676 = vpop.f32.mrb[0].mxu0
      %v677 = vpop.f32.mrb[0].mxu0
      %v678 = vadd.f32 %v510, %v677
      %v679 = vpop.f32.mrb[0].mxu0
      %680 = vmatprep.mubr.bf16.mxu0 %v464
      %681 = vmatmul.mubr.bf16.gmra.mrb[0].mxu0 %v463
      %v682 = vpop.f32.mrb[0].mxu0
      %v683 = vadd.f32 %v510, %v682
      %v684 = vpop.f32.mrb[0].mxu0
      %v685 = vpop.f32.mrb[0].mxu0
      %v686 = vadd.f32 %v510, %v685
      %v687 = vpop.f32.mrb[0].mxu0
      %688 = vmatprep.mubr.bf16.mxu0 %v467
      %689 = vmatmul.mubr.bf16.gmra.mrb[0].mxu0 %v466
      %v690 = vpop.f32.mrb[0].mxu0
      %v691 = vadd.f32 %v510, %v690
      %v692 = vpop.f32.mrb[0].mxu0
      %v693 = vpop.f32.mrb[0].mxu0
      %v694 = vadd.f32 %v510, %v693
      %v695 = vpop.f32.mrb[0].mxu0
      %696 = vdwg.mxu0
      %697 = vmatprep.subr.bf16.mxu0 0
      %698 = vmatpush1.bf16.msra.mxu0 %v600
      %699 = vmatprep.subr.bf16.mxu0 0
      %700 = vmatpush1.bf16.msra.mxu0 %v601
      %701 = vmatprep.subr.bf16.mxu0 0
      %702 = vmatpush1.bf16.msra.mxu0 0
      %703 = vmatprep.subr.bf16.mxu0 0
      %704 = vmatpush1.bf16.msra.mxu0 0
      %705 = vmatprep.subr.bf16.mxu0 0
      %706 = vmatpush1.bf16.msra.mxu0 0
      %707 = vmatprep.subr.bf16.mxu0 0
      %708 = vmatpush1.bf16.msra.mxu0 0
      %709 = vmatprep.subr.bf16.mxu0 0
      %710 = vmatpush1.bf16.msra.mxu0 0
      %711 = vmatprep.subr.bf16.mxu0 0
      %712 = vmatpush1.bf16.msra.mxu0 0
      %713 = vmatprep.subr.bf16.mxu0 0
      %714 = vmatpush1.bf16.msra.mxu0 0
      %715 = vmatprep.subr.bf16.mxu0 0
      %716 = vmatpush1.bf16.msra.mxu0 0
      %717 = vmatprep.subr.bf16.mxu0 0
      %718 = vmatpush1.bf16.msra.mxu0 0
      %719 = vmatprep.subr.bf16.mxu0 0
      %720 = vmatpush1.bf16.msra.mxu0 0
      %721 = vmatprep.subr.bf16.mxu0 0
      %722 = vmatpush1.bf16.msra.mxu0 0
      %723 = vmatprep.subr.bf16.mxu0 0
      %724 = vmatpush1.bf16.msra.mxu0 0
      %725 = vmatprep.subr.bf16.mxu0 0
      %726 = vmatpush1.bf16.msra.mxu0 0
      %727 = vmatprep.subr.bf16.mxu0 0
      %728 = vmatpush1.bf16.msra.mxu0 0
      %729 = vmatprep.mubr.bf16.mxu0 0
      %730 = vmatmul.mubr.bf16.gmra.mrb[0].mxu0 %v621
      %v731 = vpop.f32.mrb[0].mxu0
      %v732 = vadd.f32 %v667, %v731
      %v733 = vpop.f32.mrb[0].mxu0
      %v734 = vpop.f32.mrb[0].mxu0
      %v735 = vadd.f32 %v670, %v734
      %v736 = vpop.f32.mrb[0].mxu0
      %737 = vmatprep.mubr.bf16.mxu0 0
      %738 = vmatmul.mubr.bf16.gmra.mrb[0].mxu0 %v624
      %v739 = vpop.f32.mrb[0].mxu0
      %v740 = vadd.f32 %v675, %v739
      %v741 = vpop.f32.mrb[0].mxu0
      %v742 = vpop.f32.mrb[0].mxu0
      %v743 = vadd.f32 %v678, %v742
      %v744 = vpop.f32.mrb[0].mxu0
      %745 = vmatprep.mubr.bf16.mxu0 0
      %746 = vmatmul.mubr.bf16.gmra.mrb[0].mxu0 %v627
      %v747 = vpop.f32.mrb[0].mxu0
      %v748 = vadd.f32 %v683, %v747
      %v749 = vpop.f32.mrb[0].mxu0
      %v750 = vpop.f32.mrb[0].mxu0
      %v751 = vadd.f32 %v686, %v750
      %v752 = vpop.f32.mrb[0].mxu0
      %753 = vmatprep.mubr.bf16.mxu0 0
      %754 = vmatmul.mubr.bf16.gmra.mrb[0].mxu0 %v630
      %v755 = vpop.f32.mrb[0].mxu0
      %v756 = vadd.f32 %v691, %v755
      %v757 = vpop.f32.mrb[0].mxu0
      %v758 = vpop.f32.mrb[0].mxu0
      %v759 = vadd.f32 %v694, %v758
      %v760 = vpop.f32.mrb[0].mxu0
      %761 = vdwg.mxu0
      %v762 = vmax.f32 %v732, 0.0
      %v763 = vmax.f32 %v735, 0.0
      %v764 = vmax.f32 %v740, 0.0
      %v765 = vmax.f32 %v743, 0.0
      %v766 = vmax.f32 %v748, 0.0
      %v767 = vmax.f32 %v751, 0.0
      %v768 = vmax.f32 %v756, 0.0
      %v769 = vmax.f32 %v759, 0.0
      %770 = vst [vmem:[%s170] sm:$0xff] %v762
      %771 = vst [vmem:[%s170 + $0x8] sm:$0xff] %v763
      %772 = vst [vmem:[%s170 + $0x10] sm:$0xff] %v764
      %773 = vst [vmem:[%s170 + $0x18] sm:$0xff] %v765
      %774 = vst [vmem:[%s170 + $0x20] sm:$0xff] %v766
      %775 = vst [vmem:[%s170 + $0x28] sm:$0xff] %v767
      %776 = vst [vmem:[%s170 + $0x30] sm:$0xff] %v768
      %777 = vst [vmem:[%s170 + $0x38] sm:$0xff] %v769
      %p778 = scmp.lt.s32.totalorder %s14, 1
      %s779 = scalar_select %p778, %s14, 1
      %s780 = smul.addr %s779, 8
      %s781 = smul.addr %s780, 8
      %s782 = scalar_lea.vmem %s3, %s781
      // Predicated region
      $region33: #{decoder_forward.4} parent=31 // pred_check
        %p783 = pneg %p100
      $region34: #{decoder_forward.4} parent=31 // pred_check_branch
        %785 = sbr.rel (%p783) target = $region36
      $region35: #{decoder_forward.4} parent=31 // pred_region
        _
      $region36: #{decoder_forward.4} parent=31 // pred_fallthru
        _
    $region32: #{decoder_forward.4} parent=5 // pred_fallthru
      _
    %p786 = scmp.le.s32.totalorder 2, %s9
    // Predicated region
    $region37: #{decoder_forward.4} parent=5 // pred_check
      %p787 = pneg %p786
    $region38: #{decoder_forward.4} parent=5 // pred_check_branch
      %789 = sbr.rel (%p787) target = $region40
    $region39: #{decoder_forward.4} parent=5 // pred_region
      %s790 = ssub.s32 %s9, 2
      // Predicated region
      $region41: #{decoder_forward.4} parent=39 // pred_check
        %p791 = pneg %p106
      $region42: #{decoder_forward.4} parent=39 // pred_check_branch
        %793 = sbr.rel (%p791) target = $region44
      $region43: #{decoder_forward.4} parent=39 // pred_region
        %p794 = scmp.lt.s32.totalorder %s15, 1
        %s795 = scalar_select %p794, %s15, 1
        %s796 = smul.addr %s795, 8
        %s797 = smul.addr %s796, 8
        %s798 = scalar_lea.vmem %s3, %s797
      $region44: #{decoder_forward.4} parent=39 // pred_fallthru
        _
    $region40: #{decoder_forward.4} parent=5 // pred_fallthru
      _
  $region6: #{decoder_forward.4} parent=0 // loop_footer
    %s13 = sadd.s32 1, %s9
  $region7: #{decoder_forward.4} parent=0 // loop_footer_branch
    %8 = sbr.rel target = $region3
  $region8: #{decoder_forward.4} parent=0 // loop_exit
    _

// kernel: decoder_forward.3
$region0: #{decoder_forward.3}
  #allocation0 [shape = 'u32[]', space=smem, size = 0x4, offset = 0x4, fixed_abs, tag = 'smem constant byte address 0x4 - core index']
  #allocation1 [shape = 'u32[144,128]{1,0:T(1,128)}', space=vmem, size = 0x12000, scoped, tag = 'internal scratch']
  #allocation2 [shape = 'f32[1,10,10,4]{3,2,1,0:T(8,128)}', space=vmem, size = 0x14000, scoped, tag = 'scratch operand']
  #allocation3 [shape = 'bf16[64,36]{1,0:T(16,128)(2,1)}', space=vmem, size = 0x4000, scoped, tag = 'scratch operand']
  #allocation4 [shape = 'f32[1,10,10,32]{3,2,1,0:T(8,128)}', space=vmem, size = 0x14000, scoped, tag = 'scratch operand']
  #allocation5 [shape = 'bf16[64,288]{1,0:T(16,128)(2,1)}', space=vmem, size = 0xc000, scoped, tag = 'scratch operand']
  %s0 = inlined_call_operand.vmem [shape: f32[2,8,8,4], index: 0, kind: input, shape index: {}]
  %s1 = inlined_call_operand.vmem [shape: bf16[36,32], index: 1, kind: input, shape index: {}]
  %s2 = inlined_call_operand.vmem [shape: f32[1,32], index: 2, kind: input, shape index: {}]
  %s3 = inlined_call_operand.vmem [shape: bf16[288,32], index: 3, kind: input, shape index: {}]
  %s4 = inlined_call_operand.vmem [shape: f32[1,32], index: 4, kind: input, shape index: {}]
  %s5 = inlined_call_operand.vmem [shape: bf16[32,32], index: 5, kind: input, shape index: {}]
  %s6 = inlined_call_operand.vmem [shape: f32[1,32], index: 6, kind: input, shape index: {}]
  %s7 = inlined_call_operand.vmem [shape: bf16[288,32], index: 7, kind: input, shape index: {}]
  %s8 = inlined_call_operand.vmem [shape: f32[1,32], index: 8, kind: input, shape index: {}]
  %s9 = inlined_call_operand.vmem [shape: bf16[32,32], index: 9, kind: input, shape index: {}]
  %s10 = inlined_call_operand.vmem [shape: f32[1,32], index: 10, kind: input, shape index: {}]
  %s11 = inlined_call_operand.vmem [shape: f32[2,8,8,32], index: 11, kind: output, shape index: {}]
  %s12 = sld [smem:[#allocation0]]
  $region77: #{decoder_forward.3} parent=0
    _
  %s14 = ssub.s32 1, %s12
  %s15 = scalar_select 0, %s14, %s12
  loop: start=0, step=1, limit=4
  $region2: #{decoder_forward.3} parent=0 // loop_pre_header
    _
  $region3: #{decoder_forward.3} parent=0 // loop_header
    %s17 = sphi 0, %s21
    %p18 = scmp.ge.s32.totalorder %s17, 4
    %s27 = sphi 0, %s29
    %s30 = sphi 0, %s27
    %s31 = sphi 0, %s30
    %s47 = sphi 0, %s31
    %s51 = sphi 0, %s51
    %s53 = sphi 0, %s51
    %s54 = sphi 0, %s53
    %s68 = sphi 0, %s54
    %s72 = sphi 0, %s72
    %s74 = sphi 0, %s72
    %s75 = sphi 0, %s74
    %s89 = sphi 0, %s75
    %s93 = sphi 0, %s93
    %s95 = sphi 0, %s93
    %s96 = sphi 0, %s95
    %s110 = sphi 0, %s96
    %s114 = sphi 0, %s114
    %s116 = sphi 0, %s114
    %s117 = sphi 0, %s116
    %s131 = sphi 0, %s117
    %s135 = sphi 0, %s135
    %s137 = sphi 0, %s135
    %s138 = sphi 0, %s137
    %s152 = sphi 0, %s138
    %s156 = sphi 0, %s156
    %s158 = sphi 0, %s156
    %s159 = sphi 0, %s158
    %s173 = sphi 0, %s159
    %s177 = sphi 0, %s177
    %s179 = sphi 0, %s177
    %s180 = sphi 0, %s179
    %s194 = sphi 0, %s180
    %s198 = sphi 0, %s198
    %s200 = sphi 0, %s198
    %s201 = sphi 0, %s200
    %s215 = sphi 0, %s201
    %s219 = sphi 0, %s219
    %s221 = sphi 0, %s219
    %s222 = sphi 0, %s221
    %s236 = sphi 0, %s222
    %s240 = sphi 0, %s240
    %s242 = sphi 0, %s240
    %s243 = sphi 0, %s242
    %s257 = sphi 0, %s243
    %s263 = sphi 0, %s265
    %s266 = sphi 0, %s263
    %s267 = sphi 0, %s266
    %s283 = sphi 0, %s267
  $region4: #{decoder_forward.3} parent=0 // loop_header_branch
    %20 = sbr.rel (%p18) target = $region8
  $region5: #{decoder_forward.3} parent=0 // loop_body
    %s22 = ssub.s32 %s17, 1
    %s23 = ssub.s32 %s17, 2
    %s24 = sadd.s32 %s17, 1
    %s25 = ssub.s32 %s17, %s24
    %p26 = scmp.eq.s32.totalorder %s25, 0
    %s28 = sadd.s32 %s27, 1
    %s29 = scalar_select %p26, %s27, %s28
    %p32 = pneg %p26
    %p33 = scmp.eq.s32.totalorder %s17, 1
    %p34 = por %p32, %p33
    %p35 = scmp.ne.s32.totalorder %s27, %s30
    %p36 = scmp.eq.s32.totalorder %s17, 0
    %p37 = por %p35, %p36
    %p38 = scmp.ne.s32.totalorder %s27, %s30
    %p39 = scmp.eq.s32.totalorder %s22, 1
    %p40 = por %p38, %p39
    %p41 = scmp.ne.s32.totalorder %s30, %s31
    %p42 = scmp.eq.s32.totalorder %s22, 0
    %p43 = por %p41, %p42
    %p44 = scmp.ne.s32.totalorder %s30, %s31
    %p45 = scmp.eq.s32.totalorder %s23, 1
    %p46 = por %p44, %p45
    %p48 = scmp.ne.s32.totalorder %s31, %s47
    %p49 = scmp.eq.s32.totalorder %s23, 0
    %p50 = por %p48, %p49
    %s52 = sadd.s32 %s51, 1
    %p55 = scmp.eq.s32.totalorder %s17, 1
    %p56 = scmp.ne.s32.totalorder %s51, %s53
    %p57 = scmp.eq.s32.totalorder %s17, 0
    %p58 = por %p56, %p57
    %p59 = scmp.ne.s32.totalorder %s51, %s53
    %p60 = scmp.eq.s32.totalorder %s22, 1
    %p61 = por %p59, %p60
    %p62 = scmp.ne.s32.totalorder %s53, %s54
    %p63 = scmp.eq.s32.totalorder %s22, 0
    %p64 = por %p62, %p63
    %p65 = scmp.ne.s32.totalorder %s53, %s54
    %p66 = scmp.eq.s32.totalorder %s23, 1
    %p67 = por %p65, %p66
    %p69 = scmp.ne.s32.totalorder %s54, %s68
    %p70 = scmp.eq.s32.totalorder %s23, 0
    %p71 = por %p69, %p70
    %s73 = sadd.s32 %s72, 1
    %p76 = scmp.eq.s32.totalorder %s17, 1
    %p77 = scmp.ne.s32.totalorder %s72, %s74
    %p78 = scmp.eq.s32.totalorder %s17, 0
    %p79 = por %p77, %p78
    %p80 = scmp.ne.s32.totalorder %s72, %s74
    %p81 = scmp.eq.s32.totalorder %s22, 1
    %p82 = por %p80, %p81
    %p83 = scmp.ne.s32.totalorder %s74, %s75
    %p84 = scmp.eq.s32.totalorder %s22, 0
    %p85 = por %p83, %p84
    %p86 = scmp.ne.s32.totalorder %s74, %s75
    %p87 = scmp.eq.s32.totalorder %s23, 1
    %p88 = por %p86, %p87
    %p90 = scmp.ne.s32.totalorder %s75, %s89
    %p91 = scmp.eq.s32.totalorder %s23, 0
    %p92 = por %p90, %p91
    %s94 = sadd.s32 %s93, 1
    %p97 = scmp.eq.s32.totalorder %s17, 1
    %p98 = scmp.ne.s32.totalorder %s93, %s95
    %p99 = scmp.eq.s32.totalorder %s17, 0
    %p100 = por %p98, %p99
    %p101 = scmp.ne.s32.totalorder %s93, %s95
    %p102 = scmp.eq.s32.totalorder %s22, 1
    %p103 = por %p101, %p102
    %p104 = scmp.ne.s32.totalorder %s95, %s96
    %p105 = scmp.eq.s32.totalorder %s22, 0
    %p106 = por %p104, %p105
    %p107 = scmp.ne.s32.totalorder %s95, %s96
    %p108 = scmp.eq.s32.totalorder %s23, 1
    %p109 = por %p107, %p108
    %p111 = scmp.ne.s32.totalorder %s96, %s110
    %p112 = scmp.eq.s32.totalorder %s23, 0
    %p113 = por %p111, %p112
    %s115 = sadd.s32 %s114, 1
    %p118 = scmp.eq.s32.totalorder %s17, 1
    %p119 = scmp.ne.s32.totalorder %s114, %s116
    %p120 = scmp.eq.s32.totalorder %s17, 0
    %p121 = por %p119, %p120
    %p122 = scmp.ne.s32.totalorder %s114, %s116
    %p123 = scmp.eq.s32.totalorder %s22, 1
    %p124 = por %p122, %p123
    %p125 = scmp.ne.s32.totalorder %s116, %s117
    %p126 = scmp.eq.s32.totalorder %s22, 0
    %p127 = por %p125, %p126
    %p128 = scmp.ne.s32.totalorder %s116, %s117
    %p129 = scmp.eq.s32.totalorder %s23, 1
    %p130 = por %p128, %p129
    %p132 = scmp.ne.s32.totalorder %s117, %s131
    %p133 = scmp.eq.s32.totalorder %s23, 0
    %p134 = por %p132, %p133
    %s136 = sadd.s32 %s135, 1
    %p139 = scmp.eq.s32.totalorder %s17, 1
    %p140 = scmp.ne.s32.totalorder %s135, %s137
    %p141 = scmp.eq.s32.totalorder %s17, 0
    %p142 = por %p140, %p141
    %p143 = scmp.ne.s32.totalorder %s135, %s137
    %p144 = scmp.eq.s32.totalorder %s22, 1
    %p145 = por %p143, %p144
    %p146 = scmp.ne.s32.totalorder %s137, %s138
    %p147 = scmp.eq.s32.totalorder %s22, 0
    %p148 = por %p146, %p147
    %p149 = scmp.ne.s32.totalorder %s137, %s138
    %p150 = scmp.eq.s32.totalorder %s23, 1
    %p151 = por %p149, %p150
    %p153 = scmp.ne.s32.totalorder %s138, %s152
    %p154 = scmp.eq.s32.totalorder %s23, 0
    %p155 = por %p153, %p154
    %s157 = sadd.s32 %s156, 1
    %p160 = scmp.eq.s32.totalorder %s17, 1
    %p161 = scmp.ne.s32.totalorder %s156, %s158
    %p162 = scmp.eq.s32.totalorder %s17, 0
    %p163 = por %p161, %p162
    %p164 = scmp.ne.s32.totalorder %s156, %s158
    %p165 = scmp.eq.s32.totalorder %s22, 1
    %p166 = por %p164, %p165
    %p167 = scmp.ne.s32.totalorder %s158, %s159
    %p168 = scmp.eq.s32.totalorder %s22, 0
    %p169 = por %p167, %p168
    %p170 = scmp.ne.s32.totalorder %s158, %s159
    %p171 = scmp.eq.s32.totalorder %s23, 1
    %p172 = por %p170, %p171
    %p174 = scmp.ne.s32.totalorder %s159, %s173
    %p175 = scmp.eq.s32.totalorder %s23, 0
    %p176 = por %p174, %p175
    %s178 = sadd.s32 %s177, 1
    %p181 = scmp.eq.s32.totalorder %s17, 1
    %p182 = scmp.ne.s32.totalorder %s177, %s179
    %p183 = scmp.eq.s32.totalorder %s17, 0
    %p184 = por %p182, %p183
    %p185 = scmp.ne.s32.totalorder %s177, %s179
    %p186 = scmp.eq.s32.totalorder %s22, 1
    %p187 = por %p185, %p186
    %p188 = scmp.ne.s32.totalorder %s179, %s180
    %p189 = scmp.eq.s32.totalorder %s22, 0
    %p190 = por %p188, %p189
    %p191 = scmp.ne.s32.totalorder %s179, %s180
    %p192 = scmp.eq.s32.totalorder %s23, 1
    %p193 = por %p191, %p192
    %p195 = scmp.ne.s32.totalorder %s180, %s194
    %p196 = scmp.eq.s32.totalorder %s23, 0
    %p197 = por %p195, %p196
    %s199 = sadd.s32 %s198, 1
    %p202 = scmp.eq.s32.totalorder %s17, 1
    %p203 = scmp.ne.s32.totalorder %s198, %s200
    %p204 = scmp.eq.s32.totalorder %s17, 0
    %p205 = por %p203, %p204
    %p206 = scmp.ne.s32.totalorder %s198, %s200
    %p207 = scmp.eq.s32.totalorder %s22, 1
    %p208 = por %p206, %p207
    %p209 = scmp.ne.s32.totalorder %s200, %s201
    %p210 = scmp.eq.s32.totalorder %s22, 0
    %p211 = por %p209, %p210
    %p212 = scmp.ne.s32.totalorder %s200, %s201
    %p213 = scmp.eq.s32.totalorder %s23, 1
    %p214 = por %p212, %p213
    %p216 = scmp.ne.s32.totalorder %s201, %s215
    %p217 = scmp.eq.s32.totalorder %s23, 0
    %p218 = por %p216, %p217
    %s220 = sadd.s32 %s219, 1
    %p223 = scmp.eq.s32.totalorder %s17, 1
    %p224 = scmp.ne.s32.totalorder %s219, %s221
    %p225 = scmp.eq.s32.totalorder %s17, 0
    %p226 = por %p224, %p225
    %p227 = scmp.ne.s32.totalorder %s219, %s221
    %p228 = scmp.eq.s32.totalorder %s22, 1
    %p229 = por %p227, %p228
    %p230 = scmp.ne.s32.totalorder %s221, %s222
    %p231 = scmp.eq.s32.totalorder %s22, 0
    %p232 = por %p230, %p231
    %p233 = scmp.ne.s32.totalorder %s221, %s222
    %p234 = scmp.eq.s32.totalorder %s23, 1
    %p235 = por %p233, %p234
    %p237 = scmp.ne.s32.totalorder %s222, %s236
    %p238 = scmp.eq.s32.totalorder %s23, 0
    %p239 = por %p237, %p238
    %s241 = sadd.s32 %s240, 1
    %p244 = scmp.eq.s32.totalorder %s17, 1
    %p245 = scmp.ne.s32.totalorder %s240, %s242
    %p246 = scmp.eq.s32.totalorder %s17, 0
    %p247 = por %p245, %p246
    %p248 = scmp.ne.s32.totalorder %s240, %s242
    %p249 = scmp.eq.s32.totalorder %s22, 1
    %p250 = por %p248, %p249
    %p251 = scmp.ne.s32.totalorder %s242, %s243
    %p252 = scmp.eq.s32.totalorder %s22, 0
    %p253 = por %p251, %p252
    %p254 = scmp.ne.s32.totalorder %s242, %s243
    %p255 = scmp.eq.s32.totalorder %s23, 1
    %p256 = por %p254, %p255
    %p258 = scmp.ne.s32.totalorder %s243, %s257
    %p259 = scmp.eq.s32.totalorder %s23, 0
    %p260 = por %p258, %p259
    %s261 = ssub.s32 %s17, %s24
    %p262 = scmp.eq.s32.totalorder %s261, 0
    %s264 = sadd.s32 %s263, 1
    %s265 = scalar_select %p262, %s263, %s264
    %p268 = pneg %p262
    %p269 = scmp.eq.s32.totalorder %s17, 1
    %p270 = por %p268, %p269
    %p271 = scmp.ne.s32.totalorder %s263, %s266
    %p272 = scmp.eq.s32.totalorder %s17, 0
    %p273 = por %p271, %p272
    %p274 = scmp.ne.s32.totalorder %s263, %s266
    %p275 = scmp.eq.s32.totalorder %s22, 1
    %p276 = por %p274, %p275
    %p277 = scmp.ne.s32.totalorder %s266, %s267
    %p278 = scmp.eq.s32.totalorder %s22, 0
    %p279 = por %p277, %p278
    %p280 = scmp.ne.s32.totalorder %s266, %s267
    %p281 = scmp.eq.s32.totalorder %s23, 1
    %p282 = por %p280, %p281
    %p284 = scmp.ne.s32.totalorder %s267, %s283
    %p285 = scmp.eq.s32.totalorder %s23, 0
    %p286 = por %p284, %p285
    %p287 = scmp.le.s32.totalorder 1, %s17
    %p288 = scmp.lt.s32.totalorder %s17, 3
    %p289 = pnand %p287, %p288
    %p290 = pneg %p289
    // Predicated region
    $region9: #{decoder_forward.3} parent=5 // pred_check
      _
    $region10: #{decoder_forward.3} parent=5 // pred_check_branch
      %292 = sbr.rel (%p289) target = $region12
    $region11: #{decoder_forward.3} parent=5 // pred_region
      %s293 = ssub.s32 %s17, 1
      // Predicated region
      $region13: #{decoder_forward.3} parent=11 // pred_check
        %p294 = pneg %p64
      $region14: #{decoder_forward.3} parent=11 // pred_check_branch
        %296 = sbr.rel (%p294) target = $region16
      $region15: #{decoder_forward.3} parent=11 // pred_region
        _
      $region16: #{decoder_forward.3} parent=11 // pred_fallthru
        _
      // Predicated region
      $region17: #{decoder_forward.3} parent=11 // pred_check
        %p297 = pneg %p85
      $region18: #{decoder_forward.3} parent=11 // pred_check_branch
        %299 = sbr.rel (%p297) target = $region20
      $region19: #{decoder_forward.3} parent=11 // pred_region
        _
      $region20: #{decoder_forward.3} parent=11 // pred_fallthru
        _
      // Predicated region
      $region21: #{decoder_forward.3} parent=11 // pred_check
        %p300 = pneg %p106
      $region22: #{decoder_forward.3} parent=11 // pred_check_branch
        %302 = sbr.rel (%p300) target = $region24
      $region23: #{decoder_forward.3} parent=11 // pred_region
        _
      $region24: #{decoder_forward.3} parent=11 // pred_fallthru
        _
      // Predicated region
      $region25: #{decoder_forward.3} parent=11 // pred_check
        %p303 = pneg %p127
      $region26: #{decoder_forward.3} parent=11 // pred_check_branch
        %305 = sbr.rel (%p303) target = $region28
      $region27: #{decoder_forward.3} parent=11 // pred_region
        _
      $region28: #{decoder_forward.3} parent=11 // pred_fallthru
        _
      // Predicated region
      $region29: #{decoder_forward.3} parent=11 // pred_check
        %p306 = pneg %p148
      $region30: #{decoder_forward.3} parent=11 // pred_check_branch
        %308 = sbr.rel (%p306) target = $region32
      $region31: #{decoder_forward.3} parent=11 // pred_region
        _
      $region32: #{decoder_forward.3} parent=11 // pred_fallthru
        _
      // Predicated region
      $region33: #{decoder_forward.3} parent=11 // pred_check
        %p309 = pneg %p169
      $region34: #{decoder_forward.3} parent=11 // pred_check_branch
        %311 = sbr.rel (%p309) target = $region36
      $region35: #{decoder_forward.3} parent=11 // pred_region
        _
      $region36: #{decoder_forward.3} parent=11 // pred_fallthru
        _
      // Predicated region
      $region37: #{decoder_forward.3} parent=11 // pred_check
        %p312 = pneg %p190
      $region38: #{decoder_forward.3} parent=11 // pred_check_branch
        %314 = sbr.rel (%p312) target = $region40
      $region39: #{decoder_forward.3} parent=11 // pred_region
        _
      $region40: #{decoder_forward.3} parent=11 // pred_fallthru
        _
      // Predicated region
      $region41: #{decoder_forward.3} parent=11 // pred_check
        %p315 = pneg %p211
      $region42: #{decoder_forward.3} parent=11 // pred_check_branch
        %317 = sbr.rel (%p315) target = $region44
      $region43: #{decoder_forward.3} parent=11 // pred_region
        _
      $region44: #{decoder_forward.3} parent=11 // pred_fallthru
        _
      // Predicated region
      $region45: #{decoder_forward.3} parent=11 // pred_check
        %p318 = pneg %p232
      $region46: #{decoder_forward.3} parent=11 // pred_check_branch
        %320 = sbr.rel (%p318) target = $region48
      $region47: #{decoder_forward.3} parent=11 // pred_region
        _
      $region48: #{decoder_forward.3} parent=11 // pred_fallthru
        _
      // Predicated region
      $region49: #{decoder_forward.3} parent=11 // pred_check
        %p321 = pneg %p253
      $region50: #{decoder_forward.3} parent=11 // pred_check_branch
        %323 = sbr.rel (%p321) target = $region52
      $region51: #{decoder_forward.3} parent=11 // pred_region
        _
      $region52: #{decoder_forward.3} parent=11 // pred_fallthru
        _
    $region12: #{decoder_forward.3} parent=5 // pred_fallthru
      _
    %p324 = scmp.lt.s32.totalorder %s17, 2
    // Predicated region
    $region53: #{decoder_forward.3} parent=5 // pred_check
      %p325 = pneg %p324
    $region54: #{decoder_forward.3} parent=5 // pred_check_branch
      %327 = sbr.rel (%p325) target = $region56
    $region55: #{decoder_forward.3} parent=5 // pred_region
      // Predicated region
      $region57: #{decoder_forward.3} parent=55 // pred_check
        %p328 = pneg %p37
      $region58: #{decoder_forward.3} parent=55 // pred_check_branch
        %330 = sbr.rel (%p328) target = $region60
      $region59: #{decoder_forward.3} parent=55 // pred_region
        %p331 = scmp.lt.s32.totalorder %s17, 1
        %s332 = scalar_select %p331, %s17, 1
        %s333 = smul.addr %s332, 8
        %s334 = smul.addr %s333, 8
        %s335 = scalar_lea.vmem %s0, %s334
      $region60: #{decoder_forward.3} parent=55 // pred_fallthru
        _
    $region56: #{decoder_forward.3} parent=5 // pred_fallthru
      _
    %p336 = scmp.le.s32.totalorder 1, %s17
    %p337 = scmp.lt.s32.totalorder %s17, 3
    %p338 = pnand %p336, %p337
    %p339 = pneg %p338
    // Predicated region
    $region61: #{decoder_forward.3} parent=5 // pred_check
      _
    $region62: #{decoder_forward.3} parent=5 // pred_check_branch
      %341 = sbr.rel (%p338) target = $region64
    $region63: #{decoder_forward.3} parent=5 // pred_region
      %s342 = ssub.s32 %s17, 1
      %p343 = scmp.lt.s32.totalorder %s22, 1
      %s344 = scalar_select %p343, %s22, 1
      %s345 = smul.addr %s344, 8
      %s346 = smul.addr %s345, 8
      %s347 = scalar_lea.vmem %s0, %s346
      %p348 = pneg %p43
      %p349 = pneg %p40
      %p350 = pneg %p64
      %p351 = pneg %p61
      %p352 = pneg %p85
      %p353 = pneg %p82
      %p354 = pneg %p106
      %p355 = pneg %p103
      %p356 = pneg %p127
      %p357 = pneg %p124
      %p358 = pneg %p148
      %p359 = pneg %p145
      %p360 = pneg %p169
      %p361 = pneg %p166
      %p362 = pneg %p190
      %p363 = pneg %p187
      %p364 = pneg %p211
      %p365 = pneg %p208
      %p366 = pneg %p232
      %p367 = pneg %p229
      %p368 = pneg %p253
      %p369 = pneg %p250
      %p370 = pneg %p279
      %p371 = pneg %p276
      %p372 = scmp.lt.s32.totalorder %s22, 1
      %s373 = scalar_select %p372, %s22, 1
      %s374 = smul.addr %s373, 8
      %s375 = smul.addr %s374, 8
      %s376 = scalar_lea.vmem %s11, %s375
      %p377 = scmp.lt.s32.totalorder %s22, 1
      %s378 = scalar_select %p377, %s22, 1
      %s379 = smul.addr %s378, 8
      %s380 = smul.addr %s379, 8
      %s381 = scalar_lea.vmem %s0, %s380
      %p382 = scmp.lt.s32.totalorder %s22, 1
      %s383 = scalar_select %p382, %s22, 1
      %s384 = smul.addr %s383, 8
      %s385 = smul.addr %s384, 8
      %s386 = scalar_lea.vmem %s11, %s385
      %vm388 = vcmask 31744
      %389 = vst.msk [vmem:[#allocation2] sm:$0xff] %vm388, 0.0
      %vm390 = vcmask 25600
      %391 = vst.msk [vmem:[#allocation2 + $0x8] sm:$0x3] %vm390, 0.0
      %392 = vst.msk [vmem:[#allocation2 + $0x10] sm:$0xff] %vm388, 0.0
      %393 = vst.msk [vmem:[#allocation2 + $0x18] sm:$0x3] %vm390, 0.0
      %394 = vst.msk [vmem:[#allocation2 + $0x20] sm:$0xff] %vm388, 0.0
      %395 = vst.msk [vmem:[#allocation2 + $0x28] sm:$0x3] %vm390, 0.0
      %396 = vst.msk [vmem:[#allocation2 + $0x30] sm:$0xff] %vm388, 0.0
      %397 = vst.msk [vmem:[#allocation2 + $0x38] sm:$0x3] %vm390, 0.0
      %398 = vst.msk [vmem:[#allocation2 + $0x40] sm:$0xff] %vm388, 0.0
      %399 = vst.msk [vmem:[#allocation2 + $0x48] sm:$0x3] %vm390, 0.0
      %400 = vst.msk [vmem:[#allocation2 + $0x50] sm:$0xff] %vm388, 0.0
      %401 = vst.msk [vmem:[#allocation2 + $0x58] sm:$0x3] %vm390, 0.0
      %402 = vst.msk [vmem:[#allocation2 + $0x60] sm:$0xff] %vm388, 0.0
      %403 = vst.msk [vmem:[#allocation2 + $0x68] sm:$0x3] %vm390, 0.0
      %404 = vst.msk [vmem:[#allocation2 + $0x70] sm:$0xff] %vm388, 0.0
      %405 = vst.msk [vmem:[#allocation2 + $0x78] sm:$0x3] %vm390, 0.0
      %406 = vst.msk [vmem:[#allocation2 + $0x80] sm:$0xff] %vm388, 0.0
      %407 = vst.msk [vmem:[#allocation2 + $0x88] sm:$0x3] %vm390, 0.0
      %408 = vst.msk [vmem:[#allocation2 + $0x90] sm:$0xff] %vm388, 0.0
      %409 = vst.msk [vmem:[#allocation2 + $0x98] sm:$0x3] %vm390, 0.0
      %v410 = vld [vmem:[%s381] sm:$0xff]
      %v411 = vld [vmem:[%s381 + $0x8] sm:$0xff]
      %v412 = vld [vmem:[%s381 + $0x10] sm:$0xff]
      %v413 = vld [vmem:[%s381 + $0x18] sm:$0xff]
      %v414 = vld [vmem:[%s381 + $0x20] sm:$0xff]
      %v415 = vld [vmem:[%s381 + $0x28] sm:$0xff]
      %v416 = vld [vmem:[%s381 + $0x30] sm:$0xff]
      %v417 = vld [vmem:[%s381 + $0x38] sm:$0xff]
      %s418 = scalar_lea.vmem [#allocation2], 16
      %419 = vst.msk [vmem:[%s418 + $0x1] sm:$0xff] %vm388, %v410
      %420 = vst.msk [vmem:[%s418 + $0x11] sm:$0xff] %vm388, %v411
      %421 = vst.msk [vmem:[%s418 + $0x21] sm:$0xff] %vm388, %v412
      %422 = vst.msk [vmem:[%s418 + $0x31] sm:$0xff] %vm388, %v413
      %423 = vst.msk [vmem:[%s418 + $0x41] sm:$0xff] %vm388, %v414
      %424 = vst.msk [vmem:[%s418 + $0x51] sm:$0xff] %vm388, %v415
      %425 = vst.msk [vmem:[%s418 + $0x61] sm:$0xff] %vm388, %v416
      %426 = vst.msk [vmem:[%s418 + $0x71] sm:$0xff] %vm388, %v417
      %v427 = vld [vmem:[#allocation2] sm:$0xff]
      %v428 = vld [vmem:[#allocation2 + $0x10] sm:$0xff]
      %v429 = vld [vmem:[#allocation2 + $0x20] sm:$0xff]
      %v430 = vld [vmem:[#allocation2 + $0x30] sm:$0xff]
      %v431 = vld [vmem:[#allocation2 + $0x40] sm:$0xff]
      %v432 = vld [vmem:[#allocation2 + $0x50] sm:$0xff]
      %v433 = vld [vmem:[#allocation2 + $0x60] sm:$0xff]
      %v434 = vld [vmem:[#allocation2 + $0x70] sm:$0xff]
      %v435 = vpack.c.bf16 %v428, %v427
      %v436 = vpack.c.bf16 %v430, %v429
      %v437 = vpack.c.bf16 %v432, %v431
      %v438 = vpack.c.bf16 %v434, %v433
      %439 = vst.msk [vmem:[#allocation3] sm:$0xff] %vm388, %v435
      %440 = vst.msk [vmem:[#allocation3 + $0x8] sm:$0xff] %vm388, %v436
      %441 = vst.msk [vmem:[#allocation3 + $0x10] sm:$0xff] %vm388, %v437
      %442 = vst.msk [vmem:[#allocation3 + $0x18] sm:$0xff] %vm388, %v438
      %v443 = vld [vmem:[#allocation2 + $0x1] sm:$0xff]
      %v444 = vld [vmem:[#allocation2 + $0x11] sm:$0xff]
      %v445 = vld [vmem:[#allocation2 + $0x21] sm:$0xff]
      %v446 = vld [vmem:[#allocation2 + $0x31] sm:$0xff]
      %v447 = vld [vmem:[#allocation2 + $0x41] sm:$0xff]
      %v448 = vld [vmem:[#allocation2 + $0x51] sm:$0xff]
      %v449 = vld [vmem:[#allocation2 + $0x61] sm:$0xff]
      %v450 = vld [vmem:[#allocation2 + $0x71] sm:$0xff]
      %v451 = vpack.c.bf16 %v444, %v443
      %v452 = vpack.c.bf16 %v446, %v445
      %v453 = vpack.c.bf16 %v448, %v447
      %v454 = vpack.c.bf16 %v450, %v449
      %459 = vrot.lane.b32.xlu0 %v451, 4
      %v460 = vpop.permute.xlu0 %459
      %461 = vrot.lane.b32.xlu0 %v452, 4
      %v462 = vpop.permute.xlu0 %461
      %463 = vrot.lane.b32.xlu0 %v453, 4
      %v464 = vpop.permute.xlu0 %463
      %465 = vrot.lane.b32.xlu0 %v454, 4
      %v466 = vpop.permute.xlu0 %465
      %vm471 = vcmask 64544
      %472 = vst.msk [vmem:[#allocation3] sm:$0xff] %vm471, %v460
      %473 = vst.msk [vmem:[#allocation3 + $0x8] sm:$0xff] %vm471, %v462
      %474 = vst.msk [vmem:[#allocation3 + $0x10] sm:$0xff] %vm471, %v464
      %475 = vst.msk [vmem:[#allocation3 + $0x18] sm:$0xff] %vm471, %v466
      %v476 = vld [vmem:[#allocation2 + $0x2] sm:$0xff]
      %v477 = vld [vmem:[#allocation2 + $0x12] sm:$0xff]
      %v478 = vld [vmem:[#allocation2 + $0x22] sm:$0xff]
      %v479 = vld [vmem:[#allocation2 + $0x32] sm:$0xff]
      %v480 = vld [vmem:[#allocation2 + $0x42] sm:$0xff]
      %v481 = vld [vmem:[#allocation2 + $0x52] sm:$0xff]
      %v482 = vld [vmem:[#allocation2 + $0x62] sm:$0xff]
      %v483 = vld [vmem:[#allocation2 + $0x72] sm:$0xff]
      %v484 = vpack.c.bf16 %v477, %v476
      %v485 = vpack.c.bf16 %v479, %v478
      %v486 = vpack.c.bf16 %v481, %v480
      %v487 = vpack.c.bf16 %v483, %v482
      %492 = vrot.lane.b32.xlu0 %v484, 8
      %v493 = vpop.permute.xlu0 %492
      %494 = vrot.lane.b32.xlu0 %v485, 8
      %v495 = vpop.permute.xlu0 %494
      %496 = vrot.lane.b32.xlu0 %v486, 8
      %v497 = vpop.permute.xlu0 %496
      %498 = vrot.lane.b32.xlu0 %v487, 8
      %v499 = vpop.permute.xlu0 %498
      %vm504 = vcmask 97344
      %505 = vst.msk [vmem:[#allocation3] sm:$0xff] %vm504, %v493
      %506 = vst.msk [vmem:[#allocation3 + $0x8] sm:$0xff] %vm504, %v495
      %507 = vst.msk [vmem:[#allocation3 + $0x10] sm:$0xff] %vm504, %v497
      %508 = vst.msk [vmem:[#allocation3 + $0x18] sm:$0xff] %vm504, %v499
      %v509 = vld [vmem:[%s418] sm:$0xff]
      %v510 = vld [vmem:[%s418 + $0x10] sm:$0xff]
      %v511 = vld [vmem:[%s418 + $0x20] sm:$0xff]
      %v512 = vld [vmem:[%s418 + $0x30] sm:$0xff]
      %v513 = vld [vmem:[%s418 + $0x40] sm:$0xff]
      %v514 = vld [vmem:[%s418 + $0x50] sm:$0xff]
      %v515 = vld [vmem:[%s418 + $0x60] sm:$0xff]
      %v516 = vld [vmem:[%s418 + $0x70] sm:$0xff]
      %v517 = vpack.c.bf16 %v510, %v509
      %v518 = vpack.c.bf16 %v512, %v511
      %v519 = vpack.c.bf16 %v514, %v513
      %v520 = vpack.c.bf16 %v516, %v515
      %525 = vrot.lane.b32.xlu0 %v517, 12
      %v526 = vpop.permute.xlu0 %525
      %527 = vrot.lane.b32.xlu0 %v518, 12
      %v528 = vpop.permute.xlu0 %527
      %529 = vrot.lane.b32.xlu0 %v519, 12
      %v530 = vpop.permute.xlu0 %529
      %531 = vrot.lane.b32.xlu0 %v520, 12
      %v532 = vpop.permute.xlu0 %531
      %vm537 = vcmask 130144
      %538 = vst.msk [vmem:[#allocation3] sm:$0xff] %vm537, %v526
      %539 = vst.msk [vmem:[#allocation3 + $0x8] sm:$0xff] %vm537, %v528
      %540 = vst.msk [vmem:[#allocation3 + $0x10] sm:$0xff] %vm537, %v530
      %541 = vst.msk [vmem:[#allocation3 + $0x18] sm:$0xff] %vm537, %v532
      %v542 = vld [vmem:[%s418 + $0x1] sm:$0xff]
      %v543 = vld [vmem:[%s418 + $0x11] sm:$0xff]
      %v544 = vld [vmem:[%s418 + $0x21] sm:$0xff]
      %v545 = vld [vmem:[%s418 + $0x31] sm:$0xff]
      %v546 = vld [vmem:[%s418 + $0x41] sm:$0xff]
      %v547 = vld [vmem:[%s418 + $0x51] sm:$0xff]
      %v548 = vld [vmem:[%s418 + $0x61] sm:$0xff]
      %v549 = vld [vmem:[%s418 + $0x71] sm:$0xff]
      %v550 = vpack.c.bf16 %v543, %v542
      %v551 = vpack.c.bf16 %v545, %v544
      %v552 = vpack.c.bf16 %v547, %v546
      %v553 = vpack.c.bf16 %v549, %v548
      %558 = vrot.lane.b32.xlu0 %v550, 16
      %v559 = vpop.permute.xlu0 %558
      %560 = vrot.lane.b32.xlu0 %v551, 16
      %v561 = vpop.permute.xlu0 %560
      %562 = vrot.lane.b32.xlu0 %v552, 16
      %v563 = vpop.permute.xlu0 %562
      %564 = vrot.lane.b32.xlu0 %v553, 16
      %v565 = vpop.permute.xlu0 %564
      %vm570 = vcmask 162944
      %571 = vst.msk [vmem:[#allocation3] sm:$0xff] %vm570, %v559
      %572 = vst.msk [vmem:[#allocation3 + $0x8] sm:$0xff] %vm570, %v561
      %573 = vst.msk [vmem:[#allocation3 + $0x10] sm:$0xff] %vm570, %v563
      %574 = vst.msk [vmem:[#allocation3 + $0x18] sm:$0xff] %vm570, %v565
      %v575 = vld [vmem:[%s418 + $0x2] sm:$0xff]
      %v576 = vld [vmem:[%s418 + $0x12] sm:$0xff]
      %v577 = vld [vmem:[%s418 + $0x22] sm:$0xff]
      %v578 = vld [vmem:[%s418 + $0x32] sm:$0xff]
      %v579 = vld [vmem:[%s418 + $0x42] sm:$0xff]
      %v580 = vld [vmem:[%s418 + $0x52] sm:$0xff]
      %v581 = vld [vmem:[%s418 + $0x62] sm:$0xff]
      %v582 = vld [vmem:[%s418 + $0x72] sm:$0xff]
      %v583 = vpack.c.bf16 %v576, %v575
      %v584 = vpack.c.bf16 %v578, %v577
      %v585 = vpack.c.bf16 %v580, %v579
      %v586 = vpack.c.bf16 %v582, %v581
      %591 = vrot.lane.b32.xlu0 %v583, 20
      %v592 = vpop.permute.xlu0 %591
      %593 = vrot.lane.b32.xlu0 %v584, 20
      %v594 = vpop.permute.xlu0 %593
      %595 = vrot.lane.b32.xlu0 %v585, 20
      %v596 = vpop.permute.xlu0 %595
      %597 = vrot.lane.b32.xlu0 %v586, 20
      %v598 = vpop.permute.xlu0 %597
      %vm603 = vcmask 195744
      %604 = vst.msk [vmem:[#allocation3] sm:$0xff] %vm603, %v592
      %605 = vst.msk [vmem:[#allocation3 + $0x8] sm:$0xff] %vm603, %v594
      %606 = vst.msk [vmem:[#allocation3 + $0x10] sm:$0xff] %vm603, %v596
      %607 = vst.msk [vmem:[#allocation3 + $0x18] sm:$0xff] %vm603, %v598
      %s608 = scalar_lea.vmem [#allocation2], 32
      %v609 = vld [vmem:[%s608] sm:$0xff]
      %v610 = vld [vmem:[%s608 + $0x10] sm:$0xff]
      %v611 = vld [vmem:[%s608 + $0x20] sm:$0xff]
      %v612 = vld [vmem:[%s608 + $0x30] sm:$0xff]
      %v613 = vld [vmem:[%s608 + $0x40] sm:$0xff]
      %v614 = vld [vmem:[%s608 + $0x50] sm:$0xff]
      %v615 = vld [vmem:[%s608 + $0x60] sm:$0xff]
      %v616 = vld [vmem:[%s608 + $0x70] sm:$0xff]
      %v617 = vpack.c.bf16 %v610, %v609
      %v618 = vpack.c.bf16 %v612, %v611
      %v619 = vpack.c.bf16 %v614, %v613
      %v620 = vpack.c.bf16 %v616, %v615
      %625 = vrot.lane.b32.xlu0 %v617, 24
      %v626 = vpop.permute.xlu0 %625
      %627 = vrot.lane.b32.xlu0 %v618, 24
      %v628 = vpop.permute.xlu0 %627
      %629 = vrot.lane.b32.xlu0 %v619, 24
      %v630 = vpop.permute.xlu0 %629
      %631 = vrot.lane.b32.xlu0 %v620, 24
      %v632 = vpop.permute.xlu0 %631
      %vm637 = vcmask 228544
      %638 = vst.msk [vmem:[#allocation3] sm:$0xff] %vm637, %v626
      %639 = vst.msk [vmem:[#allocation3 + $0x8] sm:$0xff] %vm637, %v628
      %640 = vst.msk [vmem:[#allocation3 + $0x10] sm:$0xff] %vm637, %v630
      %641 = vst.msk [vmem:[#allocation3 + $0x18] sm:$0xff] %vm637, %v632
      %v642 = vld [vmem:[%s608 + $0x1] sm:$0xff]
      %v643 = vld [vmem:[%s608 + $0x11] sm:$0xff]
      %v644 = vld [vmem:[%s608 + $0x21] sm:$0xff]
      %v645 = vld [vmem:[%s608 + $0x31] sm:$0xff]
      %v646 = vld [vmem:[%s608 + $0x41] sm:$0xff]
      %v647 = vld [vmem:[%s608 + $0x51] sm:$0xff]
      %v648 = vld [vmem:[%s608 + $0x61] sm:$0xff]
      %v649 = vld [vmem:[%s608 + $0x71] sm:$0xff]
      %v650 = vpack.c.bf16 %v643, %v642
      %v651 = vpack.c.bf16 %v645, %v644
      %v652 = vpack.c.bf16 %v647, %v646
      %v653 = vpack.c.bf16 %v649, %v648
      %658 = vrot.lane.b32.xlu0 %v650, 28
      %v659 = vpop.permute.xlu0 %658
      %660 = vrot.lane.b32.xlu0 %v651, 28
      %v661 = vpop.permute.xlu0 %660
      %662 = vrot.lane.b32.xlu0 %v652, 28
      %v663 = vpop.permute.xlu0 %662
      %664 = vrot.lane.b32.xlu0 %v653, 28
      %v665 = vpop.permute.xlu0 %664
      %vm670 = vcmask 261344
      %671 = vst.msk [vmem:[#allocation3] sm:$0xff] %vm670, %v659
      %672 = vst.msk [vmem:[#allocation3 + $0x8] sm:$0xff] %vm670, %v661
      %673 = vst.msk [vmem:[#allocation3 + $0x10] sm:$0xff] %vm670, %v663
      %674 = vst.msk [vmem:[#allocation3 + $0x18] sm:$0xff] %vm670, %v665
      %v675 = vld [vmem:[%s608 + $0x2] sm:$0xff]
      %v676 = vld [vmem:[%s608 + $0x12] sm:$0xff]
      %v677 = vld [vmem:[%s608 + $0x22] sm:$0xff]
      %v678 = vld [vmem:[%s608 + $0x32] sm:$0xff]
      %v679 = vld [vmem:[%s608 + $0x42] sm:$0xff]
      %v680 = vld [vmem:[%s608 + $0x52] sm:$0xff]
      %v681 = vld [vmem:[%s608 + $0x62] sm:$0xff]
      %v682 = vld [vmem:[%s608 + $0x72] sm:$0xff]
      %v683 = vpack.c.bf16 %v676, %v675
      %v684 = vpack.c.bf16 %v678, %v677
      %v685 = vpack.c.bf16 %v680, %v679
      %v686 = vpack.c.bf16 %v682, %v681
      %691 = vrot.lane.b32.xlu0 %v683, 32
      %v692 = vpop.permute.xlu0 %691
      %693 = vrot.lane.b32.xlu0 %v684, 32
      %v694 = vpop.permute.xlu0 %693
      %695 = vrot.lane.b32.xlu0 %v685, 32
      %v696 = vpop.permute.xlu0 %695
      %697 = vrot.lane.b32.xlu0 %v686, 32
      %v698 = vpop.permute.xlu0 %697
      %vm703 = vcmask 294144
      %704 = vst.msk [vmem:[#allocation3] sm:$0xff] %vm703, %v692
      %705 = vst.msk [vmem:[#allocation3 + $0x8] sm:$0xff] %vm703, %v694
      %706 = vst.msk [vmem:[#allocation3 + $0x10] sm:$0xff] %vm703, %v696
      %707 = vst.msk [vmem:[#allocation3 + $0x18] sm:$0xff] %vm703, %v698
      %v708 = vld [vmem:[#allocation3] sm:$0xff]
      %v709 = vld [vmem:[#allocation3 + $0x8] sm:$0xff]
      %v710 = vld [vmem:[#allocation3 + $0x10] sm:$0xff]
      %v711 = vld [vmem:[#allocation3 + $0x18] sm:$0xff]
      %v712 = vld [vmem:[%s1] sm:$0xf]
      %v713 = vld [vmem:[%s1 + $0x4] sm:$0xf]
      %v714 = vld [vmem:[%s1 + $0x8] sm:$0xf]
      %v715 = vld [vmem:[%s1 + $0xc] sm:$0xf]
      %v716 = vld [vmem:[%s1 + $0x10] sm:$0x3]
      %v717 = vld [vmem:[%s2] sm:$0x1]
      %v719 = vlaneseq
      %v720 = vshrl.u32 %v719, 7
      %v721 = vsub.s32 0, %v720
      %v722 = vrot.slane %v717, %v721
      %v729 = vunpack.c.l.b16 %v712
      %v730 = vunpack.c.l.b16 %v713
      %v731 = vunpack.c.l.b16 %v714
      %v732 = vunpack.c.l.b16 %v715
      %v733 = vunpack.c.l.b16 %v716
      %v734 = vpack.c.b16 %v730, %v729
      %v735 = vpack.c.b16 %v732, %v731
      %v736 = vpack.c.b16 %v733, %v733
      %vm739 = vcmask 293888
      %v741 = vsel %vm739, %v708, 0
      %v744 = vsel %vm739, %v709, 0
      %v747 = vsel %vm739, %v710, 0
      %v750 = vsel %vm739, %v711, 0
      %vm752 = vcmask 1041408
      %v754 = vsel %vm752, %v736, 0
      %756 = vmatprep.subr.bf16.mxu0 0
      %757 = vmatpush1.bf16.msra.mxu0 %v734
      %758 = vmatprep.subr.bf16.mxu0 0
      %759 = vmatpush1.bf16.msra.mxu0 %v735
      %760 = vmatprep.subr.bf16.mxu0 0
      %761 = vmatpush1.bf16.msra.mxu0 %v754
      %762 = vmatprep.subr.bf16.mxu0 0
      %763 = vmatpush1.bf16.msra.mxu0 0
      %764 = vmatprep.subr.bf16.mxu0 0
      %765 = vmatpush1.bf16.msra.mxu0 0
      %766 = vmatprep.subr.bf16.mxu0 0
      %767 = vmatpush1.bf16.msra.mxu0 0
      %768 = vmatprep.subr.bf16.mxu0 0
      %769 = vmatpush1.bf16.msra.mxu0 0
      %770 = vmatprep.subr.bf16.mxu0 0
      %771 = vmatpush1.bf16.msra.mxu0 0
      %772 = vmatprep.subr.bf16.mxu0 0
      %773 = vmatpush1.bf16.msra.mxu0 0
      %774 = vmatprep.subr.bf16.mxu0 0
      %775 = vmatpush1.bf16.msra.mxu0 0
      %776 = vmatprep.subr.bf16.mxu0 0
      %777 = vmatpush1.bf16.msra.mxu0 0
      %778 = vmatprep.subr.bf16.mxu0 0
      %779 = vmatpush1.bf16.msra.mxu0 0
      %780 = vmatprep.subr.bf16.mxu0 0
      %781 = vmatpush1.bf16.msra.mxu0 0
      %782 = vmatprep.subr.bf16.mxu0 0
      %783 = vmatpush1.bf16.msra.mxu0 0
      %784 = vmatprep.subr.bf16.mxu0 0
      %785 = vmatpush1.bf16.msra.mxu0 0
      %786 = vmatprep.subr.bf16.mxu0 0
      %787 = vmatpush1.bf16.msra.mxu0 0
      %788 = vmatprep.mubr.bf16.mxu0 0
      %789 = vmatmul.mubr.bf16.gmra.mrb[0].mxu0 %v741
      %v790 = vpop.f32.mrb[0].mxu0
      %v791 = vadd.f32 %v722, %v790
      %v792 = vpop.f32.mrb[0].mxu0
      %v793 = vpop.f32.mrb[0].mxu0
      %v794 = vadd.f32 %v722, %v793
      %v795 = vpop.f32.mrb[0].mxu0
      %796 = vmatprep.mubr.bf16.mxu0 0
      %797 = vmatmul.mubr.bf16.gmra.mrb[0].mxu0 %v744
      %v798 = vpop.f32.mrb[0].mxu0
      %v799 = vadd.f32 %v722, %v798
      %v800 = vpop.f32.mrb[0].mxu0
      %v801 = vpop.f32.mrb[0].mxu0
      %v802 = vadd.f32 %v722, %v801
      %v803 = vpop.f32.mrb[0].mxu0
      %804 = vmatprep.mubr.bf16.mxu0 0
      %805 = vmatmul.mubr.bf16.gmra.mrb[0].mxu0 %v747
      %v806 = vpop.f32.mrb[0].mxu0
      %v807 = vadd.f32 %v722, %v806
      %v808 = vpop.f32.mrb[0].mxu0
      %v809 = vpop.f32.mrb[0].mxu0
      %v810 = vadd.f32 %v722, %v809
      %v811 = vpop.f32.mrb[0].mxu0
      %812 = vmatprep.mubr.bf16.mxu0 0
      %813 = vmatmul.mubr.bf16.gmra.mrb[0].mxu0 %v750
      %v814 = vpop.f32.mrb[0].mxu0
      %v815 = vadd.f32 %v722, %v814
      %v816 = vpop.f32.mrb[0].mxu0
      %v817 = vpop.f32.mrb[0].mxu0
      %v818 = vadd.f32 %v722, %v817
      %v819 = vpop.f32.mrb[0].mxu0
      %820 = vdwg.mxu0
      %vm821 = vcmask 261120
      %822 = vst.msk [vmem:[#allocation4] sm:$0xff] %vm821, 0.0
      %vm823 = vcmask 254976
      %824 = vst.msk [vmem:[#allocation4 + $0x8] sm:$0x3] %vm823, 0.0
      %s825 = scalar_lea.vmem [#allocation4], 144
      %826 = vst.msk [vmem:[%s825] sm:$0xff] %vm821, 0.0
      %827 = vst.msk [vmem:[%s825 + $0x8] sm:$0x3] %vm823, 0.0
      %s828 = scalar_lea.vmem [#allocation4], 16
      %vm829 = vcmask 253952
      %830 = vst.msk [vmem:[%s828] sm:$0x1] %vm829, 0.0
      %831 = vst.msk [vmem:[%s828 + $0x10] sm:$0x1] %vm829, 0.0
      %832 = vst.msk [vmem:[%s828 + $0x20] sm:$0x1] %vm829, 0.0
      %833 = vst.msk [vmem:[%s828 + $0x30] sm:$0x1] %vm829, 0.0
      %834 = vst.msk [vmem:[%s828 + $0x40] sm:$0x1] %vm829, 0.0
      %835 = vst.msk [vmem:[%s828 + $0x50] sm:$0x1] %vm829, 0.0
      %836 = vst.msk [vmem:[%s828 + $0x60] sm:$0x1] %vm829, 0.0
      %837 = vst.msk [vmem:[%s828 + $0x70] sm:$0x1] %vm829, 0.0
      %838 = vst.msk [vmem:[%s828 + $0x9] sm:$0x1] %vm829, 0.0
      %839 = vst.msk [vmem:[%s828 + $0x19] sm:$0x1] %vm829, 0.0
      %840 = vst.msk [vmem:[%s828 + $0x29] sm:$0x1] %vm829, 0.0
      %841 = vst.msk [vmem:[%s828 + $0x39] sm:$0x1] %vm829, 0.0
      %842 = vst.msk [vmem:[%s828 + $0x49] sm:$0x1] %vm829, 0.0
      %843 = vst.msk [vmem:[%s828 + $0x59] sm:$0x1] %vm829, 0.0
      %844 = vst.msk [vmem:[%s828 + $0x69] sm:$0x1] %vm829, 0.0
      %845 = vst.msk [vmem:[%s828 + $0x79] sm:$0x1] %vm829, 0.0
      %846 = vst.msk [vmem:[%s828 + $0x1] sm:$0xff] %vm821, %v791
      %847 = vst.msk [vmem:[%s828 + $0x11] sm:$0xff] %vm821, %v794
      %848 = vst.msk [vmem:[%s828 + $0x21] sm:$0xff] %vm821, %v799
      %849 = vst.msk [vmem:[%s828 + $0x31] sm:$0xff] %vm821, %v802
      %850 = vst.msk [vmem:[%s828 + $0x41] sm:$0xff] %vm821, %v807
      %851 = vst.msk [vmem:[%s828 + $0x51] sm:$0xff] %vm821, %v810
      %852 = vst.msk [vmem:[%s828 + $0x61] sm:$0xff] %vm821, %v815
      %853 = vst.msk [vmem:[%s828 + $0x71] sm:$0xff] %vm821, %v818
      %v854 = vld [vmem:[#allocation4] sm:$0xff]
      %v855 = vld [vmem:[#allocation4 + $0x10] sm:$0xff]
      %v856 = vld [vmem:[#allocation4 + $0x20] sm:$0xff]
      %v857 = vld [vmem:[#allocation4 + $0x30] sm:$0xff]
      %v858 = vld [vmem:[#allocation4 + $0x40] sm:$0xff]
      %v859 = vld [vmem:[#allocation4 + $0x50] sm:$0xff]
      %v860 = vld [vmem:[#allocation4 + $0x60] sm:$0xff]
      %v861 = vld [vmem:[#allocation4 + $0x70] sm:$0xff]
      %v862 = vpack.c.bf16 %v855, %v854
      %v863 = vpack.c.bf16 %v857, %v856
      %v864 = vpack.c.bf16 %v859, %v858
      %v865 = vpack.c.bf16 %v861, %v860
      %866 = vst.msk [vmem:[#allocation5] sm:$0xff] %vm821, %v862
      %867 = vst.msk [vmem:[#allocation5 + $0x18] sm:$0xff] %vm821, %v863
      %868 = vst.msk [vmem:[#allocation5 + $0x30] sm:$0xff] %vm821, %v864
      %869 = vst.msk [vmem:[#allocation5 + $0x48] sm:$0xff] %vm821, %v865
      %v870 = vld [vmem:[#allocation4 + $0x1] sm:$0xff]
      %v871 = vld [vmem:[#allocation4 + $0x11] sm:$0xff]
      %v872 = vld [vmem:[#allocation4 + $0x21] sm:$0xff]
      %v873 = vld [vmem:[#allocation4 + $0x31] sm:$0xff]
      %v874 = vld [vmem:[#allocation4 + $0x41] sm:$0xff]
      %v875 = vld [vmem:[#allocation4 + $0x51] sm:$0xff]
      %v876 = vld [vmem:[#allocation4 + $0x61] sm:$0xff]
      %v877 = vld [vmem:[#allocation4 + $0x71] sm:$0xff]
      %v878 = vpack.c.bf16 %v871, %v870
      %v879 = vpack.c.bf16 %v873, %v872
      %v880 = vpack.c.bf16 %v875, %v874
      %v881 = vpack.c.bf16 %v877, %v876
      %886 = vrot.lane.b32.xlu0 %v878, 32
      %v887 = vpop.permute.xlu0 %886
      %888 = vrot.lane.b32.xlu0 %v879, 32
      %v889 = vpop.permute.xlu0 %888
      %890 = vrot.lane.b32.xlu0 %v880, 32
      %v891 = vpop.permute.xlu0 %890
      %892 = vrot.lane.b32.xlu0 %v881, 32
      %v893 = vpop.permute.xlu0 %892
      %vm898 = vcmask 523520
      %899 = vst.msk [vmem:[#allocation5] sm:$0xff] %vm898, %v887
      %900 = vst.msk [vmem:[#allocation5 + $0x18] sm:$0xff] %vm898, %v889
      %901 = vst.msk [vmem:[#allocation5 + $0x30] sm:$0xff] %vm898, %v891
      %902 = vst.msk [vmem:[#allocation5 + $0x48] sm:$0xff] %vm898, %v893
      %v903 = vld [vmem:[#allocation4 + $0x2] sm:$0xff]
      %v904 = vld [vmem:[#allocation4 + $0x12] sm:$0xff]
      %v905 = vld [vmem:[#allocation4 + $0x22] sm:$0xff]
      %v906 = vld [vmem:[#allocation4 + $0x32] sm:$0xff]
      %v907 = vld [vmem:[#allocation4 + $0x42] sm:$0xff]
      %v908 = vld [vmem:[#allocation4 + $0x52] sm:$0xff]
      %v909 = vld [vmem:[#allocation4 + $0x62] sm:$0xff]
      %v910 = vld [vmem:[#allocation4 + $0x72] sm:$0xff]
      %v911 = vpack.c.bf16 %v904, %v903
      %v912 = vpack.c.bf16 %v906, %v905
      %v913 = vpack.c.bf16 %v908, %v907
      %v914 = vpack.c.bf16 %v910, %v909
      %919 = vrot.lane.b32.xlu0 %v911, 64
      %v920 = vpop.permute.xlu0 %919
      %921 = vrot.lane.b32.xlu0 %v912, 64
      %v922 = vpop.permute.xlu0 %921
      %923 = vrot.lane.b32.xlu0 %v913, 64
      %v924 = vpop.permute.xlu0 %923
      %925 = vrot.lane.b32.xlu0 %v914, 64
      %v926 = vpop.permute.xlu0 %925
      %vm931 = vcmask 785920
      %932 = vst.msk [vmem:[#allocation5] sm:$0xff] %vm931, %v920
      %933 = vst.msk [vmem:[#allocation5 + $0x18] sm:$0xff] %vm931, %v922
      %934 = vst.msk [vmem:[#allocation5 + $0x30] sm:$0xff] %vm931, %v924
      %935 = vst.msk [vmem:[#allocation5 + $0x48] sm:$0xff] %vm931, %v926
      %v936 = vld [vmem:[%s828] sm:$0xff]
      %v937 = vld [vmem:[%s828 + $0x10] sm:$0xff]
      %v938 = vld [vmem:[%s828 + $0x20] sm:$0xff]
      %v939 = vld [vmem:[%s828 + $0x30] sm:$0xff]
      %v940 = vld [vmem:[%s828 + $0x40] sm:$0xff]
      %v941 = vld [vmem:[%s828 + $0x50] sm:$0xff]
      %v942 = vld [vmem:[%s828 + $0x60] sm:$0xff]
      %v943 = vld [vmem:[%s828 + $0x70] sm:$0xff]
      %v944 = vpack.c.bf16 %v937, %v936
      %v945 = vpack.c.bf16 %v939, %v938
      %v946 = vpack.c.bf16 %v941, %v940
      %v947 = vpack.c.bf16 %v943, %v942
      %952 = vrot.lane.b32.xlu0 %v944, 96
      %v953 = vpop.permute.xlu0 %952
      %954 = vrot.lane.b32.xlu0 %v945, 96
      %v955 = vpop.permute.xlu0 %954
      %956 = vrot.lane.b32.xlu0 %v946, 96
      %v957 = vpop.permute.xlu0 %956
      %958 = vrot.lane.b32.xlu0 %v947, 96
      %v959 = vpop.permute.xlu0 %958
      %vm964 = vcmask 1048320
      %965 = vst.msk [vmem:[#allocation5] sm:$0xff] %vm964, %v953
      %966 = vst.msk [vmem:[#allocation5 + $0x18] sm:$0xff] %vm964, %v955
      %967 = vst.msk [vmem:[#allocation5 + $0x30] sm:$0xff] %vm964, %v957
      %968 = vst.msk [vmem:[#allocation5 + $0x48] sm:$0xff] %vm964, %v959
      %v969 = vld [vmem:[%s828 + $0x1] sm:$0xff]
      %v970 = vld [vmem:[%s828 + $0x11] sm:$0xff]
      %v971 = vld [vmem:[%s828 + $0x21] sm:$0xff]
      %v972 = vld [vmem:[%s828 + $0x31] sm:$0xff]
      %v973 = vld [vmem:[%s828 + $0x41] sm:$0xff]
      %v974 = vld [vmem:[%s828 + $0x51] sm:$0xff]
      %v975 = vld [vmem:[%s828 + $0x61] sm:$0xff]
      %v976 = vld [vmem:[%s828 + $0x71] sm:$0xff]
      %v977 = vpack.c.bf16 %v970, %v969
      %v978 = vpack.c.bf16 %v972, %v971
      %v979 = vpack.c.bf16 %v974, %v973
      %v980 = vpack.c.bf16 %v976, %v975
      %981 = vst.msk [vmem:[#allocation5 + $0x8] sm:$0xff] %vm821, %v977
      %982 = vst.msk [vmem:[#allocation5 + $0x20] sm:$0xff] %vm821, %v978
      %983 = vst.msk [vmem:[#allocation5 + $0x38] sm:$0xff] %vm821, %v979
      %984 = vst.msk [vmem:[#allocation5 + $0x50] sm:$0xff] %vm821, %v980
      %v985 = vld [vmem:[%s828 + $0x2] sm:$0xff]
      %v986 = vld [vmem:[%s828 + $0x12] sm:$0xff]
      %v987 = vld [vmem:[%s828 + $0x22] sm:$0xff]
      %v988 = vld [vmem:[%s828 + $0x32] sm:$0xff]
      %v989 = vld [vmem:[%s828 + $0x42] sm:$0xff]
      %v990 = vld [vmem:[%s828 + $0x52] sm:$0xff]
      %v991 = vld [vmem:[%s828 + $0x62] sm:$0xff]
      %v992 = vld [vmem:[%s828 + $0x72] sm:$0xff]
      %v993 = vpack.c.bf16 %v986, %v985
      %v994 = vpack.c.bf16 %v988, %v987
      %v995 = vpack.c.bf16 %v990, %v989
      %v996 = vpack.c.bf16 %v992, %v991
      %1001 = vrot.lane.b32.xlu0 %v993, 32
      %v1002 = vpop.permute.xlu0 %1001
      %1003 = vrot.lane.b32.xlu0 %v994, 32
      %v1004 = vpop.permute.xlu0 %1003
      %1005 = vrot.lane.b32.xlu0 %v995, 32
      %v1006 = vpop.permute.xlu0 %1005
      %1007 = vrot.lane.b32.xlu0 %v996, 32
      %v1008 = vpop.permute.xlu0 %1007
      %1013 = vst.msk [vmem:[#allocation5 + $0x8] sm:$0xff] %vm898, %v1002
      %1014 = vst.msk [vmem:[#allocation5 + $0x20] sm:$0xff] %vm898, %v1004
      %1015 = vst.msk [vmem:[#allocation5 + $0x38] sm:$0xff] %vm898, %v1006
      %1016 = vst.msk [vmem:[#allocation5 + $0x50] sm:$0xff] %vm898, %v1008
      %s1017 = scalar_lea.vmem [#allocation4], 32
      %v1018 = vld [vmem:[%s1017] sm:$0xff]
      %v1019 = vld [vmem:[%s1017 + $0x10] sm:$0xff]
      %v1020 = vld [vmem:[%s1017 + $0x20] sm:$0xff]
      %v1021 = vld [vmem:[%s1017 + $0x30] sm:$0xff]
      %v1022 = vld [vmem:[%s1017 + $0x40] sm:$0xff]
      %v1023 = vld [vmem:[%s1017 + $0x50] sm:$0xff]
      %v1024 = vld [vmem:[%s1017 + $0x60] sm:$0xff]
      %v1025 = vld [vmem:[%s1017 + $0x70] sm:$0xff]
      %v1026 = vpack.c.bf16 %v1019, %v1018
      %v1027 = vpack.c.bf16 %v1021, %v1020
      %v1028 = vpack.c.bf16 %v1023, %v1022
      %v1029 = vpack.c.bf16 %v1025, %v1024
      %1034 = vrot.lane.b32.xlu0 %v1026, 64
      %v1035 = vpop.permute.xlu0 %1034
      %1036 = vrot.lane.b32.xlu0 %v1027, 64
      %v1037 = vpop.permute.xlu0 %1036
      %1038 = vrot.lane.b32.xlu0 %v1028, 64
      %v1039 = vpop.permute.xlu0 %1038
      %1040 = vrot.lane.b32.xlu0 %v1029, 64
      %v1041 = vpop.permute.xlu0 %1040
      %1046 = vst.msk [vmem:[#allocation5 + $0x8] sm:$0xff] %vm931, %v1035
      %1047 = vst.msk [vmem:[#allocation5 + $0x20] sm:$0xff] %vm931, %v1037
      %1048 = vst.msk [vmem:[#allocation5 + $0x38] sm:$0xff] %vm931, %v1039
      %1049 = vst.msk [vmem:[#allocation5 + $0x50] sm:$0xff] %vm931, %v1041
      %v1050 = vld [vmem:[%s1017 + $0x1] sm:$0xff]
      %v1051 = vld [vmem:[%s1017 + $0x11] sm:$0xff]
      %v1052 = vld [vmem:[%s1017 + $0x21] sm:$0xff]
      %v1053 = vld [vmem:[%s1017 + $0x31] sm:$0xff]
      %v1054 = vld [vmem:[%s1017 + $0x41] sm:$0xff]
      %v1055 = vld [vmem:[%s1017 + $0x51] sm:$0xff]
      %v1056 = vld [vmem:[%s1017 + $0x61] sm:$0xff]
      %v1057 = vld [vmem:[%s1017 + $0x71] sm:$0xff]
      %v1058 = vpack.c.bf16 %v1051, %v1050
      %v1059 = vpack.c.bf16 %v1053, %v1052
      %v1060 = vpack.c.bf16 %v1055, %v1054
      %v1061 = vpack.c.bf16 %v1057, %v1056
      %1066 = vrot.lane.b32.xlu0 %v1058, 96
      %v1067 = vpop.permute.xlu0 %1066
      %1068 = vrot.lane.b32.xlu0 %v1059, 96
      %v1069 = vpop.permute.xlu0 %1068
      %1070 = vrot.lane.b32.xlu0 %v1060, 96
      %v1071 = vpop.permute.xlu0 %1070
      %1072 = vrot.lane.b32.xlu0 %v1061, 96
      %v1073 = vpop.permute.xlu0 %1072
      %1078 = vst.msk [vmem:[#allocation5 + $0x8] sm:$0xff] %vm964, %v1067
      %1079 = vst.msk [vmem:[#allocation5 + $0x20] sm:$0xff] %vm964, %v1069
      %1080 = vst.msk [vmem:[#allocation5 + $0x38] sm:$0xff] %vm964, %v1071
      %1081 = vst.msk [vmem:[#allocation5 + $0x50] sm:$0xff] %vm964, %v1073
      %v1082 = vld [vmem:[%s1017 + $0x2] sm:$0xff]
      %v1083 = vld [vmem:[%s1017 + $0x12] sm:$0xff]
      %v1084 = vld [vmem:[%s1017 + $0x22] sm:$0xff]
      %v1085 = vld [vmem:[%s1017 + $0x32] sm:$0xff]
      %v1086 = vld [vmem:[%s1017 + $0x42] sm:$0xff]
      %v1087 = vld [vmem:[%s1017 + $0x52] sm:$0xff]
      %v1088 = vld [vmem:[%s1017 + $0x62] sm:$0xff]
      %v1089 = vld [vmem:[%s1017 + $0x72] sm:$0xff]
      %v1090 = vpack.c.bf16 %v1083, %v1082
      %v1091 = vpack.c.bf16 %v1085, %v1084
      %v1092 = vpack.c.bf16 %v1087, %v1086
      %v1093 = vpack.c.bf16 %v1089, %v1088
      %1094 = vst.msk [vmem:[#allocation5 + $0x10] sm:$0xff] %vm821, %v1090
      %1095 = vst.msk [vmem:[#allocation5 + $0x28] sm:$0xff] %vm821, %v1091
      %1096 = vst.msk [vmem:[#allocation5 + $0x40] sm:$0xff] %vm821, %v1092
      %1097 = vst.msk [vmem:[#allocation5 + $0x58] sm:$0xff] %vm821, %v1093
      %v1098 = vld [vmem:[#allocation5] sm:$0xff]
      %v1099 = vld [vmem:[#allocation5 + $0x8] sm:$0xff]
      %v1100 = vld [vmem:[#allocation5 + $0x10] sm:$0xff]
      %v1101 = vld [vmem:[#allocation5 + $0x18] sm:$0xff]
      %v1102 = vld [vmem:[#allocation5 + $0x20] sm:$0xff]
      %v1103 = vld [vmem:[#allocation5 + $0x28] sm:$0xff]
      %v1104 = vld [vmem:[#allocation5 + $0x30] sm:$0xff]
      %v1105 = vld [vmem:[#allocation5 + $0x38] sm:$0xff]
      %v1106 = vld [vmem:[#allocation5 + $0x40] sm:$0xff]
      %v1107 = vld [vmem:[#allocation5 + $0x48] sm:$0xff]
      %v1108 = vld [vmem:[#allocation5 + $0x50] sm:$0xff]
      %v1109 = vld [vmem:[#allocation5 + $0x58] sm:$0xff]
      %v1110 = vld [vmem:[%s3] sm:$0xf]
      %v1111 = vld [vmem:[%s3 + $0x4] sm:$0xf]
      %v1112 = vld [vmem:[%s3 + $0x8] sm:$0xf]
      %v1113 = vld [vmem:[%s3 + $0xc] sm:$0xf]
      %v1114 = vld [vmem:[%s3 + $0x10] sm:$0xf]
      %v1115 = vld [vmem:[%s3 + $0x14] sm:$0xf]
      %v1116 = vld [vmem:[%s3 + $0x18] sm:$0xf]
      %v1117 = vld [vmem:[%s3 + $0x1c] sm:$0xf]
      %v1118 = vld [vmem:[%s3 + $0x20] sm:$0xf]
      %v1119 = vld [vmem:[%s3 + $0x24] sm:$0xf]
      %v1120 = vld [vmem:[%s3 + $0x28] sm:$0xf]
      %v1121 = vld [vmem:[%s3 + $0x2c] sm:$0xf]
      %v1122 = vld [vmem:[%s3 + $0x30] sm:$0xf]
      %v1123 = vld [vmem:[%s3 + $0x34] sm:$0xf]
      %v1124 = vld [vmem:[%s3 + $0x38] sm:$0xf]
      %v1125 = vld [vmem:[%s3 + $0x3c] sm:$0xf]
      %v1126 = vld [vmem:[%s3 + $0x40] sm:$0xf]
      %v1127 = vld [vmem:[%s3 + $0x44] sm:$0xf]
      %v1128 = vld [vmem:[%s3 + $0x48] sm:$0xf]
      %v1129 = vld [vmem:[%s3 + $0x4c] sm:$0xf]
      %v1130 = vld [vmem:[%s3 + $0x50] sm:$0xf]
      %v1131 = vld [vmem:[%s3 + $0x54] sm:$0xf]
      %v1132 = vld [vmem:[%s3 + $0x58] sm:$0xf]
      %v1133 = vld [vmem:[%s3 + $0x5c] sm:$0xf]
      %v1134 = vld [vmem:[%s3 + $0x60] sm:$0xf]
      %v1135 = vld [vmem:[%s3 + $0x64] sm:$0xf]
      %v1136 = vld [vmem:[%s3 + $0x68] sm:$0xf]
      %v1137 = vld [vmem:[%s3 + $0x6c] sm:$0xf]
      %v1138 = vld [vmem:[%s3 + $0x70] sm:$0xf]
      %v1139 = vld [vmem:[%s3 + $0x74] sm:$0xf]
      %v1140 = vld [vmem:[%s3 + $0x78] sm:$0xf]
      %v1141 = vld [vmem:[%s3 + $0x7c] sm:$0xf]
      %v1142 = vld [vmem:[%s3 + $0x80] sm:$0xf]
      %v1143 = vld [vmem:[%s3 + $0x84] sm:$0xf]
      %v1144 = vld [vmem:[%s3 + $0x88] sm:$0xf]
      %v1145 = vld [vmem:[%s3 + $0x8c] sm:$0xf]
      %v1146 = vld [vmem:[%s4] sm:$0x1]
      %v1148 = vlaneseq
      %v1149 = vshrl.u32 %v1148, 7
      %v1150 = vsub.s32 0, %v1149
      %v1151 = vrot.slane %v1146, %v1150
      %v1189 = vunpack.c.l.b16 %v1110
      %v1190 = vunpack.c.l.b16 %v1111
      %v1191 = vunpack.c.l.b16 %v1112
      %v1192 = vunpack.c.l.b16 %v1113
      %v1193 = vunpack.c.l.b16 %v1114
      %v1194 = vunpack.c.l.b16 %v1115
      %v1195 = vunpack.c.l.b16 %v1116
      %v1196 = vunpack.c.l.b16 %v1117
      %v1197 = vunpack.c.l.b16 %v1118
      %v1198 = vunpack.c.l.b16 %v1119
      %v1199 = vunpack.c.l.b16 %v1120
      %v1200 = vunpack.c.l.b16 %v1121
      %v1201 = vunpack.c.l.b16 %v1122
      %v1202 = vunpack.c.l.b16 %v1123
      %v1203 = vunpack.c.l.b16 %v1124
      %v1204 = vunpack.c.l.b16 %v1125
      %v1205 = vunpack.c.l.b16 %v1126
      %v1206 = vunpack.c.l.b16 %v1127
      %v1207 = vunpack.c.l.b16 %v1128
      %v1208 = vunpack.c.l.b16 %v1129
      %v1209 = vunpack.c.l.b16 %v1130
      %v1210 = vunpack.c.l.b16 %v1131
      %v1211 = vunpack.c.l.b16 %v1132
      %v1212 = vunpack.c.l.b16 %v1133
      %v1213 = vunpack.c.l.b16 %v1134
      %v1214 = vunpack.c.l.b16 %v1135
      %v1215 = vunpack.c.l.b16 %v1136
      %v1216 = vunpack.c.l.b16 %v1137
      %v1217 = vunpack.c.l.b16 %v1138
      %v1218 = vunpack.c.l.b16 %v1139
      %v1219 = vunpack.c.l.b16 %v1140
      %v1220 = vunpack.c.l.b16 %v1141
      %v1221 = vunpack.c.l.b16 %v1142
      %v1222 = vunpack.c.l.b16 %v1143
      %v1223 = vunpack.c.l.b16 %v1144
      %v1224 = vunpack.c.l.b16 %v1145
      %v1225 = vpack.c.b16 %v1190, %v1189
      %v1226 = vpack.c.b16 %v1192, %v1191
      %v1227 = vpack.c.b16 %v1194, %v1193
      %v1228 = vpack.c.b16 %v1196, %v1195
      %v1229 = vpack.c.b16 %v1198, %v1197
      %v1230 = vpack.c.b16 %v1200, %v1199
      %v1231 = vpack.c.b16 %v1202, %v1201
      %v1232 = vpack.c.b16 %v1204, %v1203
      %v1233 = vpack.c.b16 %v1206, %v1205
      %v1234 = vpack.c.b16 %v1208, %v1207
      %v1235 = vpack.c.b16 %v1210, %v1209
      %v1236 = vpack.c.b16 %v1212, %v1211
      %v1237 = vpack.c.b16 %v1214, %v1213
      %v1238 = vpack.c.b16 %v1216, %v1215
      %v1239 = vpack.c.b16 %v1218, %v1217
      %v1240 = vpack.c.b16 %v1220, %v1219
      %v1241 = vpack.c.b16 %v1222, %v1221
      %v1242 = vpack.c.b16 %v1224, %v1223
      %v1262 = vsel %vm821, %v1100, 0
      %v1265 = vsel %vm821, %v1103, 0
      %v1268 = vsel %vm821, %v1106, 0
      %v1271 = vsel %vm821, %v1109, 0
      %1273 = vmatprep.subr.bf16.mxu0 0
      %1274 = vmatpush1.bf16.msra.mxu0 %v1225
      %1275 = vmatprep.subr.bf16.mxu0 0
      %1276 = vmatpush1.bf16.msra.mxu0 %v1226
      %1277 = vmatprep.subr.bf16.mxu0 0
      %1278 = vmatpush1.bf16.msra.mxu0 %v1227
      %1279 = vmatprep.subr.bf16.mxu0 0
      %1280 = vmatpush1.bf16.msra.mxu0 %v1228
      %1281 = vmatprep.subr.bf16.mxu0 0
      %1282 = vmatpush1.bf16.msra.mxu0 %v1229
      %1283 = vmatprep.subr.bf16.mxu0 0
      %1284 = vmatpush1.bf16.msra.mxu0 %v1230
      %1285 = vmatprep.subr.bf16.mxu0 0
      %1286 = vmatpush1.bf16.msra.mxu0 %v1231
      %1287 = vmatprep.subr.bf16.mxu0 0
      %1288 = vmatpush1.bf16.msra.mxu0 %v1232
      %1289 = vmatprep.subr.bf16.mxu0 0
      %1290 = vmatpush1.bf16.msra.mxu0 %v1233
      %1291 = vmatprep.subr.bf16.mxu0 0
      %1292 = vmatpush1.bf16.msra.mxu0 %v1234
      %1293 = vmatprep.subr.bf16.mxu0 0
      %1294 = vmatpush1.bf16.msra.mxu0 %v1235
      %1295 = vmatprep.subr.bf16.mxu0 0
      %1296 = vmatpush1.bf16.msra.mxu0 %v1236
      %1297 = vmatprep.subr.bf16.mxu0 0
      %1298 = vmatpush1.bf16.msra.mxu0 %v1237
      %1299 = vmatprep.subr.bf16.mxu0 0
      %1300 = vmatpush1.bf16.msra.mxu0 %v1238
      %1301 = vmatprep.subr.bf16.mxu0 0
      %1302 = vmatpush1.bf16.msra.mxu0 %v1239
      %1303 = vmatprep.subr.bf16.mxu0 0
      %1304 = vmatpush1.bf16.msra.mxu0 %v1240
      %1305 = vmatprep.mubr.bf16.mxu0 %v1099
      %1306 = vmatmul.mubr.bf16.gmra.mrb[0].mxu0 %v1098
      %v1307 = vpop.f32.mrb[0].mxu0
      %v1308 = vadd.f32 %v1151, %v1307
      %v1309 = vpop.f32.mrb[0].mxu0
      %v1310 = vpop.f32.mrb[0].mxu0
      %v1311 = vadd.f32 %v1151, %v1310
      %v1312 = vpop.f32.mrb[0].mxu0
      %1313 = vmatprep.mubr.bf16.mxu0 %v1102
      %1314 = vmatmul.mubr.bf16.gmra.mrb[0].mxu0 %v1101
      %v1315 = vpop.f32.mrb[0].mxu0
      %v1316 = vadd.f32 %v1151, %v1315
      %v1317 = vpop.f32.mrb[0].mxu0
      %v1318 = vpop.f32.mrb[0].mxu0
      %v1319 = vadd.f32 %v1151, %v1318
      %v1320 = vpop.f32.mrb[0].mxu0
      %1321 = vmatprep.mubr.bf16.mxu0 %v1105
      %1322 = vmatmul.mubr.bf16.gmra.mrb[0].mxu0 %v1104
      %v1323 = vpop.f32.mrb[0].mxu0
      %v1324 = vadd.f32 %v1151, %v1323
      %v1325 = vpop.f32.mrb[0].mxu0
      %v1326 = vpop.f32.mrb[0].mxu0
      %v1327 = vadd.f32 %v1151, %v1326
      %v1328 = vpop.f32.mrb[0].mxu0
      %1329 = vmatprep.mubr.bf16.mxu0 %v1108
      %1330 = vmatmul.mubr.bf16.gmra.mrb[0].mxu0 %v1107
      %v1331 = vpop.f32.mrb[0].mxu0
      %v1332 = vadd.f32 %v1151, %v1331
      %v1333 = vpop.f32.mrb[0].mxu0
      %v1334 = vpop.f32.mrb[0].mxu0
      %v1335 = vadd.f32 %v1151, %v1334
      %v1336 = vpop.f32.mrb[0].mxu0
      %1337 = vdwg.mxu0
      %1338 = vmatprep.subr.bf16.mxu0 0
      %1339 = vmatpush1.bf16.msra.mxu0 %v1241
      %1340 = vmatprep.subr.bf16.mxu0 0
      %1341 = vmatpush1.bf16.msra.mxu0 %v1242
      %1342 = vmatprep.subr.bf16.mxu0 0
      %1343 = vmatpush1.bf16.msra.mxu0 0
      %1344 = vmatprep.subr.bf16.mxu0 0
      %1345 = vmatpush1.bf16.msra.mxu0 0
      %1346 = vmatprep.subr.bf16.mxu0 0
      %1347 = vmatpush1.bf16.msra.mxu0 0
      %1348 = vmatprep.subr.bf16.mxu0 0
      %1349 = vmatpush1.bf16.msra.mxu0 0
      %1350 = vmatprep.subr.bf16.mxu0 0
      %1351 = vmatpush1.bf16.msra.mxu0 0
      %1352 = vmatprep.subr.bf16.mxu0 0
      %1353 = vmatpush1.bf16.msra.mxu0 0
      %1354 = vmatprep.subr.bf16.mxu0 0
      %1355 = vmatpush1.bf16.msra.mxu0 0
      %1356 = vmatprep.subr.bf16.mxu0 0
      %1357 = vmatpush1.bf16.msra.mxu0 0
      %1358 = vmatprep.subr.bf16.mxu0 0
      %1359 = vmatpush1.bf16.msra.mxu0 0
      %1360 = vmatprep.subr.bf16.mxu0 0
      %1361 = vmatpush1.bf16.msra.mxu0 0
      %1362 = vmatprep.subr.bf16.mxu0 0
      %1363 = vmatpush1.bf16.msra.mxu0 0
      %1364 = vmatprep.subr.bf16.mxu0 0
      %1365 = vmatpush1.bf16.msra.mxu0 0
      %1366 = vmatprep.subr.bf16.mxu0 0
      %1367 = vmatpush1.bf16.msra.mxu0 0
      %1368 = vmatprep.subr.bf16.mxu0 0
      %1369 = vmatpush1.bf16.msra.mxu0 0
      %1370 = vmatprep.mubr.bf16.mxu0 0
      %1371 = vmatmul.mubr.bf16.gmra.mrb[0].mxu0 %v1262
      %v1372 = vpop.f32.mrb[0].mxu0
      %v1373 = vadd.f32 %v1308, %v1372
      %v1374 = vpop.f32.mrb[0].mxu0
      %v1375 = vpop.f32.mrb[0].mxu0
      %v1376 = vadd.f32 %v1311, %v1375
      %v1377 = vpop.f32.mrb[0].mxu0
      %1378 = vmatprep.mubr.bf16.mxu0 0
      %1379 = vmatmul.mubr.bf16.gmra.mrb[0].mxu0 %v1265
      %v1380 = vpop.f32.mrb[0].mxu0
      %v1381 = vadd.f32 %v1316, %v1380
      %v1382 = vpop.f32.mrb[0].mxu0
      %v1383 = vpop.f32.mrb[0].mxu0
      %v1384 = vadd.f32 %v1319, %v1383
      %v1385 = vpop.f32.mrb[0].mxu0
      %1386 = vmatprep.mubr.bf16.mxu0 0
      %1387 = vmatmul.mubr.bf16.gmra.mrb[0].mxu0 %v1268
      %v1388 = vpop.f32.mrb[0].mxu0
      %v1389 = vadd.f32 %v1324, %v1388
      %v1390 = vpop.f32.mrb[0].mxu0
      %v1391 = vpop.f32.mrb[0].mxu0
      %v1392 = vadd.f32 %v1327, %v1391
      %v1393 = vpop.f32.mrb[0].mxu0
      %1394 = vmatprep.mubr.bf16.mxu0 0
      %1395 = vmatmul.mubr.bf16.gmra.mrb[0].mxu0 %v1271
      %v1396 = vpop.f32.mrb[0].mxu0
      %v1397 = vadd.f32 %v1332, %v1396
      %v1398 = vpop.f32.mrb[0].mxu0
      %v1399 = vpop.f32.mrb[0].mxu0
      %v1400 = vadd.f32 %v1335, %v1399
      %v1401 = vpop.f32.mrb[0].mxu0
      %1402 = vdwg.mxu0
      %v1403 = vmax.f32 %v1373, 0.0
      %v1404 = vmax.f32 %v1376, 0.0
      %v1405 = vmax.f32 %v1381, 0.0
      %v1406 = vmax.f32 %v1384, 0.0
      %v1407 = vmax.f32 %v1389, 0.0
      %v1408 = vmax.f32 %v1392, 0.0
      %v1409 = vmax.f32 %v1397, 0.0
      %v1410 = vmax.f32 %v1400, 0.0
      %v1411 = vpack.c.bf16 %v1404, %v1403
      %v1412 = vpack.c.bf16 %v1406, %v1405
      %v1413 = vpack.c.bf16 %v1408, %v1407
      %v1414 = vpack.c.bf16 %v1410, %v1409
      %v1415 = vld [vmem:[%s5] sm:$0xf]
      %v1416 = vld [vmem:[%s5 + $0x4] sm:$0xf]
      %v1417 = vld [vmem:[%s5 + $0x8] sm:$0xf]
      %v1418 = vld [vmem:[%s5 + $0xc] sm:$0xf]
      %v1419 = vld [vmem:[%s6] sm:$0x1]
      %v1421 = vlaneseq
      %v1422 = vshrl.u32 %v1421, 7
      %v1423 = vsub.s32 0, %v1422
      %v1424 = vrot.slane %v1419, %v1423
      %v1430 = vunpack.c.l.b16 %v1415
      %v1431 = vunpack.c.l.b16 %v1416
      %v1432 = vunpack.c.l.b16 %v1417
      %v1433 = vunpack.c.l.b16 %v1418
      %v1434 = vpack.c.b16 %v1431, %v1430
      %v1435 = vpack.c.b16 %v1433, %v1432
      %v1439 = vsel %vm821, %v1411, 0
      %v1442 = vsel %vm821, %v1412, 0
      %v1445 = vsel %vm821, %v1413, 0
      %v1448 = vsel %vm821, %v1414, 0
      %1450 = vmatprep.subr.bf16.mxu0 0
      %1451 = vmatpush1.bf16.msra.mxu0 %v1434
      %1452 = vmatprep.subr.bf16.mxu0 0
      %1453 = vmatpush1.bf16.msra.mxu0 %v1435
      %1454 = vmatprep.subr.bf16.mxu0 0
      %1455 = vmatpush1.bf16.msra.mxu0 0
      %1456 = vmatprep.subr.bf16.mxu0 0
      %1457 = vmatpush1.bf16.msra.mxu0 0
      %1458 = vmatprep.subr.bf16.mxu0 0
      %1459 = vmatpush1.bf16.msra.mxu0 0
      %1460 = vmatprep.subr.bf16.mxu0 0
      %1461 = vmatpush1.bf16.msra.mxu0 0
      %1462 = vmatprep.subr.bf16.mxu0 0
      %1463 = vmatpush1.bf16.msra.mxu0 0
      %1464 = vmatprep.subr.bf16.mxu0 0
      %1465 = vmatpush1.bf16.msra.mxu0 0
      %1466 = vmatprep.subr.bf16.mxu0 0
      %1467 = vmatpush1.bf16.msra.mxu0 0
      %1468 = vmatprep.subr.bf16.mxu0 0
      %1469 = vmatpush1.bf16.msra.mxu0 0
      %1470 = vmatprep.subr.bf16.mxu0 0
      %1471 = vmatpush1.bf16.msra.mxu0 0
      %1472 = vmatprep.subr.bf16.mxu0 0
      %1473 = vmatpush1.bf16.msra.mxu0 0
      %1474 = vmatprep.subr.bf16.mxu0 0
      %1475 = vmatpush1.bf16.msra.mxu0 0
      %1476 = vmatprep.subr.bf16.mxu0 0
      %1477 = vmatpush1.bf16.msra.mxu0 0
      %1478 = vmatprep.subr.bf16.mxu0 0
      %1479 = vmatpush1.bf16.msra.mxu0 0
      %1480 = vmatprep.subr.bf16.mxu0 0
      %1481 = vmatpush1.bf16.msra.mxu0 0
      %1482 = vmatprep.mubr.bf16.mxu0 0
      %1483 = vmatmul.mubr.bf16.gmra.mrb[0].mxu0 %v1439
      %v1484 = vpop.f32.mrb[0].mxu0
      %v1485 = vadd.f32 %v1424, %v1484
      %v1486 = vpop.f32.mrb[0].mxu0
      %v1487 = vpop.f32.mrb[0].mxu0
      %v1488 = vadd.f32 %v1424, %v1487
      %v1489 = vpop.f32.mrb[0].mxu0
      %1490 = vmatprep.mubr.bf16.mxu0 0
      %1491 = vmatmul.mubr.bf16.gmra.mrb[0].mxu0 %v1442
      %v1492 = vpop.f32.mrb[0].mxu0
      %v1493 = vadd.f32 %v1424, %v1492
      %v1494 = vpop.f32.mrb[0].mxu0
      %v1495 = vpop.f32.mrb[0].mxu0
      %v1496 = vadd.f32 %v1424, %v1495
      %v1497 = vpop.f32.mrb[0].mxu0
      %1498 = vmatprep.mubr.bf16.mxu0 0
      %1499 = vmatmul.mubr.bf16.gmra.mrb[0].mxu0 %v1445
      %v1500 = vpop.f32.mrb[0].mxu0
      %v1501 = vadd.f32 %v1424, %v1500
      %v1502 = vpop.f32.mrb[0].mxu0
      %v1503 = vpop.f32.mrb[0].mxu0
      %v1504 = vadd.f32 %v1424, %v1503
      %v1505 = vpop.f32.mrb[0].mxu0
      %1506 = vmatprep.mubr.bf16.mxu0 0
      %1507 = vmatmul.mubr.bf16.gmra.mrb[0].mxu0 %v1448
      %v1508 = vpop.f32.mrb[0].mxu0
      %v1509 = vadd.f32 %v1424, %v1508
      %v1510 = vpop.f32.mrb[0].mxu0
      %v1511 = vpop.f32.mrb[0].mxu0
      %v1512 = vadd.f32 %v1424, %v1511
      %v1513 = vpop.f32.mrb[0].mxu0
      %1514 = vdwg.mxu0
      %v1515 = vadd.f32 %v791, %v1485
      %v1516 = vadd.f32 %v794, %v1488
      %v1517 = vadd.f32 %v799, %v1493
      %v1518 = vadd.f32 %v802, %v1496
      %v1519 = vadd.f32 %v807, %v1501
      %v1520 = vadd.f32 %v810, %v1504
      %v1521 = vadd.f32 %v815, %v1509
      %v1522 = vadd.f32 %v818, %v1512
      %v1523 = vmax.f32 %v1515, 0.0
      %v1524 = vmax.f32 %v1516, 0.0
      %v1525 = vmax.f32 %v1517, 0.0
      %v1526 = vmax.f32 %v1518, 0.0
      %v1527 = vmax.f32 %v1519, 0.0
      %v1528 = vmax.f32 %v1520, 0.0
      %v1529 = vmax.f32 %v1521, 0.0
      %v1530 = vmax.f32 %v1522, 0.0
      %1531 = vst.msk [vmem:[%s828 + $0x1] sm:$0xff] %vm821, %v1523
      %1532 = vst.msk [vmem:[%s828 + $0x11] sm:$0xff] %vm821, %v1524
      %1533 = vst.msk [vmem:[%s828 + $0x21] sm:$0xff] %vm821, %v1525
      %1534 = vst.msk [vmem:[%s828 + $0x31] sm:$0xff] %vm821, %v1526
      %1535 = vst.msk [vmem:[%s828 + $0x41] sm:$0xff] %vm821, %v1527
      %1536 = vst.msk [vmem:[%s828 + $0x51] sm:$0xff] %vm821, %v1528
      %1537 = vst.msk [vmem:[%s828 + $0x61] sm:$0xff] %vm821, %v1529
      %1538 = vst.msk [vmem:[%s828 + $0x71] sm:$0xff] %vm821, %v1530
      %v1539 = vld [vmem:[#allocation4] sm:$0xff]
      %v1540 = vld [vmem:[#allocation4 + $0x10] sm:$0xff]
      %v1541 = vld [vmem:[#allocation4 + $0x20] sm:$0xff]
      %v1542 = vld [vmem:[#allocation4 + $0x30] sm:$0xff]
      %v1543 = vld [vmem:[#allocation4 + $0x40] sm:$0xff]
      %v1544 = vld [vmem:[#allocation4 + $0x50] sm:$0xff]
      %v1545 = vld [vmem:[#allocation4 + $0x60] sm:$0xff]
      %v1546 = vld [vmem:[#allocation4 + $0x70] sm:$0xff]
      %v1547 = vpack.c.bf16 %v1540, %v1539
      %v1548 = vpack.c.bf16 %v1542, %v1541
      %v1549 = vpack.c.bf16 %v1544, %v1543
      %v1550 = vpack.c.bf16 %v1546, %v1545
      %1551 = vst.msk [vmem:[#allocation5] sm:$0xff] %vm821, %v1547
      %1552 = vst.msk [vmem:[#allocation5 + $0x18] sm:$0xff] %vm821, %v1548
      %1553 = vst.msk [vmem:[#allocation5 + $0x30] sm:$0xff] %vm821, %v1549
      %1554 = vst.msk [vmem:[#allocation5 + $0x48] sm:$0xff] %vm821, %v1550
      %v1555 = vld [vmem:[#allocation4 + $0x1] sm:$0xff]
      %v1556 = vld [vmem:[#allocation4 + $0x11] sm:$0xff]
      %v1557 = vld [vmem:[#allocation4 + $0x21] sm:$0xff]
      %v1558 = vld [vmem:[#allocation4 + $0x31] sm:$0xff]
      %v1559 = vld [vmem:[#allocation4 + $0x41] sm:$0xff]
      %v1560 = vld [vmem:[#allocation4 + $0x51] sm:$0xff]
      %v1561 = vld [vmem:[#allocation4 + $0x61] sm:$0xff]
      %v1562 = vld [vmem:[#allocation4 + $0x71] sm:$0xff]
      %v1563 = vpack.c.bf16 %v1556, %v1555
      %v1564 = vpack.c.bf16 %v1558, %v1557
      %v1565 = vpack.c.bf16 %v1560, %v1559
      %v1566 = vpack.c.bf16 %v1562, %v1561
      %1571 = vrot.lane.b32.xlu0 %v1563, 32
      %v1572 = vpop.permute.xlu0 %1571
      %1573 = vrot.lane.b32.xlu0 %v1564, 32
      %v1574 = vpop.permute.xlu0 %1573
      %1575 = vrot.lane.b32.xlu0 %v1565, 32
      %v1576 = vpop.permute.xlu0 %1575
      %1577 = vrot.lane.b32.xlu0 %v1566, 32
      %v1578 = vpop.permute.xlu0 %1577
      %1583 = vst.msk [vmem:[#allocation5] sm:$0xff] %vm898, %v1572
      %1584 = vst.msk [vmem:[#allocation5 + $0x18] sm:$0xff] %vm898, %v1574
      %1585 = vst.msk [vmem:[#allocation5 + $0x30] sm:$0xff] %vm898, %v1576
      %1586 = vst.msk [vmem:[#allocation5 + $0x48] sm:$0xff] %vm898, %v1578
      %v1587 = vld [vmem:[#allocation4 + $0x2] sm:$0xff]
      %v1588 = vld [vmem:[#allocation4 + $0x12] sm:$0xff]
      %v1589 = vld [vmem:[#allocation4 + $0x22] sm:$0xff]
      %v1590 = vld [vmem:[#allocation4 + $0x32] sm:$0xff]
      %v1591 = vld [vmem:[#allocation4 + $0x42] sm:$0xff]
      %v1592 = vld [vmem:[#allocation4 + $0x52] sm:$0xff]
      %v1593 = vld [vmem:[#allocation4 + $0x62] sm:$0xff]
      %v1594 = vld [vmem:[#allocation4 + $0x72] sm:$0xff]
      %v1595 = vpack.c.bf16 %v1588, %v1587
      %v1596 = vpack.c.bf16 %v1590, %v1589
      %v1597 = vpack.c.bf16 %v1592, %v1591
      %v1598 = vpack.c.bf16 %v1594, %v1593
      %1603 = vrot.lane.b32.xlu0 %v1595, 64
      %v1604 = vpop.permute.xlu0 %1603
      %1605 = vrot.lane.b32.xlu0 %v1596, 64
      %v1606 = vpop.permute.xlu0 %1605
      %1607 = vrot.lane.b32.xlu0 %v1597, 64
      %v1608 = vpop.permute.xlu0 %1607
      %1609 = vrot.lane.b32.xlu0 %v1598, 64
      %v1610 = vpop.permute.xlu0 %1609
      %1615 = vst.msk [vmem:[#allocation5] sm:$0xff] %vm931, %v1604
      %1616 = vst.msk [vmem:[#allocation5 + $0x18] sm:$0xff] %vm931, %v1606
      %1617 = vst.msk [vmem:[#allocation5 + $0x30] sm:$0xff] %vm931, %v1608
      %1618 = vst.msk [vmem:[#allocation5 + $0x48] sm:$0xff] %vm931, %v1610
      %v1619 = vld [vmem:[%s828] sm:$0xff]
      %v1620 = vld [vmem:[%s828 + $0x10] sm:$0xff]
      %v1621 = vld [vmem:[%s828 + $0x20] sm:$0xff]
      %v1622 = vld [vmem:[%s828 + $0x30] sm:$0xff]
      %v1623 = vld [vmem:[%s828 + $0x40] sm:$0xff]
      %v1624 = vld [vmem:[%s828 + $0x50] sm:$0xff]
      %v1625 = vld [vmem:[%s828 + $0x60] sm:$0xff]
      %v1626 = vld [vmem:[%s828 + $0x70] sm:$0xff]
      %v1627 = vpack.c.bf16 %v1620, %v1619
      %v1628 = vpack.c.bf16 %v1622, %v1621
      %v1629 = vpack.c.bf16 %v1624, %v1623
      %v1630 = vpack.c.bf16 %v1626, %v1625
      %1635 = vrot.lane.b32.xlu0 %v1627, 96
      %v1636 = vpop.permute.xlu0 %1635
      %1637 = vrot.lane.b32.xlu0 %v1628, 96
      %v1638 = vpop.permute.xlu0 %1637
      %1639 = vrot.lane.b32.xlu0 %v1629, 96
      %v1640 = vpop.permute.xlu0 %1639
      %1641 = vrot.lane.b32.xlu0 %v1630, 96
      %v1642 = vpop.permute.xlu0 %1641
      %1647 = vst.msk [vmem:[#allocation5] sm:$0xff] %vm964, %v1636
      %1648 = vst.msk [vmem:[#allocation5 + $0x18] sm:$0xff] %vm964, %v1638
      %1649 = vst.msk [vmem:[#allocation5 + $0x30] sm:$0xff] %vm964, %v1640
      %1650 = vst.msk [vmem:[#allocation5 + $0x48] sm:$0xff] %vm964, %v1642
      %v1651 = vld [vmem:[%s828 + $0x1] sm:$0xff]
      %v1652 = vld [vmem:[%s828 + $0x11] sm:$0xff]
      %v1653 = vld [vmem:[%s828 + $0x21] sm:$0xff]
      %v1654 = vld [vmem:[%s828 + $0x31] sm:$0xff]
      %v1655 = vld [vmem:[%s828 + $0x41] sm:$0xff]
      %v1656 = vld [vmem:[%s828 + $0x51] sm:$0xff]
      %v1657 = vld [vmem:[%s828 + $0x61] sm:$0xff]
      %v1658 = vld [vmem:[%s828 + $0x71] sm:$0xff]
      %v1659 = vpack.c.bf16 %v1652, %v1651
      %v1660 = vpack.c.bf16 %v1654, %v1653
      %v1661 = vpack.c.bf16 %v1656, %v1655
      %v1662 = vpack.c.bf16 %v1658, %v1657
      %1663 = vst.msk [vmem:[#allocation5 + $0x8] sm:$0xff] %vm821, %v1659
      %1664 = vst.msk [vmem:[#allocation5 + $0x20] sm:$0xff] %vm821, %v1660
      %1665 = vst.msk [vmem:[#allocation5 + $0x38] sm:$0xff] %vm821, %v1661
      %1666 = vst.msk [vmem:[#allocation5 + $0x50] sm:$0xff] %vm821, %v1662
      %v1667 = vld [vmem:[%s828 + $0x2] sm:$0xff]
      %v1668 = vld [vmem:[%s828 + $0x12] sm:$0xff]
      %v1669 = vld [vmem:[%s828 + $0x22] sm:$0xff]
      %v1670 = vld [vmem:[%s828 + $0x32] sm:$0xff]
      %v1671 = vld [vmem:[%s828 + $0x42] sm:$0xff]
      %v1672 = vld [vmem:[%s828 + $0x52] sm:$0xff]
      %v1673 = vld [vmem:[%s828 + $0x62] sm:$0xff]
      %v1674 = vld [vmem:[%s828 + $0x72] sm:$0xff]
      %v1675 = vpack.c.bf16 %v1668, %v1667
      %v1676 = vpack.c.bf16 %v1670, %v1669
      %v1677 = vpack.c.bf16 %v1672, %v1671
      %v1678 = vpack.c.bf16 %v1674, %v1673
      %1683 = vrot.lane.b32.xlu0 %v1675, 32
      %v1684 = vpop.permute.xlu0 %1683
      %1685 = vrot.lane.b32.xlu0 %v1676, 32
      %v1686 = vpop.permute.xlu0 %1685
      %1687 = vrot.lane.b32.xlu0 %v1677, 32
      %v1688 = vpop.permute.xlu0 %1687
      %1689 = vrot.lane.b32.xlu0 %v1678, 32
      %v1690 = vpop.permute.xlu0 %1689
      %1695 = vst.msk [vmem:[#allocation5 + $0x8] sm:$0xff] %vm898, %v1684
      %1696 = vst.msk [vmem:[#allocation5 + $0x20] sm:$0xff] %vm898, %v1686
      %1697 = vst.msk [vmem:[#allocation5 + $0x38] sm:$0xff] %vm898, %v1688
      %1698 = vst.msk [vmem:[#allocation5 + $0x50] sm:$0xff] %vm898, %v1690
      %v1699 = vld [vmem:[%s1017] sm:$0xff]
      %v1700 = vld [vmem:[%s1017 + $0x10] sm:$0xff]
      %v1701 = vld [vmem:[%s1017 + $0x20] sm:$0xff]
      %v1702 = vld [vmem:[%s1017 + $0x30] sm:$0xff]
      %v1703 = vld [vmem:[%s1017 + $0x40] sm:$0xff]
      %v1704 = vld [vmem:[%s1017 + $0x50] sm:$0xff]
      %v1705 = vld [vmem:[%s1017 + $0x60] sm:$0xff]
      %v1706 = vld [vmem:[%s1017 + $0x70] sm:$0xff]
      %v1707 = vpack.c.bf16 %v1700, %v1699
      %v1708 = vpack.c.bf16 %v1702, %v1701
      %v1709 = vpack.c.bf16 %v1704, %v1703
      %v1710 = vpack.c.bf16 %v1706, %v1705
      %1715 = vrot.lane.b32.xlu0 %v1707, 64
      %v1716 = vpop.permute.xlu0 %1715
      %1717 = vrot.lane.b32.xlu0 %v1708, 64
      %v1718 = vpop.permute.xlu0 %1717
      %1719 = vrot.lane.b32.xlu0 %v1709, 64
      %v1720 = vpop.permute.xlu0 %1719
      %1721 = vrot.lane.b32.xlu0 %v1710, 64
      %v1722 = vpop.permute.xlu0 %1721
      %1727 = vst.msk [vmem:[#allocation5 + $0x8] sm:$0xff] %vm931, %v1716
      %1728 = vst.msk [vmem:[#allocation5 + $0x20] sm:$0xff] %vm931, %v1718
      %1729 = vst.msk [vmem:[#allocation5 + $0x38] sm:$0xff] %vm931, %v1720
      %1730 = vst.msk [vmem:[#allocation5 + $0x50] sm:$0xff] %vm931, %v1722
      %v1731 = vld [vmem:[%s1017 + $0x1] sm:$0xff]
      %v1732 = vld [vmem:[%s1017 + $0x11] sm:$0xff]
      %v1733 = vld [vmem:[%s1017 + $0x21] sm:$0xff]
      %v1734 = vld [vmem:[%s1017 + $0x31] sm:$0xff]
      %v1735 = vld [vmem:[%s1017 + $0x41] sm:$0xff]
      %v1736 = vld [vmem:[%s1017 + $0x51] sm:$0xff]
      %v1737 = vld [vmem:[%s1017 + $0x61] sm:$0xff]
      %v1738 = vld [vmem:[%s1017 + $0x71] sm:$0xff]
      %v1739 = vpack.c.bf16 %v1732, %v1731
      %v1740 = vpack.c.bf16 %v1734, %v1733
      %v1741 = vpack.c.bf16 %v1736, %v1735
      %v1742 = vpack.c.bf16 %v1738, %v1737
      %1747 = vrot.lane.b32.xlu0 %v1739, 96
      %v1748 = vpop.permute.xlu0 %1747
      %1749 = vrot.lane.b32.xlu0 %v1740, 96
      %v1750 = vpop.permute.xlu0 %1749
      %1751 = vrot.lane.b32.xlu0 %v1741, 96
      %v1752 = vpop.permute.xlu0 %1751
      %1753 = vrot.lane.b32.xlu0 %v1742, 96
      %v1754 = vpop.permute.xlu0 %1753
      %1759 = vst.msk [vmem:[#allocation5 + $0x8] sm:$0xff] %vm964, %v1748
      %1760 = vst.msk [vmem:[#allocation5 + $0x20] sm:$0xff] %vm964, %v1750
      %1761 = vst.msk [vmem:[#allocation5 + $0x38] sm:$0xff] %vm964, %v1752
      %1762 = vst.msk [vmem:[#allocation5 + $0x50] sm:$0xff] %vm964, %v1754
      %v1763 = vld [vmem:[%s1017 + $0x2] sm:$0xff]
      %v1764 = vld [vmem:[%s1017 + $0x12] sm:$0xff]
      %v1765 = vld [vmem:[%s1017 + $0x22] sm:$0xff]
      %v1766 = vld [vmem:[%s1017 + $0x32] sm:$0xff]
      %v1767 = vld [vmem:[%s1017 + $0x42] sm:$0xff]
      %v1768 = vld [vmem:[%s1017 + $0x52] sm:$0xff]
      %v1769 = vld [vmem:[%s1017 + $0x62] sm:$0xff]
      %v1770 = vld [vmem:[%s1017 + $0x72] sm:$0xff]
      %v1771 = vpack.c.bf16 %v1764, %v1763
      %v1772 = vpack.c.bf16 %v1766, %v1765
      %v1773 = vpack.c.bf16 %v1768, %v1767
      %v1774 = vpack.c.bf16 %v1770, %v1769
      %1775 = vst.msk [vmem:[#allocation5 + $0x10] sm:$0xff] %vm821, %v1771
      %1776 = vst.msk [vmem:[#allocation5 + $0x28] sm:$0xff] %vm821, %v1772
      %1777 = vst.msk [vmem:[#allocation5 + $0x40] sm:$0xff] %vm821, %v1773
      %1778 = vst.msk [vmem:[#allocation5 + $0x58] sm:$0xff] %vm821, %v1774
      %v1779 = vld [vmem:[#allocation5] sm:$0xff]
      %v1780 = vld [vmem:[#allocation5 + $0x8] sm:$0xff]
      %v1781 = vld [vmem:[#allocation5 + $0x10] sm:$0xff]
      %v1782 = vld [vmem:[#allocation5 + $0x18] sm:$0xff]
      %v1783 = vld [vmem:[#allocation5 + $0x20] sm:$0xff]
      %v1784 = vld [vmem:[#allocation5 + $0x28] sm:$0xff]
      %v1785 = vld [vmem:[#allocation5 + $0x30] sm:$0xff]
      %v1786 = vld [vmem:[#allocation5 + $0x38] sm:$0xff]
      %v1787 = vld [vmem:[#allocation5 + $0x40] sm:$0xff]
      %v1788 = vld [vmem:[#allocation5 + $0x48] sm:$0xff]
      %v1789 = vld [vmem:[#allocation5 + $0x50] sm:$0xff]
      %v1790 = vld [vmem:[#allocation5 + $0x58] sm:$0xff]
      %v1791 = vld [vmem:[%s7] sm:$0xf]
      %v1792 = vld [vmem:[%s7 + $0x4] sm:$0xf]
      %v1793 = vld [vmem:[%s7 + $0x8] sm:$0xf]
      %v1794 = vld [vmem:[%s7 + $0xc] sm:$0xf]
      %v1795 = vld [vmem:[%s7 + $0x10] sm:$0xf]
      %v1796 = vld [vmem:[%s7 + $0x14] sm:$0xf]
      %v1797 = vld [vmem:[%s7 + $0x18] sm:$0xf]
      %v1798 = vld [vmem:[%s7 + $0x1c] sm:$0xf]
      %v1799 = vld [vmem:[%s7 + $0x20] sm:$0xf]
      %v1800 = vld [vmem:[%s7 + $0x24] sm:$0xf]
      %v1801 = vld [vmem:[%s7 + $0x28] sm:$0xf]
      %v1802 = vld [vmem:[%s7 + $0x2c] sm:$0xf]
      %v1803 = vld [vmem:[%s7 + $0x30] sm:$0xf]
      %v1804 = vld [vmem:[%s7 + $0x34] sm:$0xf]
      %v1805 = vld [vmem:[%s7 + $0x38] sm:$0xf]
      %v1806 = vld [vmem:[%s7 + $0x3c] sm:$0xf]
      %v1807 = vld [vmem:[%s7 + $0x40] sm:$0xf]
      %v1808 = vld [vmem:[%s7 + $0x44] sm:$0xf]
      %v1809 = vld [vmem:[%s7 + $0x48] sm:$0xf]
      %v1810 = vld [vmem:[%s7 + $0x4c] sm:$0xf]
      %v1811 = vld [vmem:[%s7 + $0x50] sm:$0xf]
      %v1812 = vld [vmem:[%s7 + $0x54] sm:$0xf]
      %v1813 = vld [vmem:[%s7 + $0x58] sm:$0xf]
      %v1814 = vld [vmem:[%s7 + $0x5c] sm:$0xf]
      %v1815 = vld [vmem:[%s7 + $0x60] sm:$0xf]
      %v1816 = vld [vmem:[%s7 + $0x64] sm:$0xf]
      %v1817 = vld [vmem:[%s7 + $0x68] sm:$0xf]
      %v1818 = vld [vmem:[%s7 + $0x6c] sm:$0xf]
      %v1819 = vld [vmem:[%s7 + $0x70] sm:$0xf]
      %v1820 = vld [vmem:[%s7 + $0x74] sm:$0xf]
      %v1821 = vld [vmem:[%s7 + $0x78] sm:$0xf]
      %v1822 = vld [vmem:[%s7 + $0x7c] sm:$0xf]
      %v1823 = vld [vmem:[%s7 + $0x80] sm:$0xf]
      %v1824 = vld [vmem:[%s7 + $0x84] sm:$0xf]
      %v1825 = vld [vmem:[%s7 + $0x88] sm:$0xf]
      %v1826 = vld [vmem:[%s7 + $0x8c] sm:$0xf]
      %v1827 = vld [vmem:[%s8] sm:$0x1]
      %v1829 = vlaneseq
      %v1830 = vshrl.u32 %v1829, 7
      %v1831 = vsub.s32 0, %v1830
      %v1832 = vrot.slane %v1827, %v1831
      %v1870 = vunpack.c.l.b16 %v1791
      %v1871 = vunpack.c.l.b16 %v1792
      %v1872 = vunpack.c.l.b16 %v1793
      %v1873 = vunpack.c.l.b16 %v1794
      %v1874 = vunpack.c.l.b16 %v1795
      %v1875 = vunpack.c.l.b16 %v1796
      %v1876 = vunpack.c.l.b16 %v1797
      %v1877 = vunpack.c.l.b16 %v1798
      %v1878 = vunpack.c.l.b16 %v1799
      %v1879 = vunpack.c.l.b16 %v1800
      %v1880 = vunpack.c.l.b16 %v1801
      %v1881 = vunpack.c.l.b16 %v1802
      %v1882 = vunpack.c.l.b16 %v1803
      %v1883 = vunpack.c.l.b16 %v1804
      %v1884 = vunpack.c.l.b16 %v1805
      %v1885 = vunpack.c.l.b16 %v1806
      %v1886 = vunpack.c.l.b16 %v1807
      %v1887 = vunpack.c.l.b16 %v1808
      %v1888 = vunpack.c.l.b16 %v1809
      %v1889 = vunpack.c.l.b16 %v1810
      %v1890 = vunpack.c.l.b16 %v1811
      %v1891 = vunpack.c.l.b16 %v1812
      %v1892 = vunpack.c.l.b16 %v1813
      %v1893 = vunpack.c.l.b16 %v1814
      %v1894 = vunpack.c.l.b16 %v1815
      %v1895 = vunpack.c.l.b16 %v1816
      %v1896 = vunpack.c.l.b16 %v1817
      %v1897 = vunpack.c.l.b16 %v1818
      %v1898 = vunpack.c.l.b16 %v1819
      %v1899 = vunpack.c.l.b16 %v1820
      %v1900 = vunpack.c.l.b16 %v1821
      %v1901 = vunpack.c.l.b16 %v1822
      %v1902 = vunpack.c.l.b16 %v1823
      %v1903 = vunpack.c.l.b16 %v1824
      %v1904 = vunpack.c.l.b16 %v1825
      %v1905 = vunpack.c.l.b16 %v1826
      %v1906 = vpack.c.b16 %v1871, %v1870
      %v1907 = vpack.c.b16 %v1873, %v1872
      %v1908 = vpack.c.b16 %v1875, %v1874
      %v1909 = vpack.c.b16 %v1877, %v1876
      %v1910 = vpack.c.b16 %v1879, %v1878
      %v1911 = vpack.c.b16 %v1881, %v1880
      %v1912 = vpack.c.b16 %v1883, %v1882
      %v1913 = vpack.c.b16 %v1885, %v1884
      %v1914 = vpack.c.b16 %v1887, %v1886
      %v1915 = vpack.c.b16 %v1889, %v1888
      %v1916 = vpack.c.b16 %v1891, %v1890
      %v1917 = vpack.c.b16 %v1893, %v1892
      %v1918 = vpack.c.b16 %v1895, %v1894
      %v1919 = vpack.c.b16 %v1897, %v1896
      %v1920 = vpack.c.b16 %v1899, %v1898
      %v1921 = vpack.c.b16 %v1901, %v1900
      %v1922 = vpack.c.b16 %v1903, %v1902
      %v1923 = vpack.c.b16 %v1905, %v1904
      %v1943 = vsel %vm821, %v1781, 0
      %v1946 = vsel %vm821, %v1784, 0
      %v1949 = vsel %vm821, %v1787, 0
      %v1952 = vsel %vm821, %v1790, 0
      %1954 = vmatprep.subr.bf16.mxu0 0
      %1955 = vmatpush1.bf16.msra.mxu0 %v1906
      %1956 = vmatprep.subr.bf16.mxu0 0
      %1957 = vmatpush1.bf16.msra.mxu0 %v1907
      %1958 = vmatprep.subr.bf16.mxu0 0
      %1959 = vmatpush1.bf16.msra.mxu0 %v1908
      %1960 = vmatprep.subr.bf16.mxu0 0
      %1961 = vmatpush1.bf16.msra.mxu0 %v1909
      %1962 = vmatprep.subr.bf16.mxu0 0
      %1963 = vmatpush1.bf16.msra.mxu0 %v1910
      %1964 = vmatprep.subr.bf16.mxu0 0
      %1965 = vmatpush1.bf16.msra.mxu0 %v1911
      %1966 = vmatprep.subr.bf16.mxu0 0
      %1967 = vmatpush1.bf16.msra.mxu0 %v1912
      %1968 = vmatprep.subr.bf16.mxu0 0
      %1969 = vmatpush1.bf16.msra.mxu0 %v1913
      %1970 = vmatprep.subr.bf16.mxu0 0
      %1971 = vmatpush1.bf16.msra.mxu0 %v1914
      %1972 = vmatprep.subr.bf16.mxu0 0
      %1973 = vmatpush1.bf16.msra.mxu0 %v1915
      %1974 = vmatprep.subr.bf16.mxu0 0
      %1975 = vmatpush1.bf16.msra.mxu0 %v1916
      %1976 = vmatprep.subr.bf16.mxu0 0
      %1977 = vmatpush1.bf16.msra.mxu0 %v1917
      %1978 = vmatprep.subr.bf16.mxu0 0
      %1979 = vmatpush1.bf16.msra.mxu0 %v1918
      %1980 = vmatprep.subr.bf16.mxu0 0
      %1981 = vmatpush1.bf16.msra.mxu0 %v1919
      %1982 = vmatprep.subr.bf16.mxu0 0
      %1983 = vmatpush1.bf16.msra.mxu0 %v1920
      %1984 = vmatprep.subr.bf16.mxu0 0
      %1985 = vmatpush1.bf16.msra.mxu0 %v1921
      %1986 = vmatprep.mubr.bf16.mxu0 %v1780
      %1987 = vmatmul.mubr.bf16.gmra.mrb[0].mxu0 %v1779
      %v1988 = vpop.f32.mrb[0].mxu0
      %v1989 = vadd.f32 %v1832, %v1988
      %v1990 = vpop.f32.mrb[0].mxu0
      %v1991 = vpop.f32.mrb[0].mxu0
      %v1992 = vadd.f32 %v1832, %v1991
      %v1993 = vpop.f32.mrb[0].mxu0
      %1994 = vmatprep.mubr.bf16.mxu0 %v1783
      %1995 = vmatmul.mubr.bf16.gmra.mrb[0].mxu0 %v1782
      %v1996 = vpop.f32.mrb[0].mxu0
      %v1997 = vadd.f32 %v1832, %v1996
      %v1998 = vpop.f32.mrb[0].mxu0
      %v1999 = vpop.f32.mrb[0].mxu0
      %v2000 = vadd.f32 %v1832, %v1999
      %v2001 = vpop.f32.mrb[0].mxu0
      %2002 = vmatprep.mubr.bf16.mxu0 %v1786
      %2003 = vmatmul.mubr.bf16.gmra.mrb[0].mxu0 %v1785
      %v2004 = vpop.f32.mrb[0].mxu0
      %v2005 = vadd.f32 %v1832, %v2004
      %v2006 = vpop.f32.mrb[0].mxu0
      %v2007 = vpop.f32.mrb[0].mxu0
      %v2008 = vadd.f32 %v1832, %v2007
      %v2009 = vpop.f32.mrb[0].mxu0
      %2010 = vmatprep.mubr.bf16.mxu0 %v1789
      %2011 = vmatmul.mubr.bf16.gmra.mrb[0].mxu0 %v1788
      %v2012 = vpop.f32.mrb[0].mxu0
      %v2013 = vadd.f32 %v1832, %v2012
      %v2014 = vpop.f32.mrb[0].mxu0
      %v2015 = vpop.f32.mrb[0].mxu0
      %v2016 = vadd.f32 %v1832, %v2015
      %v2017 = vpop.f32.mrb[0].mxu0
      %2018 = vdwg.mxu0
      %2019 = vmatprep.subr.bf16.mxu0 0
      %2020 = vmatpush1.bf16.msra.mxu0 %v1922
      %2021 = vmatprep.subr.bf16.mxu0 0
      %2022 = vmatpush1.bf16.msra.mxu0 %v1923
      %2023 = vmatprep.subr.bf16.mxu0 0
      %2024 = vmatpush1.bf16.msra.mxu0 0
      %2025 = vmatprep.subr.bf16.mxu0 0
      %2026 = vmatpush1.bf16.msra.mxu0 0
      %2027 = vmatprep.subr.bf16.mxu0 0
      %2028 = vmatpush1.bf16.msra.mxu0 0
      %2029 = vmatprep.subr.bf16.mxu0 0
      %2030 = vmatpush1.bf16.msra.mxu0 0
      %2031 = vmatprep.subr.bf16.mxu0 0
      %2032 = vmatpush1.bf16.msra.mxu0 0
      %2033 = vmatprep.subr.bf16.mxu0 0
      %2034 = vmatpush1.bf16.msra.mxu0 0
      %2035 = vmatprep.subr.bf16.mxu0 0
      %2036 = vmatpush1.bf16.msra.mxu0 0
      %2037 = vmatprep.subr.bf16.mxu0 0
      %2038 = vmatpush1.bf16.msra.mxu0 0
      %2039 = vmatprep.subr.bf16.mxu0 0
      %2040 = vmatpush1.bf16.msra.mxu0 0
      %2041 = vmatprep.subr.bf16.mxu0 0
      %2042 = vmatpush1.bf16.msra.mxu0 0
      %2043 = vmatprep.subr.bf16.mxu0 0
      %2044 = vmatpush1.bf16.msra.mxu0 0
      %2045 = vmatprep.subr.bf16.mxu0 0
      %2046 = vmatpush1.bf16.msra.mxu0 0
      %2047 = vmatprep.subr.bf16.mxu0 0
      %2048 = vmatpush1.bf16.msra.mxu0 0
      %2049 = vmatprep.subr.bf16.mxu0 0
      %2050 = vmatpush1.bf16.msra.mxu0 0
      %2051 = vmatprep.mubr.bf16.mxu0 0
      %2052 = vmatmul.mubr.bf16.gmra.mrb[0].mxu0 %v1943
      %v2053 = vpop.f32.mrb[0].mxu0
      %v2054 = vadd.f32 %v1989, %v2053
      %v2055 = vpop.f32.mrb[0].mxu0
      %v2056 = vpop.f32.mrb[0].mxu0
      %v2057 = vadd.f32 %v1992, %v2056
      %v2058 = vpop.f32.mrb[0].mxu0
      %2059 = vmatprep.mubr.bf16.mxu0 0
      %2060 = vmatmul.mubr.bf16.gmra.mrb[0].mxu0 %v1946
      %v2061 = vpop.f32.mrb[0].mxu0
      %v2062 = vadd.f32 %v1997, %v2061
      %v2063 = vpop.f32.mrb[0].mxu0
      %v2064 = vpop.f32.mrb[0].mxu0
      %v2065 = vadd.f32 %v2000, %v2064
      %v2066 = vpop.f32.mrb[0].mxu0
      %2067 = vmatprep.mubr.bf16.mxu0 0
      %2068 = vmatmul.mubr.bf16.gmra.mrb[0].mxu0 %v1949
      %v2069 = vpop.f32.mrb[0].mxu0
      %v2070 = vadd.f32 %v2005, %v2069
      %v2071 = vpop.f32.mrb[0].mxu0
      %v2072 = vpop.f32.mrb[0].mxu0
      %v2073 = vadd.f32 %v2008, %v2072
      %v2074 = vpop.f32.mrb[0].mxu0
      %2075 = vmatprep.mubr.bf16.mxu0 0
      %2076 = vmatmul.mubr.bf16.gmra.mrb[0].mxu0 %v1952
      %v2077 = vpop.f32.mrb[0].mxu0
      %v2078 = vadd.f32 %v2013, %v2077
      %v2079 = vpop.f32.mrb[0].mxu0
      %v2080 = vpop.f32.mrb[0].mxu0
      %v2081 = vadd.f32 %v2016, %v2080
      %v2082 = vpop.f32.mrb[0].mxu0
      %2083 = vdwg.mxu0
      %v2084 = vmax.f32 %v2054, 0.0
      %v2085 = vmax.f32 %v2057, 0.0
      %v2086 = vmax.f32 %v2062, 0.0
      %v2087 = vmax.f32 %v2065, 0.0
      %v2088 = vmax.f32 %v2070, 0.0
      %v2089 = vmax.f32 %v2073, 0.0
      %v2090 = vmax.f32 %v2078, 0.0
      %v2091 = vmax.f32 %v2081, 0.0
      %v2092 = vpack.c.bf16 %v2085, %v2084
      %v2093 = vpack.c.bf16 %v2087, %v2086
      %v2094 = vpack.c.bf16 %v2089, %v2088
      %v2095 = vpack.c.bf16 %v2091, %v2090
      %v2096 = vld [vmem:[%s9] sm:$0xf]
      %v2097 = vld [vmem:[%s9 + $0x4] sm:$0xf]
      %v2098 = vld [vmem:[%s9 + $0x8] sm:$0xf]
      %v2099 = vld [vmem:[%s9 + $0xc] sm:$0xf]
      %v2100 = vld [vmem:[%s10] sm:$0x1]
      %v2102 = vlaneseq
      %v2103 = vshrl.u32 %v2102, 7
      %v2104 = vsub.s32 0, %v2103
      %v2105 = vrot.slane %v2100, %v2104
      %v2111 = vunpack.c.l.b16 %v2096
      %v2112 = vunpack.c.l.b16 %v2097
      %v2113 = vunpack.c.l.b16 %v2098
      %v2114 = vunpack.c.l.b16 %v2099
      %v2115 = vpack.c.b16 %v2112, %v2111
      %v2116 = vpack.c.b16 %v2114, %v2113
      %v2120 = vsel %vm821, %v2092, 0
      %v2123 = vsel %vm821, %v2093, 0
      %v2126 = vsel %vm821, %v2094, 0
      %v2129 = vsel %vm821, %v2095, 0
      %2131 = vmatprep.subr.bf16.mxu0 0
      %2132 = vmatpush1.bf16.msra.mxu0 %v2115
      %2133 = vmatprep.subr.bf16.mxu0 0
      %2134 = vmatpush1.bf16.msra.mxu0 %v2116
      %2135 = vmatprep.subr.bf16.mxu0 0
      %2136 = vmatpush1.bf16.msra.mxu0 0
      %2137 = vmatprep.subr.bf16.mxu0 0
      %2138 = vmatpush1.bf16.msra.mxu0 0
      %2139 = vmatprep.subr.bf16.mxu0 0
      %2140 = vmatpush1.bf16.msra.mxu0 0
      %2141 = vmatprep.subr.bf16.mxu0 0
      %2142 = vmatpush1.bf16.msra.mxu0 0
      %2143 = vmatprep.subr.bf16.mxu0 0
      %2144 = vmatpush1.bf16.msra.mxu0 0
      %2145 = vmatprep.subr.bf16.mxu0 0
      %2146 = vmatpush1.bf16.msra.mxu0 0
      %2147 = vmatprep.subr.bf16.mxu0 0
      %2148 = vmatpush1.bf16.msra.mxu0 0
      %2149 = vmatprep.subr.bf16.mxu0 0
      %2150 = vmatpush1.bf16.msra.mxu0 0
      %2151 = vmatprep.subr.bf16.mxu0 0
      %2152 = vmatpush1.bf16.msra.mxu0 0
      %2153 = vmatprep.subr.bf16.mxu0 0
      %2154 = vmatpush1.bf16.msra.mxu0 0
      %2155 = vmatprep.subr.bf16.mxu0 0
      %2156 = vmatpush1.bf16.msra.mxu0 0
      %2157 = vmatprep.subr.bf16.mxu0 0
      %2158 = vmatpush1.bf16.msra.mxu0 0
      %2159 = vmatprep.subr.bf16.mxu0 0
      %2160 = vmatpush1.bf16.msra.mxu0 0
      %2161 = vmatprep.subr.bf16.mxu0 0
      %2162 = vmatpush1.bf16.msra.mxu0 0
      %2163 = vmatprep.mubr.bf16.mxu0 0
      %2164 = vmatmul.mubr.bf16.gmra.mrb[0].mxu0 %v2120
      %v2165 = vpop.f32.mrb[0].mxu0
      %v2166 = vadd.f32 %v2105, %v2165
      %v2167 = vpop.f32.mrb[0].mxu0
      %v2168 = vpop.f32.mrb[0].mxu0
      %v2169 = vadd.f32 %v2105, %v2168
      %v2170 = vpop.f32.mrb[0].mxu0
      %2171 = vmatprep.mubr.bf16.mxu0 0
      %2172 = vmatmul.mubr.bf16.gmra.mrb[0].mxu0 %v2123
      %v2173 = vpop.f32.mrb[0].mxu0
      %v2174 = vadd.f32 %v2105, %v2173
      %v2175 = vpop.f32.mrb[0].mxu0
      %v2176 = vpop.f32.mrb[0].mxu0
      %v2177 = vadd.f32 %v2105, %v2176
      %v2178 = vpop.f32.mrb[0].mxu0
      %2179 = vmatprep.mubr.bf16.mxu0 0
      %2180 = vmatmul.mubr.bf16.gmra.mrb[0].mxu0 %v2126
      %v2181 = vpop.f32.mrb[0].mxu0
      %v2182 = vadd.f32 %v2105, %v2181
      %v2183 = vpop.f32.mrb[0].mxu0
      %v2184 = vpop.f32.mrb[0].mxu0
      %v2185 = vadd.f32 %v2105, %v2184
      %v2186 = vpop.f32.mrb[0].mxu0
      %2187 = vmatprep.mubr.bf16.mxu0 0
      %2188 = vmatmul.mubr.bf16.gmra.mrb[0].mxu0 %v2129
      %v2189 = vpop.f32.mrb[0].mxu0
      %v2190 = vadd.f32 %v2105, %v2189
      %v2191 = vpop.f32.mrb[0].mxu0
      %v2192 = vpop.f32.mrb[0].mxu0
      %v2193 = vadd.f32 %v2105, %v2192
      %v2194 = vpop.f32.mrb[0].mxu0
      %2195 = vdwg.mxu0
      %v2196 = vadd.f32 %v1523, %v2166
      %v2197 = vadd.f32 %v1524, %v2169
      %v2198 = vadd.f32 %v1525, %v2174
      %v2199 = vadd.f32 %v1526, %v2177
      %v2200 = vadd.f32 %v1527, %v2182
      %v2201 = vadd.f32 %v1528, %v2185
      %v2202 = vadd.f32 %v1529, %v2190
      %v2203 = vadd.f32 %v1530, %v2193
      %v2204 = vmax.f32 %v2196, 0.0
      %v2205 = vmax.f32 %v2197, 0.0
      %v2206 = vmax.f32 %v2198, 0.0
      %v2207 = vmax.f32 %v2199, 0.0
      %v2208 = vmax.f32 %v2200, 0.0
      %v2209 = vmax.f32 %v2201, 0.0
      %v2210 = vmax.f32 %v2202, 0.0
      %v2211 = vmax.f32 %v2203, 0.0
      %2212 = vst.msk [vmem:[%s386] sm:$0xff] %vm821, %v2204
      %2213 = vst.msk [vmem:[%s386 + $0x8] sm:$0xff] %vm821, %v2205
      %2214 = vst.msk [vmem:[%s386 + $0x10] sm:$0xff] %vm821, %v2206
      %2215 = vst.msk [vmem:[%s386 + $0x18] sm:$0xff] %vm821, %v2207
      %2216 = vst.msk [vmem:[%s386 + $0x20] sm:$0xff] %vm821, %v2208
      %2217 = vst.msk [vmem:[%s386 + $0x28] sm:$0xff] %vm821, %v2209
      %2218 = vst.msk [vmem:[%s386 + $0x30] sm:$0xff] %vm821, %v2210
      %2219 = vst.msk [vmem:[%s386 + $0x38] sm:$0xff] %vm821, %v2211
      %p2220 = scmp.lt.s32.totalorder %s22, 1
      %s2221 = scalar_select %p2220, %s22, 1
      %s2222 = smul.addr %s2221, 8
      %s2223 = smul.addr %s2222, 8
      %s2224 = scalar_lea.vmem %s11, %s2223
      // Predicated region
      $region65: #{decoder_forward.3} parent=63 // pred_check
        %p2225 = pneg %p276
      $region66: #{decoder_forward.3} parent=63 // pred_check_branch
        %2227 = sbr.rel (%p2225) target = $region68
      $region67: #{decoder_forward.3} parent=63 // pred_region
        _
      $region68: #{decoder_forward.3} parent=63 // pred_fallthru
        _
    $region64: #{decoder_forward.3} parent=5 // pred_fallthru
      _
    %p2228 = scmp.le.s32.totalorder 2, %s17
    // Predicated region
    $region69: #{decoder_forward.3} parent=5 // pred_check
      %p2229 = pneg %p2228
    $region70: #{decoder_forward.3} parent=5 // pred_check_branch
      %2231 = sbr.rel (%p2229) target = $region72
    $region71: #{decoder_forward.3} parent=5 // pred_region
      %s2232 = ssub.s32 %s17, 2
      // Predicated region
      $region73: #{decoder_forward.3} parent=71 // pred_check
        %p2233 = pneg %p282
      $region74: #{decoder_forward.3} parent=71 // pred_check_branch
        %2235 = sbr.rel (%p2233) target = $region76
      $region75: #{decoder_forward.3} parent=71 // pred_region
        %p2236 = scmp.lt.s32.totalorder %s23, 1
        %s2237 = scalar_select %p2236, %s23, 1
        %s2238 = smul.addr %s2237, 8
        %s2239 = smul.addr %s2238, 8
        %s2240 = scalar_lea.vmem %s11, %s2239
      $region76: #{decoder_forward.3} parent=71 // pred_fallthru
        _
    $region72: #{decoder_forward.3} parent=5 // pred_fallthru
      _
  $region6: #{decoder_forward.3} parent=0 // loop_footer
    %s21 = sadd.s32 1, %s17
  $region7: #{decoder_forward.3} parent=0 // loop_footer_branch
    %16 = sbr.rel target = $region3
  $region8: #{decoder_forward.3} parent=0 // loop_exit
    _

// kernel: decoder_forward.5
$region0: #{decoder_forward.5}
  #allocation0 [shape = 'u32[]', space=smem, size = 0x4, offset = 0x4, fixed_abs, tag = 'smem constant byte address 0x4 - core index']
  #allocation1 [shape = 'u32[144,128]{1,0:T(1,128)}', space=vmem, size = 0x12000, scoped, tag = 'internal scratch']
  #allocation2 [shape = 'f32[1,18,18,32]{3,2,1,0:T(8,128)}', space=vmem, size = 0x36000, scoped, tag = 'scratch operand']
  #allocation3 [shape = 'bf16[256,288]{1,0:T(16,128)(2,1)}', space=vmem, size = 0x30000, scoped, tag = 'scratch operand']
  %s0 = inlined_call_operand.vmem [shape: f32[2,16,16,32], index: 0, kind: input, shape index: {}]
  %s1 = inlined_call_operand.vmem [shape: bf16[288,128], index: 1, kind: input, shape index: {}]
  %s2 = inlined_call_operand.vmem [shape: f32[1,128], index: 2, kind: input, shape index: {}]
  %s3 = inlined_call_operand.vmem [shape: f32[2,256,128], index: 3, kind: output, shape index: {}]
  %s4 = sld [smem:[#allocation0]]
  $region45: #{decoder_forward.5} parent=0
    _
  %s6 = ssub.s32 1, %s4
  %s7 = scalar_select 0, %s6, %s4
  loop: start=0, step=1, limit=4
  $region2: #{decoder_forward.5} parent=0 // loop_pre_header
    _
  $region3: #{decoder_forward.5} parent=0 // loop_header
    %s9 = sphi 0, %s13
    %p10 = scmp.ge.s32.totalorder %s9, 4
    %s19 = sphi 0, %s21
    %s22 = sphi 0, %s19
    %s23 = sphi 0, %s22
    %s39 = sphi 0, %s23
    %s43 = sphi 0, %s43
    %s45 = sphi 0, %s43
    %s46 = sphi 0, %s45
    %s60 = sphi 0, %s46
    %s64 = sphi 0, %s64
    %s66 = sphi 0, %s64
    %s67 = sphi 0, %s66
    %s81 = sphi 0, %s67
    %s87 = sphi 0, %s89
    %s90 = sphi 0, %s87
    %s91 = sphi 0, %s90
    %s107 = sphi 0, %s91
  $region4: #{decoder_forward.5} parent=0 // loop_header_branch
    %12 = sbr.rel (%p10) target = $region8
  $region5: #{decoder_forward.5} parent=0 // loop_body
    %s14 = ssub.s32 %s9, 1
    %s15 = ssub.s32 %s9, 2
    %s16 = sadd.s32 %s9, 1
    %s17 = ssub.s32 %s9, %s16
    %p18 = scmp.eq.s32.totalorder %s17, 0
    %s20 = sadd.s32 %s19, 1
    %s21 = scalar_select %p18, %s19, %s20
    %p24 = pneg %p18
    %p25 = scmp.eq.s32.totalorder %s9, 1
    %p26 = por %p24, %p25
    %p27 = scmp.ne.s32.totalorder %s19, %s22
    %p28 = scmp.eq.s32.totalorder %s9, 0
    %p29 = por %p27, %p28
    %p30 = scmp.ne.s32.totalorder %s19, %s22
    %p31 = scmp.eq.s32.totalorder %s14, 1
    %p32 = por %p30, %p31
    %p33 = scmp.ne.s32.totalorder %s22, %s23
    %p34 = scmp.eq.s32.totalorder %s14, 0
    %p35 = por %p33, %p34
    %p36 = scmp.ne.s32.totalorder %s22, %s23
    %p37 = scmp.eq.s32.totalorder %s15, 1
    %p38 = por %p36, %p37
    %p40 = scmp.ne.s32.totalorder %s23, %s39
    %p41 = scmp.eq.s32.totalorder %s15, 0
    %p42 = por %p40, %p41
    %s44 = sadd.s32 %s43, 1
    %p47 = scmp.eq.s32.totalorder %s9, 1
    %p48 = scmp.ne.s32.totalorder %s43, %s45
    %p49 = scmp.eq.s32.totalorder %s9, 0
    %p50 = por %p48, %p49
    %p51 = scmp.ne.s32.totalorder %s43, %s45
    %p52 = scmp.eq.s32.totalorder %s14, 1
    %p53 = por %p51, %p52
    %p54 = scmp.ne.s32.totalorder %s45, %s46
    %p55 = scmp.eq.s32.totalorder %s14, 0
    %p56 = por %p54, %p55
    %p57 = scmp.ne.s32.totalorder %s45, %s46
    %p58 = scmp.eq.s32.totalorder %s15, 1
    %p59 = por %p57, %p58
    %p61 = scmp.ne.s32.totalorder %s46, %s60
    %p62 = scmp.eq.s32.totalorder %s15, 0
    %p63 = por %p61, %p62
    %s65 = sadd.s32 %s64, 1
    %p68 = scmp.eq.s32.totalorder %s9, 1
    %p69 = scmp.ne.s32.totalorder %s64, %s66
    %p70 = scmp.eq.s32.totalorder %s9, 0
    %p71 = por %p69, %p70
    %p72 = scmp.ne.s32.totalorder %s64, %s66
    %p73 = scmp.eq.s32.totalorder %s14, 1
    %p74 = por %p72, %p73
    %p75 = scmp.ne.s32.totalorder %s66, %s67
    %p76 = scmp.eq.s32.totalorder %s14, 0
    %p77 = por %p75, %p76
    %p78 = scmp.ne.s32.totalorder %s66, %s67
    %p79 = scmp.eq.s32.totalorder %s15, 1
    %p80 = por %p78, %p79
    %p82 = scmp.ne.s32.totalorder %s67, %s81
    %p83 = scmp.eq.s32.totalorder %s15, 0
    %p84 = por %p82, %p83
    %s85 = ssub.s32 %s9, %s16
    %p86 = scmp.eq.s32.totalorder %s85, 0
    %s88 = sadd.s32 %s87, 1
    %s89 = scalar_select %p86, %s87, %s88
    %p92 = pneg %p86
    %p93 = scmp.eq.s32.totalorder %s9, 1
    %p94 = por %p92, %p93
    %p95 = scmp.ne.s32.totalorder %s87, %s90
    %p96 = scmp.eq.s32.totalorder %s9, 0
    %p97 = por %p95, %p96
    %p98 = scmp.ne.s32.totalorder %s87, %s90
    %p99 = scmp.eq.s32.totalorder %s14, 1
    %p100 = por %p98, %p99
    %p101 = scmp.ne.s32.totalorder %s90, %s91
    %p102 = scmp.eq.s32.totalorder %s14, 0
    %p103 = por %p101, %p102
    %p104 = scmp.ne.s32.totalorder %s90, %s91
    %p105 = scmp.eq.s32.totalorder %s15, 1
    %p106 = por %p104, %p105
    %p108 = scmp.ne.s32.totalorder %s91, %s107
    %p109 = scmp.eq.s32.totalorder %s15, 0
    %p110 = por %p108, %p109
    %p111 = scmp.le.s32.totalorder 1, %s9
    %p112 = scmp.lt.s32.totalorder %s9, 3
    %p113 = pnand %p111, %p112
    %p114 = pneg %p113
    // Predicated region
    $region9: #{decoder_forward.5} parent=5 // pred_check
      _
    $region10: #{decoder_forward.5} parent=5 // pred_check_branch
      %116 = sbr.rel (%p113) target = $region12
    $region11: #{decoder_forward.5} parent=5 // pred_region
      %s117 = ssub.s32 %s9, 1
      // Predicated region
      $region13: #{decoder_forward.5} parent=11 // pred_check
        %p118 = pneg %p56
      $region14: #{decoder_forward.5} parent=11 // pred_check_branch
        %120 = sbr.rel (%p118) target = $region16
      $region15: #{decoder_forward.5} parent=11 // pred_region
        _
      $region16: #{decoder_forward.5} parent=11 // pred_fallthru
        _
      // Predicated region
      $region17: #{decoder_forward.5} parent=11 // pred_check
        %p121 = pneg %p77
      $region18: #{decoder_forward.5} parent=11 // pred_check_branch
        %123 = sbr.rel (%p121) target = $region20
      $region19: #{decoder_forward.5} parent=11 // pred_region
        _
      $region20: #{decoder_forward.5} parent=11 // pred_fallthru
        _
    $region12: #{decoder_forward.5} parent=5 // pred_fallthru
      _
    %p124 = scmp.lt.s32.totalorder %s9, 2
    // Predicated region
    $region21: #{decoder_forward.5} parent=5 // pred_check
      %p125 = pneg %p124
    $region22: #{decoder_forward.5} parent=5 // pred_check_branch
      %127 = sbr.rel (%p125) target = $region24
    $region23: #{decoder_forward.5} parent=5 // pred_region
      // Predicated region
      $region25: #{decoder_forward.5} parent=23 // pred_check
        %p128 = pneg %p29
      $region26: #{decoder_forward.5} parent=23 // pred_check_branch
        %130 = sbr.rel (%p128) target = $region28
      $region27: #{decoder_forward.5} parent=23 // pred_region
        %p131 = scmp.lt.s32.totalorder %s9, 1
        %s132 = scalar_select %p131, %s9, 1
        %s133 = smul.addr %s132, 32
        %s134 = smul.addr %s133, 8
        %s135 = scalar_lea.vmem %s0, %s134
      $region28: #{decoder_forward.5} parent=23 // pred_fallthru
        _
    $region24: #{decoder_forward.5} parent=5 // pred_fallthru
      _
    %p136 = scmp.le.s32.totalorder 1, %s9
    %p137 = scmp.lt.s32.totalorder %s9, 3
    %p138 = pnand %p136, %p137
    %p139 = pneg %p138
    // Predicated region
    $region29: #{decoder_forward.5} parent=5 // pred_check
      _
    $region30: #{decoder_forward.5} parent=5 // pred_check_branch
      %141 = sbr.rel (%p138) target = $region32
    $region31: #{decoder_forward.5} parent=5 // pred_region
      %s142 = ssub.s32 %s9, 1
      %p143 = scmp.lt.s32.totalorder %s14, 1
      %s144 = scalar_select %p143, %s14, 1
      %s145 = smul.addr %s144, 32
      %s146 = smul.addr %s145, 8
      %s147 = scalar_lea.vmem %s0, %s146
      %p148 = pneg %p35
      %p149 = pneg %p32
      %p150 = pneg %p56
      %p151 = pneg %p53
      %p152 = pneg %p77
      %p153 = pneg %p74
      %p154 = pneg %p103
      %p155 = pneg %p100
      %p156 = scmp.lt.s32.totalorder %s14, 1
      %s157 = scalar_select %p156, %s14, 1
      %s158 = smul.addr %s157, 32
      %s159 = smul.addr %s158, 8
      %s160 = scalar_lea.vmem %s3, %s159
      %p161 = scmp.lt.s32.totalorder %s14, 1
      %s162 = scalar_select %p161, %s14, 1
      %s163 = smul.addr %s162, 32
      %s164 = smul.addr %s163, 8
      %s165 = scalar_lea.vmem %s0, %s164
      %p166 = scmp.lt.s32.totalorder %s14, 1
      %s167 = scalar_select %p166, %s14, 1
      %s168 = smul.addr %s167, 32
      %s169 = smul.addr %s168, 8
      %s170 = scalar_lea.vmem %s3, %s169
      %vm172 = vcmask 261120
      %173 = vst.msk [vmem:[#allocation2] sm:$0xff] %vm172, 0.0
      %174 = vst.msk [vmem:[#allocation2 + $0x8] sm:$0xff] %vm172, 0.0
      %vm175 = vcmask 254976
      %176 = vst.msk [vmem:[#allocation2 + $0x10] sm:$0x3] %vm175, 0.0
      %s177 = scalar_lea.vmem [#allocation2], 408
      %178 = vst.msk [vmem:[%s177] sm:$0xff] %vm172, 0.0
      %179 = vst.msk [vmem:[%s177 + $0x8] sm:$0xff] %vm172, 0.0
      %180 = vst.msk [vmem:[%s177 + $0x10] sm:$0x3] %vm175, 0.0
      %s181 = scalar_lea.vmem [#allocation2], 24
      %vm182 = vcmask 253952
      %183 = vst.msk [vmem:[%s181] sm:$0x1] %vm182, 0.0
      %184 = vst.msk [vmem:[%s181 + $0x18] sm:$0x1] %vm182, 0.0
      %185 = vst.msk [vmem:[%s181 + $0x30] sm:$0x1] %vm182, 0.0
      %186 = vst.msk [vmem:[%s181 + $0x48] sm:$0x1] %vm182, 0.0
      %187 = vst.msk [vmem:[%s181 + $0x60] sm:$0x1] %vm182, 0.0
      %188 = vst.msk [vmem:[%s181 + $0x78] sm:$0x1] %vm182, 0.0
      %189 = vst.msk [vmem:[%s181 + $0x90] sm:$0x1] %vm182, 0.0
      %190 = vst.msk [vmem:[%s181 + $0xa8] sm:$0x1] %vm182, 0.0
      %191 = vst.msk [vmem:[%s181 + $0xc0] sm:$0x1] %vm182, 0.0
      %192 = vst.msk [vmem:[%s181 + $0xd8] sm:$0x1] %vm182, 0.0
      %193 = vst.msk [vmem:[%s181 + $0xf0] sm:$0x1] %vm182, 0.0
      %194 = vst.msk [vmem:[%s181 + $0x108] sm:$0x1] %vm182, 0.0
      %195 = vst.msk [vmem:[%s181 + $0x120] sm:$0x1] %vm182, 0.0
      %196 = vst.msk [vmem:[%s181 + $0x138] sm:$0x1] %vm182, 0.0
      %197 = vst.msk [vmem:[%s181 + $0x150] sm:$0x1] %vm182, 0.0
      %198 = vst.msk [vmem:[%s181 + $0x168] sm:$0x1] %vm182, 0.0
      %199 = vst.msk [vmem:[%s181 + $0x11] sm:$0x1] %vm182, 0.0
      %200 = vst.msk [vmem:[%s181 + $0x29] sm:$0x1] %vm182, 0.0
      %201 = vst.msk [vmem:[%s181 + $0x41] sm:$0x1] %vm182, 0.0
      %202 = vst.msk [vmem:[%s181 + $0x59] sm:$0x1] %vm182, 0.0
      %203 = vst.msk [vmem:[%s181 + $0x71] sm:$0x1] %vm182, 0.0
      %204 = vst.msk [vmem:[%s181 + $0x89] sm:$0x1] %vm182, 0.0
      %205 = vst.msk [vmem:[%s181 + $0xa1] sm:$0x1] %vm182, 0.0
      %206 = vst.msk [vmem:[%s181 + $0xb9] sm:$0x1] %vm182, 0.0
      %207 = vst.msk [vmem:[%s181 + $0xd1] sm:$0x1] %vm182, 0.0
      %208 = vst.msk [vmem:[%s181 + $0xe9] sm:$0x1] %vm182, 0.0
      %209 = vst.msk [vmem:[%s181 + $0x101] sm:$0x1] %vm182, 0.0
      %210 = vst.msk [vmem:[%s181 + $0x119] sm:$0x1] %vm182, 0.0
      %211 = vst.msk [vmem:[%s181 + $0x131] sm:$0x1] %vm182, 0.0
      %212 = vst.msk [vmem:[%s181 + $0x149] sm:$0x1] %vm182, 0.0
      %213 = vst.msk [vmem:[%s181 + $0x161] sm:$0x1] %vm182, 0.0
      %214 = vst.msk [vmem:[%s181 + $0x179] sm:$0x1] %vm182, 0.0
      %v215 = vld [vmem:[%s165] sm:$0xff]
      %v216 = vld [vmem:[%s165 + $0x8] sm:$0xff]
      %v217 = vld [vmem:[%s165 + $0x10] sm:$0xff]
      %v218 = vld [vmem:[%s165 + $0x18] sm:$0xff]
      %v219 = vld [vmem:[%s165 + $0x20] sm:$0xff]
      %v220 = vld [vmem:[%s165 + $0x28] sm:$0xff]
      %v221 = vld [vmem:[%s165 + $0x30] sm:$0xff]
      %v222 = vld [vmem:[%s165 + $0x38] sm:$0xff]
      %v223 = vld [vmem:[%s165 + $0x40] sm:$0xff]
      %v224 = vld [vmem:[%s165 + $0x48] sm:$0xff]
      %v225 = vld [vmem:[%s165 + $0x50] sm:$0xff]
      %v226 = vld [vmem:[%s165 + $0x58] sm:$0xff]
      %v227 = vld [vmem:[%s165 + $0x60] sm:$0xff]
      %v228 = vld [vmem:[%s165 + $0x68] sm:$0xff]
      %v229 = vld [vmem:[%s165 + $0x70] sm:$0xff]
      %v230 = vld [vmem:[%s165 + $0x78] sm:$0xff]
      %v231 = vld [vmem:[%s165 + $0x80] sm:$0xff]
      %v232 = vld [vmem:[%s165 + $0x88] sm:$0xff]
      %v233 = vld [vmem:[%s165 + $0x90] sm:$0xff]
      %v234 = vld [vmem:[%s165 + $0x98] sm:$0xff]
      %v235 = vld [vmem:[%s165 + $0xa0] sm:$0xff]
      %v236 = vld [vmem:[%s165 + $0xa8] sm:$0xff]
      %v237 = vld [vmem:[%s165 + $0xb0] sm:$0xff]
      %v238 = vld [vmem:[%s165 + $0xb8] sm:$0xff]
      %v239 = vld [vmem:[%s165 + $0xc0] sm:$0xff]
      %v240 = vld [vmem:[%s165 + $0xc8] sm:$0xff]
      %v241 = vld [vmem:[%s165 + $0xd0] sm:$0xff]
      %v242 = vld [vmem:[%s165 + $0xd8] sm:$0xff]
      %v243 = vld [vmem:[%s165 + $0xe0] sm:$0xff]
      %v244 = vld [vmem:[%s165 + $0xe8] sm:$0xff]
      %v245 = vld [vmem:[%s165 + $0xf0] sm:$0xff]
      %v246 = vld [vmem:[%s165 + $0xf8] sm:$0xff]
      %247 = vst.msk [vmem:[%s181 + $0x1] sm:$0xff] %vm172, %v215
      %248 = vst.msk [vmem:[%s181 + $0x9] sm:$0xff] %vm172, %v216
      %249 = vst.msk [vmem:[%s181 + $0x19] sm:$0xff] %vm172, %v217
      %250 = vst.msk [vmem:[%s181 + $0x21] sm:$0xff] %vm172, %v218
      %251 = vst.msk [vmem:[%s181 + $0x31] sm:$0xff] %vm172, %v219
      %252 = vst.msk [vmem:[%s181 + $0x39] sm:$0xff] %vm172, %v220
      %253 = vst.msk [vmem:[%s181 + $0x49] sm:$0xff] %vm172, %v221
      %254 = vst.msk [vmem:[%s181 + $0x51] sm:$0xff] %vm172, %v222
      %255 = vst.msk [vmem:[%s181 + $0x61] sm:$0xff] %vm172, %v223
      %256 = vst.msk [vmem:[%s181 + $0x69] sm:$0xff] %vm172, %v224
      %257 = vst.msk [vmem:[%s181 + $0x79] sm:$0xff] %vm172, %v225
      %258 = vst.msk [vmem:[%s181 + $0x81] sm:$0xff] %vm172, %v226
      %259 = vst.msk [vmem:[%s181 + $0x91] sm:$0xff] %vm172, %v227
      %260 = vst.msk [vmem:[%s181 + $0x99] sm:$0xff] %vm172, %v228
      %261 = vst.msk [vmem:[%s181 + $0xa9] sm:$0xff] %vm172, %v229
      %262 = vst.msk [vmem:[%s181 + $0xb1] sm:$0xff] %vm172, %v230
      %263 = vst.msk [vmem:[%s181 + $0xc1] sm:$0xff] %vm172, %v231
      %264 = vst.msk [vmem:[%s181 + $0xc9] sm:$0xff] %vm172, %v232
      %265 = vst.msk [vmem:[%s181 + $0xd9] sm:$0xff] %vm172, %v233
      %266 = vst.msk [vmem:[%s181 + $0xe1] sm:$0xff] %vm172, %v234
      %267 = vst.msk [vmem:[%s181 + $0xf1] sm:$0xff] %vm172, %v235
      %268 = vst.msk [vmem:[%s181 + $0xf9] sm:$0xff] %vm172, %v236
      %269 = vst.msk [vmem:[%s181 + $0x109] sm:$0xff] %vm172, %v237
      %270 = vst.msk [vmem:[%s181 + $0x111] sm:$0xff] %vm172, %v238
      %271 = vst.msk [vmem:[%s181 + $0x121] sm:$0xff] %vm172, %v239
      %272 = vst.msk [vmem:[%s181 + $0x129] sm:$0xff] %vm172, %v240
      %273 = vst.msk [vmem:[%s181 + $0x139] sm:$0xff] %vm172, %v241
      %274 = vst.msk [vmem:[%s181 + $0x141] sm:$0xff] %vm172, %v242
      %275 = vst.msk [vmem:[%s181 + $0x151] sm:$0xff] %vm172, %v243
      %276 = vst.msk [vmem:[%s181 + $0x159] sm:$0xff] %vm172, %v244
      %277 = vst.msk [vmem:[%s181 + $0x169] sm:$0xff] %vm172, %v245
      %278 = vst.msk [vmem:[%s181 + $0x171] sm:$0xff] %vm172, %v246
      %v279 = vld [vmem:[#allocation2] sm:$0xff]
      %v280 = vld [vmem:[#allocation2 + $0x8] sm:$0xff]
      %v281 = vld [vmem:[#allocation2 + $0x18] sm:$0xff]
      %v282 = vld [vmem:[#allocation2 + $0x20] sm:$0xff]
      %v283 = vld [vmem:[#allocation2 + $0x30] sm:$0xff]
      %v284 = vld [vmem:[#allocation2 + $0x38] sm:$0xff]
      %v285 = vld [vmem:[#allocation2 + $0x48] sm:$0xff]
      %v286 = vld [vmem:[#allocation2 + $0x50] sm:$0xff]
      %v287 = vld [vmem:[#allocation2 + $0x60] sm:$0xff]
      %v288 = vld [vmem:[#allocation2 + $0x68] sm:$0xff]
      %v289 = vld [vmem:[#allocation2 + $0x78] sm:$0xff]
      %v290 = vld [vmem:[#allocation2 + $0x80] sm:$0xff]
      %v291 = vld [vmem:[#allocation2 + $0x90] sm:$0xff]
      %v292 = vld [vmem:[#allocation2 + $0x98] sm:$0xff]
      %v293 = vld [vmem:[#allocation2 + $0xa8] sm:$0xff]
      %v294 = vld [vmem:[#allocation2 + $0xb0] sm:$0xff]
      %v295 = vld [vmem:[#allocation2 + $0xc0] sm:$0xff]
      %v296 = vld [vmem:[#allocation2 + $0xc8] sm:$0xff]
      %v297 = vld [vmem:[#allocation2 + $0xd8] sm:$0xff]
      %v298 = vld [vmem:[#allocation2 + $0xe0] sm:$0xff]
      %v299 = vld [vmem:[#allocation2 + $0xf0] sm:$0xff]
      %v300 = vld [vmem:[#allocation2 + $0xf8] sm:$0xff]
      %v301 = vld [vmem:[#allocation2 + $0x108] sm:$0xff]
      %v302 = vld [vmem:[#allocation2 + $0x110] sm:$0xff]
      %v303 = vld [vmem:[#allocation2 + $0x120] sm:$0xff]
      %v304 = vld [vmem:[#allocation2 + $0x128] sm:$0xff]
      %v305 = vld [vmem:[#allocation2 + $0x138] sm:$0xff]
      %v306 = vld [vmem:[#allocation2 + $0x140] sm:$0xff]
      %v307 = vld [vmem:[#allocation2 + $0x150] sm:$0xff]
      %v308 = vld [vmem:[#allocation2 + $0x158] sm:$0xff]
      %v309 = vld [vmem:[#allocation2 + $0x168] sm:$0xff]
      %v310 = vld [vmem:[#allocation2 + $0x170] sm:$0xff]
      %v311 = vpack.c.bf16 %v280, %v279
      %v312 = vpack.c.bf16 %v282, %v281
      %v313 = vpack.c.bf16 %v284, %v283
      %v314 = vpack.c.bf16 %v286, %v285
      %v315 = vpack.c.bf16 %v288, %v287
      %v316 = vpack.c.bf16 %v290, %v289
      %v317 = vpack.c.bf16 %v292, %v291
      %v318 = vpack.c.bf16 %v294, %v293
      %v319 = vpack.c.bf16 %v296, %v295
      %v320 = vpack.c.bf16 %v298, %v297
      %v321 = vpack.c.bf16 %v300, %v299
      %v322 = vpack.c.bf16 %v302, %v301
      %v323 = vpack.c.bf16 %v304, %v303
      %v324 = vpack.c.bf16 %v306, %v305
      %v325 = vpack.c.bf16 %v308, %v307
      %v326 = vpack.c.bf16 %v310, %v309
      %327 = vst.msk [vmem:[#allocation3] sm:$0xff] %vm172, %v311
      %328 = vst.msk [vmem:[#allocation3 + $0x18] sm:$0xff] %vm172, %v312
      %329 = vst.msk [vmem:[#allocation3 + $0x30] sm:$0xff] %vm172, %v313
      %330 = vst.msk [vmem:[#allocation3 + $0x48] sm:$0xff] %vm172, %v314
      %331 = vst.msk [vmem:[#allocation3 + $0x60] sm:$0xff] %vm172, %v315
      %332 = vst.msk [vmem:[#allocation3 + $0x78] sm:$0xff] %vm172, %v316
      %333 = vst.msk [vmem:[#allocation3 + $0x90] sm:$0xff] %vm172, %v317
      %334 = vst.msk [vmem:[#allocation3 + $0xa8] sm:$0xff] %vm172, %v318
      %335 = vst.msk [vmem:[#allocation3 + $0xc0] sm:$0xff] %vm172, %v319
      %336 = vst.msk [vmem:[#allocation3 + $0xd8] sm:$0xff] %vm172, %v320
      %337 = vst.msk [vmem:[#allocation3 + $0xf0] sm:$0xff] %vm172, %v321
      %338 = vst.msk [vmem:[#allocation3 + $0x108] sm:$0xff] %vm172, %v322
      %339 = vst.msk [vmem:[#allocation3 + $0x120] sm:$0xff] %vm172, %v323
      %340 = vst.msk [vmem:[#allocation3 + $0x138] sm:$0xff] %vm172, %v324
      %341 = vst.msk [vmem:[#allocation3 + $0x150] sm:$0xff] %vm172, %v325
      %342 = vst.msk [vmem:[#allocation3 + $0x168] sm:$0xff] %vm172, %v326
      %v343 = vld [vmem:[#allocation2 + $0x1] sm:$0xff]
      %v344 = vld [vmem:[#allocation2 + $0x9] sm:$0xff]
      %v345 = vld [vmem:[#allocation2 + $0x19] sm:$0xff]
      %v346 = vld [vmem:[#allocation2 + $0x21] sm:$0xff]
      %v347 = vld [vmem:[#allocation2 + $0x31] sm:$0xff]
      %v348 = vld [vmem:[#allocation2 + $0x39] sm:$0xff]
      %v349 = vld [vmem:[#allocation2 + $0x49] sm:$0xff]
      %v350 = vld [vmem:[#allocation2 + $0x51] sm:$0xff]
      %v351 = vld [vmem:[#allocation2 + $0x61] sm:$0xff]
      %v352 = vld [vmem:[#allocation2 + $0x69] sm:$0xff]
      %v353 = vld [vmem:[#allocation2 + $0x79] sm:$0xff]
      %v354 = vld [vmem:[#allocation2 + $0x81] sm:$0xff]
      %v355 = vld [vmem:[#allocation2 + $0x91] sm:$0xff]
      %v356 = vld [vmem:[#allocation2 + $0x99] sm:$0xff]
      %v357 = vld [vmem:[#allocation2 + $0xa9] sm:$0xff]
      %v358 = vld [vmem:[#allocation2 + $0xb1] sm:$0xff]
      %v359 = vld [vmem:[#allocation2 + $0xc1] sm:$0xff]
      %v360 = vld [vmem:[#allocation2 + $0xc9] sm:$0xff]
      %v361 = vld [vmem:[#allocation2 + $0xd9] sm:$0xff]
      %v362 = vld [vmem:[#allocation2 + $0xe1] sm:$0xff]
      %v363 = vld [vmem:[#allocation2 + $0xf1] sm:$0xff]
      %v364 = vld [vmem:[#allocation2 + $0xf9] sm:$0xff]
      %v365 = vld [vmem:[#allocation2 + $0x109] sm:$0xff]
      %v366 = vld [vmem:[#allocation2 + $0x111] sm:$0xff]
      %v367 = vld [vmem:[#allocation2 + $0x121] sm:$0xff]
      %v368 = vld [vmem:[#allocation2 + $0x129] sm:$0xff]
      %v369 = vld [vmem:[#allocation2 + $0x139] sm:$0xff]
      %v370 = vld [vmem:[#allocation2 + $0x141] sm:$0xff]
      %v371 = vld [vmem:[#allocation2 + $0x151] sm:$0xff]
      %v372 = vld [vmem:[#allocation2 + $0x159] sm:$0xff]
      %v373 = vld [vmem:[#allocation2 + $0x169] sm:$0xff]
      %v374 = vld [vmem:[#allocation2 + $0x171] sm:$0xff]
      %v375 = vpack.c.bf16 %v344, %v343
      %v376 = vpack.c.bf16 %v346, %v345
      %v377 = vpack.c.bf16 %v348, %v347
      %v378 = vpack.c.bf16 %v350, %v349
      %v379 = vpack.c.bf16 %v352, %v351
      %v380 = vpack.c.bf16 %v354, %v353
      %v381 = vpack.c.bf16 %v356, %v355
      %v382 = vpack.c.bf16 %v358, %v357
      %v383 = vpack.c.bf16 %v360, %v359
      %v384 = vpack.c.bf16 %v362, %v361
      %v385 = vpack.c.bf16 %v364, %v363
      %v386 = vpack.c.bf16 %v366, %v365
      %v387 = vpack.c.bf16 %v368, %v367
      %v388 = vpack.c.bf16 %v370, %v369
      %v389 = vpack.c.bf16 %v372, %v371
      %v390 = vpack.c.bf16 %v374, %v373
      %407 = vrot.lane.b32.xlu0 %v375, 32
      %v408 = vpop.permute.xlu0 %407
      %409 = vrot.lane.b32.xlu0 %v376, 32
      %v410 = vpop.permute.xlu0 %409
      %411 = vrot.lane.b32.xlu0 %v377, 32
      %v412 = vpop.permute.xlu0 %411
      %413 = vrot.lane.b32.xlu0 %v378, 32
      %v414 = vpop.permute.xlu0 %413
      %415 = vrot.lane.b32.xlu0 %v379, 32
      %v416 = vpop.permute.xlu0 %415
      %417 = vrot.lane.b32.xlu0 %v380, 32
      %v418 = vpop.permute.xlu0 %417
      %419 = vrot.lane.b32.xlu0 %v381, 32
      %v420 = vpop.permute.xlu0 %419
      %421 = vrot.lane.b32.xlu0 %v382, 32
      %v422 = vpop.permute.xlu0 %421
      %423 = vrot.lane.b32.xlu0 %v383, 32
      %v424 = vpop.permute.xlu0 %423
      %425 = vrot.lane.b32.xlu0 %v384, 32
      %v426 = vpop.permute.xlu0 %425
      %427 = vrot.lane.b32.xlu0 %v385, 32
      %v428 = vpop.permute.xlu0 %427
      %429 = vrot.lane.b32.xlu0 %v386, 32
      %v430 = vpop.permute.xlu0 %429
      %431 = vrot.lane.b32.xlu0 %v387, 32
      %v432 = vpop.permute.xlu0 %431
      %433 = vrot.lane.b32.xlu0 %v388, 32
      %v434 = vpop.permute.xlu0 %433
      %435 = vrot.lane.b32.xlu0 %v389, 32
      %v436 = vpop.permute.xlu0 %435
      %437 = vrot.lane.b32.xlu0 %v390, 32
      %v438 = vpop.permute.xlu0 %437
      %vm455 = vcmask 523520
      %456 = vst.msk [vmem:[#allocation3] sm:$0xff] %vm455, %v408
      %457 = vst.msk [vmem:[#allocation3 + $0x18] sm:$0xff] %vm455, %v410
      %458 = vst.msk [vmem:[#allocation3 + $0x30] sm:$0xff] %vm455, %v412
      %459 = vst.msk [vmem:[#allocation3 + $0x48] sm:$0xff] %vm455, %v414
      %460 = vst.msk [vmem:[#allocation3 + $0x60] sm:$0xff] %vm455, %v416
      %461 = vst.msk [vmem:[#allocation3 + $0x78] sm:$0xff] %vm455, %v418
      %462 = vst.msk [vmem:[#allocation3 + $0x90] sm:$0xff] %vm455, %v420
      %463 = vst.msk [vmem:[#allocation3 + $0xa8] sm:$0xff] %vm455, %v422
      %464 = vst.msk [vmem:[#allocation3 + $0xc0] sm:$0xff] %vm455, %v424
      %465 = vst.msk [vmem:[#allocation3 + $0xd8] sm:$0xff] %vm455, %v426
      %466 = vst.msk [vmem:[#allocation3 + $0xf0] sm:$0xff] %vm455, %v428
      %467 = vst.msk [vmem:[#allocation3 + $0x108] sm:$0xff] %vm455, %v430
      %468 = vst.msk [vmem:[#allocation3 + $0x120] sm:$0xff] %vm455, %v432
      %469 = vst.msk [vmem:[#allocation3 + $0x138] sm:$0xff] %vm455, %v434
      %470 = vst.msk [vmem:[#allocation3 + $0x150] sm:$0xff] %vm455, %v436
      %471 = vst.msk [vmem:[#allocation3 + $0x168] sm:$0xff] %vm455, %v438
      %v472 = vld [vmem:[#allocation2 + $0x2] sm:$0xff]
      %v473 = vld [vmem:[#allocation2 + $0xa] sm:$0xff]
      %v474 = vld [vmem:[#allocation2 + $0x1a] sm:$0xff]
      %v475 = vld [vmem:[#allocation2 + $0x22] sm:$0xff]
      %v476 = vld [vmem:[#allocation2 + $0x32] sm:$0xff]
      %v477 = vld [vmem:[#allocation2 + $0x3a] sm:$0xff]
      %v478 = vld [vmem:[#allocation2 + $0x4a] sm:$0xff]
      %v479 = vld [vmem:[#allocation2 + $0x52] sm:$0xff]
      %v480 = vld [vmem:[#allocation2 + $0x62] sm:$0xff]
      %v481 = vld [vmem:[#allocation2 + $0x6a] sm:$0xff]
      %v482 = vld [vmem:[#allocation2 + $0x7a] sm:$0xff]
      %v483 = vld [vmem:[#allocation2 + $0x82] sm:$0xff]
      %v484 = vld [vmem:[#allocation2 + $0x92] sm:$0xff]
      %v485 = vld [vmem:[#allocation2 + $0x9a] sm:$0xff]
      %v486 = vld [vmem:[#allocation2 + $0xaa] sm:$0xff]
      %v487 = vld [vmem:[#allocation2 + $0xb2] sm:$0xff]
      %v488 = vld [vmem:[#allocation2 + $0xc2] sm:$0xff]
      %v489 = vld [vmem:[#allocation2 + $0xca] sm:$0xff]
      %v490 = vld [vmem:[#allocation2 + $0xda] sm:$0xff]
      %v491 = vld [vmem:[#allocation2 + $0xe2] sm:$0xff]
      %v492 = vld [vmem:[#allocation2 + $0xf2] sm:$0xff]
      %v493 = vld [vmem:[#allocation2 + $0xfa] sm:$0xff]
      %v494 = vld [vmem:[#allocation2 + $0x10a] sm:$0xff]
      %v495 = vld [vmem:[#allocation2 + $0x112] sm:$0xff]
      %v496 = vld [vmem:[#allocation2 + $0x122] sm:$0xff]
      %v497 = vld [vmem:[#allocation2 + $0x12a] sm:$0xff]
      %v498 = vld [vmem:[#allocation2 + $0x13a] sm:$0xff]
      %v499 = vld [vmem:[#allocation2 + $0x142] sm:$0xff]
      %v500 = vld [vmem:[#allocation2 + $0x152] sm:$0xff]
      %v501 = vld [vmem:[#allocation2 + $0x15a] sm:$0xff]
      %v502 = vld [vmem:[#allocation2 + $0x16a] sm:$0xff]
      %v503 = vld [vmem:[#allocation2 + $0x172] sm:$0xff]
      %v504 = vpack.c.bf16 %v473, %v472
      %v505 = vpack.c.bf16 %v475, %v474
      %v506 = vpack.c.bf16 %v477, %v476
      %v507 = vpack.c.bf16 %v479, %v478
      %v508 = vpack.c.bf16 %v481, %v480
      %v509 = vpack.c.bf16 %v483, %v482
      %v510 = vpack.c.bf16 %v485, %v484
      %v511 = vpack.c.bf16 %v487, %v486
      %v512 = vpack.c.bf16 %v489, %v488
      %v513 = vpack.c.bf16 %v491, %v490
      %v514 = vpack.c.bf16 %v493, %v492
      %v515 = vpack.c.bf16 %v495, %v494
      %v516 = vpack.c.bf16 %v497, %v496
      %v517 = vpack.c.bf16 %v499, %v498
      %v518 = vpack.c.bf16 %v501, %v500
      %v519 = vpack.c.bf16 %v503, %v502
      %536 = vrot.lane.b32.xlu0 %v504, 64
      %v537 = vpop.permute.xlu0 %536
      %538 = vrot.lane.b32.xlu0 %v505, 64
      %v539 = vpop.permute.xlu0 %538
      %540 = vrot.lane.b32.xlu0 %v506, 64
      %v541 = vpop.permute.xlu0 %540
      %542 = vrot.lane.b32.xlu0 %v507, 64
      %v543 = vpop.permute.xlu0 %542
      %544 = vrot.lane.b32.xlu0 %v508, 64
      %v545 = vpop.permute.xlu0 %544
      %546 = vrot.lane.b32.xlu0 %v509, 64
      %v547 = vpop.permute.xlu0 %546
      %548 = vrot.lane.b32.xlu0 %v510, 64
      %v549 = vpop.permute.xlu0 %548
      %550 = vrot.lane.b32.xlu0 %v511, 64
      %v551 = vpop.permute.xlu0 %550
      %552 = vrot.lane.b32.xlu0 %v512, 64
      %v553 = vpop.permute.xlu0 %552
      %554 = vrot.lane.b32.xlu0 %v513, 64
      %v555 = vpop.permute.xlu0 %554
      %556 = vrot.lane.b32.xlu0 %v514, 64
      %v557 = vpop.permute.xlu0 %556
      %558 = vrot.lane.b32.xlu0 %v515, 64
      %v559 = vpop.permute.xlu0 %558
      %560 = vrot.lane.b32.xlu0 %v516, 64
      %v561 = vpop.permute.xlu0 %560
      %562 = vrot.lane.b32.xlu0 %v517, 64
      %v563 = vpop.permute.xlu0 %562
      %564 = vrot.lane.b32.xlu0 %v518, 64
      %v565 = vpop.permute.xlu0 %564
      %566 = vrot.lane.b32.xlu0 %v519, 64
      %v567 = vpop.permute.xlu0 %566
      %vm584 = vcmask 785920
      %585 = vst.msk [vmem:[#allocation3] sm:$0xff] %vm584, %v537
      %586 = vst.msk [vmem:[#allocation3 + $0x18] sm:$0xff] %vm584, %v539
      %587 = vst.msk [vmem:[#allocation3 + $0x30] sm:$0xff] %vm584, %v541
      %588 = vst.msk [vmem:[#allocation3 + $0x48] sm:$0xff] %vm584, %v543
      %589 = vst.msk [vmem:[#allocation3 + $0x60] sm:$0xff] %vm584, %v545
      %590 = vst.msk [vmem:[#allocation3 + $0x78] sm:$0xff] %vm584, %v547
      %591 = vst.msk [vmem:[#allocation3 + $0x90] sm:$0xff] %vm584, %v549
      %592 = vst.msk [vmem:[#allocation3 + $0xa8] sm:$0xff] %vm584, %v551
      %593 = vst.msk [vmem:[#allocation3 + $0xc0] sm:$0xff] %vm584, %v553
      %594 = vst.msk [vmem:[#allocation3 + $0xd8] sm:$0xff] %vm584, %v555
      %595 = vst.msk [vmem:[#allocation3 + $0xf0] sm:$0xff] %vm584, %v557
      %596 = vst.msk [vmem:[#allocation3 + $0x108] sm:$0xff] %vm584, %v559
      %597 = vst.msk [vmem:[#allocation3 + $0x120] sm:$0xff] %vm584, %v561
      %598 = vst.msk [vmem:[#allocation3 + $0x138] sm:$0xff] %vm584, %v563
      %599 = vst.msk [vmem:[#allocation3 + $0x150] sm:$0xff] %vm584, %v565
      %600 = vst.msk [vmem:[#allocation3 + $0x168] sm:$0xff] %vm584, %v567
      %v601 = vld [vmem:[%s181] sm:$0xff]
      %v602 = vld [vmem:[%s181 + $0x8] sm:$0xff]
      %v603 = vld [vmem:[%s181 + $0x18] sm:$0xff]
      %v604 = vld [vmem:[%s181 + $0x20] sm:$0xff]
      %v605 = vld [vmem:[%s181 + $0x30] sm:$0xff]
      %v606 = vld [vmem:[%s181 + $0x38] sm:$0xff]
      %v607 = vld [vmem:[%s181 + $0x48] sm:$0xff]
      %v608 = vld [vmem:[%s181 + $0x50] sm:$0xff]
      %v609 = vld [vmem:[%s181 + $0x60] sm:$0xff]
      %v610 = vld [vmem:[%s181 + $0x68] sm:$0xff]
      %v611 = vld [vmem:[%s181 + $0x78] sm:$0xff]
      %v612 = vld [vmem:[%s181 + $0x80] sm:$0xff]
      %v613 = vld [vmem:[%s181 + $0x90] sm:$0xff]
      %v614 = vld [vmem:[%s181 + $0x98] sm:$0xff]
      %v615 = vld [vmem:[%s181 + $0xa8] sm:$0xff]
      %v616 = vld [vmem:[%s181 + $0xb0] sm:$0xff]
      %v617 = vld [vmem:[%s181 + $0xc0] sm:$0xff]
      %v618 = vld [vmem:[%s181 + $0xc8] sm:$0xff]
      %v619 = vld [vmem:[%s181 + $0xd8] sm:$0xff]
      %v620 = vld [vmem:[%s181 + $0xe0] sm:$0xff]
      %v621 = vld [vmem:[%s181 + $0xf0] sm:$0xff]
      %v622 = vld [vmem:[%s181 + $0xf8] sm:$0xff]
      %v623 = vld [vmem:[%s181 + $0x108] sm:$0xff]
      %v624 = vld [vmem:[%s181 + $0x110] sm:$0xff]
      %v625 = vld [vmem:[%s181 + $0x120] sm:$0xff]
      %v626 = vld [vmem:[%s181 + $0x128] sm:$0xff]
      %v627 = vld [vmem:[%s181 + $0x138] sm:$0xff]
      %v628 = vld [vmem:[%s181 + $0x140] sm:$0xff]
      %v629 = vld [vmem:[%s181 + $0x150] sm:$0xff]
      %v630 = vld [vmem:[%s181 + $0x158] sm:$0xff]
      %v631 = vld [vmem:[%s181 + $0x168] sm:$0xff]
      %v632 = vld [vmem:[%s181 + $0x170] sm:$0xff]
      %v633 = vpack.c.bf16 %v602, %v601
      %v634 = vpack.c.bf16 %v604, %v603
      %v635 = vpack.c.bf16 %v606, %v605
      %v636 = vpack.c.bf16 %v608, %v607
      %v637 = vpack.c.bf16 %v610, %v609
      %v638 = vpack.c.bf16 %v612, %v611
      %v639 = vpack.c.bf16 %v614, %v613
      %v640 = vpack.c.bf16 %v616, %v615
      %v641 = vpack.c.bf16 %v618, %v617
      %v642 = vpack.c.bf16 %v620, %v619
      %v643 = vpack.c.bf16 %v622, %v621
      %v644 = vpack.c.bf16 %v624, %v623
      %v645 = vpack.c.bf16 %v626, %v625
      %v646 = vpack.c.bf16 %v628, %v627
      %v647 = vpack.c.bf16 %v630, %v629
      %v648 = vpack.c.bf16 %v632, %v631
      %665 = vrot.lane.b32.xlu0 %v633, 96
      %v666 = vpop.permute.xlu0 %665
      %667 = vrot.lane.b32.xlu0 %v634, 96
      %v668 = vpop.permute.xlu0 %667
      %669 = vrot.lane.b32.xlu0 %v635, 96
      %v670 = vpop.permute.xlu0 %669
      %671 = vrot.lane.b32.xlu0 %v636, 96
      %v672 = vpop.permute.xlu0 %671
      %673 = vrot.lane.b32.xlu0 %v637, 96
      %v674 = vpop.permute.xlu0 %673
      %675 = vrot.lane.b32.xlu0 %v638, 96
      %v676 = vpop.permute.xlu0 %675
      %677 = vrot.lane.b32.xlu0 %v639, 96
      %v678 = vpop.permute.xlu0 %677
      %679 = vrot.lane.b32.xlu0 %v640, 96
      %v680 = vpop.permute.xlu0 %679
      %681 = vrot.lane.b32.xlu0 %v641, 96
      %v682 = vpop.permute.xlu0 %681
      %683 = vrot.lane.b32.xlu0 %v642, 96
      %v684 = vpop.permute.xlu0 %683
      %685 = vrot.lane.b32.xlu0 %v643, 96
      %v686 = vpop.permute.xlu0 %685
      %687 = vrot.lane.b32.xlu0 %v644, 96
      %v688 = vpop.permute.xlu0 %687
      %689 = vrot.lane.b32.xlu0 %v645, 96
      %v690 = vpop.permute.xlu0 %689
      %691 = vrot.lane.b32.xlu0 %v646, 96
      %v692 = vpop.permute.xlu0 %691
      %693 = vrot.lane.b32.xlu0 %v647, 96
      %v694 = vpop.permute.xlu0 %693
      %695 = vrot.lane.b32.xlu0 %v648, 96
      %v696 = vpop.permute.xlu0 %695
      %vm713 = vcmask 1048320
      %714 = vst.msk [vmem:[#allocation3] sm:$0xff] %vm713, %v666
      %715 = vst.msk [vmem:[#allocation3 + $0x18] sm:$0xff] %vm713, %v668
      %716 = vst.msk [vmem:[#allocation3 + $0x30] sm:$0xff] %vm713, %v670
      %717 = vst.msk [vmem:[#allocation3 + $0x48] sm:$0xff] %vm713, %v672
      %718 = vst.msk [vmem:[#allocation3 + $0x60] sm:$0xff] %vm713, %v674
      %719 = vst.msk [vmem:[#allocation3 + $0x78] sm:$0xff] %vm713, %v676
      %720 = vst.msk [vmem:[#allocation3 + $0x90] sm:$0xff] %vm713, %v678
      %721 = vst.msk [vmem:[#allocation3 + $0xa8] sm:$0xff] %vm713, %v680
      %722 = vst.msk [vmem:[#allocation3 + $0xc0] sm:$0xff] %vm713, %v682
      %723 = vst.msk [vmem:[#allocation3 + $0xd8] sm:$0xff] %vm713, %v684
      %724 = vst.msk [vmem:[#allocation3 + $0xf0] sm:$0xff] %vm713, %v686
      %725 = vst.msk [vmem:[#allocation3 + $0x108] sm:$0xff] %vm713, %v688
      %726 = vst.msk [vmem:[#allocation3 + $0x120] sm:$0xff] %vm713, %v690
      %727 = vst.msk [vmem:[#allocation3 + $0x138] sm:$0xff] %vm713, %v692
      %728 = vst.msk [vmem:[#allocation3 + $0x150] sm:$0xff] %vm713, %v694
      %729 = vst.msk [vmem:[#allocation3 + $0x168] sm:$0xff] %vm713, %v696
      %v730 = vld [vmem:[%s181 + $0x1] sm:$0xff]
      %v731 = vld [vmem:[%s181 + $0x9] sm:$0xff]
      %v732 = vld [vmem:[%s181 + $0x19] sm:$0xff]
      %v733 = vld [vmem:[%s181 + $0x21] sm:$0xff]
      %v734 = vld [vmem:[%s181 + $0x31] sm:$0xff]
      %v735 = vld [vmem:[%s181 + $0x39] sm:$0xff]
      %v736 = vld [vmem:[%s181 + $0x49] sm:$0xff]
      %v737 = vld [vmem:[%s181 + $0x51] sm:$0xff]
      %v738 = vld [vmem:[%s181 + $0x61] sm:$0xff]
      %v739 = vld [vmem:[%s181 + $0x69] sm:$0xff]
      %v740 = vld [vmem:[%s181 + $0x79] sm:$0xff]
      %v741 = vld [vmem:[%s181 + $0x81] sm:$0xff]
      %v742 = vld [vmem:[%s181 + $0x91] sm:$0xff]
      %v743 = vld [vmem:[%s181 + $0x99] sm:$0xff]
      %v744 = vld [vmem:[%s181 + $0xa9] sm:$0xff]
      %v745 = vld [vmem:[%s181 + $0xb1] sm:$0xff]
      %v746 = vld [vmem:[%s181 + $0xc1] sm:$0xff]
      %v747 = vld [vmem:[%s181 + $0xc9] sm:$0xff]
      %v748 = vld [vmem:[%s181 + $0xd9] sm:$0xff]
      %v749 = vld [vmem:[%s181 + $0xe1] sm:$0xff]
      %v750 = vld [vmem:[%s181 + $0xf1] sm:$0xff]
      %v751 = vld [vmem:[%s181 + $0xf9] sm:$0xff]
      %v752 = vld [vmem:[%s181 + $0x109] sm:$0xff]
      %v753 = vld [vmem:[%s181 + $0x111] sm:$0xff]
      %v754 = vld [vmem:[%s181 + $0x121] sm:$0xff]
      %v755 = vld [vmem:[%s181 + $0x129] sm:$0xff]
      %v756 = vld [vmem:[%s181 + $0x139] sm:$0xff]
      %v757 = vld [vmem:[%s181 + $0x141] sm:$0xff]
      %v758 = vld [vmem:[%s181 + $0x151] sm:$0xff]
      %v759 = vld [vmem:[%s181 + $0x159] sm:$0xff]
      %v760 = vld [vmem:[%s181 + $0x169] sm:$0xff]
      %v761 = vld [vmem:[%s181 + $0x171] sm:$0xff]
      %v762 = vpack.c.bf16 %v731, %v730
      %v763 = vpack.c.bf16 %v733, %v732
      %v764 = vpack.c.bf16 %v735, %v734
      %v765 = vpack.c.bf16 %v737, %v736
      %v766 = vpack.c.bf16 %v739, %v738
      %v767 = vpack.c.bf16 %v741, %v740
      %v768 = vpack.c.bf16 %v743, %v742
      %v769 = vpack.c.bf16 %v745, %v744
      %v770 = vpack.c.bf16 %v747, %v746
      %v771 = vpack.c.bf16 %v749, %v748
      %v772 = vpack.c.bf16 %v751, %v750
      %v773 = vpack.c.bf16 %v753, %v752
      %v774 = vpack.c.bf16 %v755, %v754
      %v775 = vpack.c.bf16 %v757, %v756
      %v776 = vpack.c.bf16 %v759, %v758
      %v777 = vpack.c.bf16 %v761, %v760
      %778 = vst.msk [vmem:[#allocation3 + $0x8] sm:$0xff] %vm172, %v762
      %779 = vst.msk [vmem:[#allocation3 + $0x20] sm:$0xff] %vm172, %v763
      %780 = vst.msk [vmem:[#allocation3 + $0x38] sm:$0xff] %vm172, %v764
      %781 = vst.msk [vmem:[#allocation3 + $0x50] sm:$0xff] %vm172, %v765
      %782 = vst.msk [vmem:[#allocation3 + $0x68] sm:$0xff] %vm172, %v766
      %783 = vst.msk [vmem:[#allocation3 + $0x80] sm:$0xff] %vm172, %v767
      %784 = vst.msk [vmem:[#allocation3 + $0x98] sm:$0xff] %vm172, %v768
      %785 = vst.msk [vmem:[#allocation3 + $0xb0] sm:$0xff] %vm172, %v769
      %786 = vst.msk [vmem:[#allocation3 + $0xc8] sm:$0xff] %vm172, %v770
      %787 = vst.msk [vmem:[#allocation3 + $0xe0] sm:$0xff] %vm172, %v771
      %788 = vst.msk [vmem:[#allocation3 + $0xf8] sm:$0xff] %vm172, %v772
      %789 = vst.msk [vmem:[#allocation3 + $0x110] sm:$0xff] %vm172, %v773
      %790 = vst.msk [vmem:[#allocation3 + $0x128] sm:$0xff] %vm172, %v774
      %791 = vst.msk [vmem:[#allocation3 + $0x140] sm:$0xff] %vm172, %v775
      %792 = vst.msk [vmem:[#allocation3 + $0x158] sm:$0xff] %vm172, %v776
      %793 = vst.msk [vmem:[#allocation3 + $0x170] sm:$0xff] %vm172, %v777
      %v794 = vld [vmem:[%s181 + $0x2] sm:$0xff]
      %v795 = vld [vmem:[%s181 + $0xa] sm:$0xff]
      %v796 = vld [vmem:[%s181 + $0x1a] sm:$0xff]
      %v797 = vld [vmem:[%s181 + $0x22] sm:$0xff]
      %v798 = vld [vmem:[%s181 + $0x32] sm:$0xff]
      %v799 = vld [vmem:[%s181 + $0x3a] sm:$0xff]
      %v800 = vld [vmem:[%s181 + $0x4a] sm:$0xff]
      %v801 = vld [vmem:[%s181 + $0x52] sm:$0xff]
      %v802 = vld [vmem:[%s181 + $0x62] sm:$0xff]
      %v803 = vld [vmem:[%s181 + $0x6a] sm:$0xff]
      %v804 = vld [vmem:[%s181 + $0x7a] sm:$0xff]
      %v805 = vld [vmem:[%s181 + $0x82] sm:$0xff]
      %v806 = vld [vmem:[%s181 + $0x92] sm:$0xff]
      %v807 = vld [vmem:[%s181 + $0x9a] sm:$0xff]
      %v808 = vld [vmem:[%s181 + $0xaa] sm:$0xff]
      %v809 = vld [vmem:[%s181 + $0xb2] sm:$0xff]
      %v810 = vld [vmem:[%s181 + $0xc2] sm:$0xff]
      %v811 = vld [vmem:[%s181 + $0xca] sm:$0xff]
      %v812 = vld [vmem:[%s181 + $0xda] sm:$0xff]
      %v813 = vld [vmem:[%s181 + $0xe2] sm:$0xff]
      %v814 = vld [vmem:[%s181 + $0xf2] sm:$0xff]
      %v815 = vld [vmem:[%s181 + $0xfa] sm:$0xff]
      %v816 = vld [vmem:[%s181 + $0x10a] sm:$0xff]
      %v817 = vld [vmem:[%s181 + $0x112] sm:$0xff]
      %v818 = vld [vmem:[%s181 + $0x122] sm:$0xff]
      %v819 = vld [vmem:[%s181 + $0x12a] sm:$0xff]
      %v820 = vld [vmem:[%s181 + $0x13a] sm:$0xff]
      %v821 = vld [vmem:[%s181 + $0x142] sm:$0xff]
      %v822 = vld [vmem:[%s181 + $0x152] sm:$0xff]
      %v823 = vld [vmem:[%s181 + $0x15a] sm:$0xff]
      %v824 = vld [vmem:[%s181 + $0x16a] sm:$0xff]
      %v825 = vld [vmem:[%s181 + $0x172] sm:$0xff]
      %v826 = vpack.c.bf16 %v795, %v794
      %v827 = vpack.c.bf16 %v797, %v796
      %v828 = vpack.c.bf16 %v799, %v798
      %v829 = vpack.c.bf16 %v801, %v800
      %v830 = vpack.c.bf16 %v803, %v802
      %v831 = vpack.c.bf16 %v805, %v804
      %v832 = vpack.c.bf16 %v807, %v806
      %v833 = vpack.c.bf16 %v809, %v808
      %v834 = vpack.c.bf16 %v811, %v810
      %v835 = vpack.c.bf16 %v813, %v812
      %v836 = vpack.c.bf16 %v815, %v814
      %v837 = vpack.c.bf16 %v817, %v816
      %v838 = vpack.c.bf16 %v819, %v818
      %v839 = vpack.c.bf16 %v821, %v820
      %v840 = vpack.c.bf16 %v823, %v822
      %v841 = vpack.c.bf16 %v825, %v824
      %858 = vrot.lane.b32.xlu0 %v826, 32
      %v859 = vpop.permute.xlu0 %858
      %860 = vrot.lane.b32.xlu0 %v827, 32
      %v861 = vpop.permute.xlu0 %860
      %862 = vrot.lane.b32.xlu0 %v828, 32
      %v863 = vpop.permute.xlu0 %862
      %864 = vrot.lane.b32.xlu0 %v829, 32
      %v865 = vpop.permute.xlu0 %864
      %866 = vrot.lane.b32.xlu0 %v830, 32
      %v867 = vpop.permute.xlu0 %866
      %868 = vrot.lane.b32.xlu0 %v831, 32
      %v869 = vpop.permute.xlu0 %868
      %870 = vrot.lane.b32.xlu0 %v832, 32
      %v871 = vpop.permute.xlu0 %870
      %872 = vrot.lane.b32.xlu0 %v833, 32
      %v873 = vpop.permute.xlu0 %872
      %874 = vrot.lane.b32.xlu0 %v834, 32
      %v875 = vpop.permute.xlu0 %874
      %876 = vrot.lane.b32.xlu0 %v835, 32
      %v877 = vpop.permute.xlu0 %876
      %878 = vrot.lane.b32.xlu0 %v836, 32
      %v879 = vpop.permute.xlu0 %878
      %880 = vrot.lane.b32.xlu0 %v837, 32
      %v881 = vpop.permute.xlu0 %880
      %882 = vrot.lane.b32.xlu0 %v838, 32
      %v883 = vpop.permute.xlu0 %882
      %884 = vrot.lane.b32.xlu0 %v839, 32
      %v885 = vpop.permute.xlu0 %884
      %886 = vrot.lane.b32.xlu0 %v840, 32
      %v887 = vpop.permute.xlu0 %886
      %888 = vrot.lane.b32.xlu0 %v841, 32
      %v889 = vpop.permute.xlu0 %888
      %906 = vst.msk [vmem:[#allocation3 + $0x8] sm:$0xff] %vm455, %v859
      %907 = vst.msk [vmem:[#allocation3 + $0x20] sm:$0xff] %vm455, %v861
      %908 = vst.msk [vmem:[#allocation3 + $0x38] sm:$0xff] %vm455, %v863
      %909 = vst.msk [vmem:[#allocation3 + $0x50] sm:$0xff] %vm455, %v865
      %910 = vst.msk [vmem:[#allocation3 + $0x68] sm:$0xff] %vm455, %v867
      %911 = vst.msk [vmem:[#allocation3 + $0x80] sm:$0xff] %vm455, %v869
      %912 = vst.msk [vmem:[#allocation3 + $0x98] sm:$0xff] %vm455, %v871
      %913 = vst.msk [vmem:[#allocation3 + $0xb0] sm:$0xff] %vm455, %v873
      %914 = vst.msk [vmem:[#allocation3 + $0xc8] sm:$0xff] %vm455, %v875
      %915 = vst.msk [vmem:[#allocation3 + $0xe0] sm:$0xff] %vm455, %v877
      %916 = vst.msk [vmem:[#allocation3 + $0xf8] sm:$0xff] %vm455, %v879
      %917 = vst.msk [vmem:[#allocation3 + $0x110] sm:$0xff] %vm455, %v881
      %918 = vst.msk [vmem:[#allocation3 + $0x128] sm:$0xff] %vm455, %v883
      %919 = vst.msk [vmem:[#allocation3 + $0x140] sm:$0xff] %vm455, %v885
      %920 = vst.msk [vmem:[#allocation3 + $0x158] sm:$0xff] %vm455, %v887
      %921 = vst.msk [vmem:[#allocation3 + $0x170] sm:$0xff] %vm455, %v889
      %s922 = scalar_lea.vmem [#allocation2], 48
      %v923 = vld [vmem:[%s922] sm:$0xff]
      %v924 = vld [vmem:[%s922 + $0x8] sm:$0xff]
      %v925 = vld [vmem:[%s922 + $0x18] sm:$0xff]
      %v926 = vld [vmem:[%s922 + $0x20] sm:$0xff]
      %v927 = vld [vmem:[%s922 + $0x30] sm:$0xff]
      %v928 = vld [vmem:[%s922 + $0x38] sm:$0xff]
      %v929 = vld [vmem:[%s922 + $0x48] sm:$0xff]
      %v930 = vld [vmem:[%s922 + $0x50] sm:$0xff]
      %v931 = vld [vmem:[%s922 + $0x60] sm:$0xff]
      %v932 = vld [vmem:[%s922 + $0x68] sm:$0xff]
      %v933 = vld [vmem:[%s922 + $0x78] sm:$0xff]
      %v934 = vld [vmem:[%s922 + $0x80] sm:$0xff]
      %v935 = vld [vmem:[%s922 + $0x90] sm:$0xff]
      %v936 = vld [vmem:[%s922 + $0x98] sm:$0xff]
      %v937 = vld [vmem:[%s922 + $0xa8] sm:$0xff]
      %v938 = vld [vmem:[%s922 + $0xb0] sm:$0xff]
      %v939 = vld [vmem:[%s922 + $0xc0] sm:$0xff]
      %v940 = vld [vmem:[%s922 + $0xc8] sm:$0xff]
      %v941 = vld [vmem:[%s922 + $0xd8] sm:$0xff]
      %v942 = vld [vmem:[%s922 + $0xe0] sm:$0xff]
      %v943 = vld [vmem:[%s922 + $0xf0] sm:$0xff]
      %v944 = vld [vmem:[%s922 + $0xf8] sm:$0xff]
      %v945 = vld [vmem:[%s922 + $0x108] sm:$0xff]
      %v946 = vld [vmem:[%s922 + $0x110] sm:$0xff]
      %v947 = vld [vmem:[%s922 + $0x120] sm:$0xff]
      %v948 = vld [vmem:[%s922 + $0x128] sm:$0xff]
      %v949 = vld [vmem:[%s922 + $0x138] sm:$0xff]
      %v950 = vld [vmem:[%s922 + $0x140] sm:$0xff]
      %v951 = vld [vmem:[%s922 + $0x150] sm:$0xff]
      %v952 = vld [vmem:[%s922 + $0x158] sm:$0xff]
      %v953 = vld [vmem:[%s922 + $0x168] sm:$0xff]
      %v954 = vld [vmem:[%s922 + $0x170] sm:$0xff]
      %v955 = vpack.c.bf16 %v924, %v923
      %v956 = vpack.c.bf16 %v926, %v925
      %v957 = vpack.c.bf16 %v928, %v927
      %v958 = vpack.c.bf16 %v930, %v929
      %v959 = vpack.c.bf16 %v932, %v931
      %v960 = vpack.c.bf16 %v934, %v933
      %v961 = vpack.c.bf16 %v936, %v935
      %v962 = vpack.c.bf16 %v938, %v937
      %v963 = vpack.c.bf16 %v940, %v939
      %v964 = vpack.c.bf16 %v942, %v941
      %v965 = vpack.c.bf16 %v944, %v943
      %v966 = vpack.c.bf16 %v946, %v945
      %v967 = vpack.c.bf16 %v948, %v947
      %v968 = vpack.c.bf16 %v950, %v949
      %v969 = vpack.c.bf16 %v952, %v951
      %v970 = vpack.c.bf16 %v954, %v953
      %987 = vrot.lane.b32.xlu0 %v955, 64
      %v988 = vpop.permute.xlu0 %987
      %989 = vrot.lane.b32.xlu0 %v956, 64
      %v990 = vpop.permute.xlu0 %989
      %991 = vrot.lane.b32.xlu0 %v957, 64
      %v992 = vpop.permute.xlu0 %991
      %993 = vrot.lane.b32.xlu0 %v958, 64
      %v994 = vpop.permute.xlu0 %993
      %995 = vrot.lane.b32.xlu0 %v959, 64
      %v996 = vpop.permute.xlu0 %995
      %997 = vrot.lane.b32.xlu0 %v960, 64
      %v998 = vpop.permute.xlu0 %997
      %999 = vrot.lane.b32.xlu0 %v961, 64
      %v1000 = vpop.permute.xlu0 %999
      %1001 = vrot.lane.b32.xlu0 %v962, 64
      %v1002 = vpop.permute.xlu0 %1001
      %1003 = vrot.lane.b32.xlu0 %v963, 64
      %v1004 = vpop.permute.xlu0 %1003
      %1005 = vrot.lane.b32.xlu0 %v964, 64
      %v1006 = vpop.permute.xlu0 %1005
      %1007 = vrot.lane.b32.xlu0 %v965, 64
      %v1008 = vpop.permute.xlu0 %1007
      %1009 = vrot.lane.b32.xlu0 %v966, 64
      %v1010 = vpop.permute.xlu0 %1009
      %1011 = vrot.lane.b32.xlu0 %v967, 64
      %v1012 = vpop.permute.xlu0 %1011
      %1013 = vrot.lane.b32.xlu0 %v968, 64
      %v1014 = vpop.permute.xlu0 %1013
      %1015 = vrot.lane.b32.xlu0 %v969, 64
      %v1016 = vpop.permute.xlu0 %1015
      %1017 = vrot.lane.b32.xlu0 %v970, 64
      %v1018 = vpop.permute.xlu0 %1017
      %1035 = vst.msk [vmem:[#allocation3 + $0x8] sm:$0xff] %vm584, %v988
      %1036 = vst.msk [vmem:[#allocation3 + $0x20] sm:$0xff] %vm584, %v990
      %1037 = vst.msk [vmem:[#allocation3 + $0x38] sm:$0xff] %vm584, %v992
      %1038 = vst.msk [vmem:[#allocation3 + $0x50] sm:$0xff] %vm584, %v994
      %1039 = vst.msk [vmem:[#allocation3 + $0x68] sm:$0xff] %vm584, %v996
      %1040 = vst.msk [vmem:[#allocation3 + $0x80] sm:$0xff] %vm584, %v998
      %1041 = vst.msk [vmem:[#allocation3 + $0x98] sm:$0xff] %vm584, %v1000
      %1042 = vst.msk [vmem:[#allocation3 + $0xb0] sm:$0xff] %vm584, %v1002
      %1043 = vst.msk [vmem:[#allocation3 + $0xc8] sm:$0xff] %vm584, %v1004
      %1044 = vst.msk [vmem:[#allocation3 + $0xe0] sm:$0xff] %vm584, %v1006
      %1045 = vst.msk [vmem:[#allocation3 + $0xf8] sm:$0xff] %vm584, %v1008
      %1046 = vst.msk [vmem:[#allocation3 + $0x110] sm:$0xff] %vm584, %v1010
      %1047 = vst.msk [vmem:[#allocation3 + $0x128] sm:$0xff] %vm584, %v1012
      %1048 = vst.msk [vmem:[#allocation3 + $0x140] sm:$0xff] %vm584, %v1014
      %1049 = vst.msk [vmem:[#allocation3 + $0x158] sm:$0xff] %vm584, %v1016
      %1050 = vst.msk [vmem:[#allocation3 + $0x170] sm:$0xff] %vm584, %v1018
      %v1051 = vld [vmem:[%s922 + $0x1] sm:$0xff]
      %v1052 = vld [vmem:[%s922 + $0x9] sm:$0xff]
      %v1053 = vld [vmem:[%s922 + $0x19] sm:$0xff]
      %v1054 = vld [vmem:[%s922 + $0x21] sm:$0xff]
      %v1055 = vld [vmem:[%s922 + $0x31] sm:$0xff]
      %v1056 = vld [vmem:[%s922 + $0x39] sm:$0xff]
      %v1057 = vld [vmem:[%s922 + $0x49] sm:$0xff]
      %v1058 = vld [vmem:[%s922 + $0x51] sm:$0xff]
      %v1059 = vld [vmem:[%s922 + $0x61] sm:$0xff]
      %v1060 = vld [vmem:[%s922 + $0x69] sm:$0xff]
      %v1061 = vld [vmem:[%s922 + $0x79] sm:$0xff]
      %v1062 = vld [vmem:[%s922 + $0x81] sm:$0xff]
      %v1063 = vld [vmem:[%s922 + $0x91] sm:$0xff]
      %v1064 = vld [vmem:[%s922 + $0x99] sm:$0xff]
      %v1065 = vld [vmem:[%s922 + $0xa9] sm:$0xff]
      %v1066 = vld [vmem:[%s922 + $0xb1] sm:$0xff]
      %v1067 = vld [vmem:[%s922 + $0xc1] sm:$0xff]
      %v1068 = vld [vmem:[%s922 + $0xc9] sm:$0xff]
      %v1069 = vld [vmem:[%s922 + $0xd9] sm:$0xff]
      %v1070 = vld [vmem:[%s922 + $0xe1] sm:$0xff]
      %v1071 = vld [vmem:[%s922 + $0xf1] sm:$0xff]
      %v1072 = vld [vmem:[%s922 + $0xf9] sm:$0xff]
      %v1073 = vld [vmem:[%s922 + $0x109] sm:$0xff]
      %v1074 = vld [vmem:[%s922 + $0x111] sm:$0xff]
      %v1075 = vld [vmem:[%s922 + $0x121] sm:$0xff]
      %v1076 = vld [vmem:[%s922 + $0x129] sm:$0xff]
      %v1077 = vld [vmem:[%s922 + $0x139] sm:$0xff]
      %v1078 = vld [vmem:[%s922 + $0x141] sm:$0xff]
      %v1079 = vld [vmem:[%s922 + $0x151] sm:$0xff]
      %v1080 = vld [vmem:[%s922 + $0x159] sm:$0xff]
      %v1081 = vld [vmem:[%s922 + $0x169] sm:$0xff]
      %v1082 = vld [vmem:[%s922 + $0x171] sm:$0xff]
      %v1083 = vpack.c.bf16 %v1052, %v1051
      %v1084 = vpack.c.bf16 %v1054, %v1053
      %v1085 = vpack.c.bf16 %v1056, %v1055
      %v1086 = vpack.c.bf16 %v1058, %v1057
      %v1087 = vpack.c.bf16 %v1060, %v1059
      %v1088 = vpack.c.bf16 %v1062, %v1061
      %v1089 = vpack.c.bf16 %v1064, %v1063
      %v1090 = vpack.c.bf16 %v1066, %v1065
      %v1091 = vpack.c.bf16 %v1068, %v1067
      %v1092 = vpack.c.bf16 %v1070, %v1069
      %v1093 = vpack.c.bf16 %v1072, %v1071
      %v1094 = vpack.c.bf16 %v1074, %v1073
      %v1095 = vpack.c.bf16 %v1076, %v1075
      %v1096 = vpack.c.bf16 %v1078, %v1077
      %v1097 = vpack.c.bf16 %v1080, %v1079
      %v1098 = vpack.c.bf16 %v1082, %v1081
      %1115 = vrot.lane.b32.xlu0 %v1083, 96
      %v1116 = vpop.permute.xlu0 %1115
      %1117 = vrot.lane.b32.xlu0 %v1084, 96
      %v1118 = vpop.permute.xlu0 %1117
      %1119 = vrot.lane.b32.xlu0 %v1085, 96
      %v1120 = vpop.permute.xlu0 %1119
      %1121 = vrot.lane.b32.xlu0 %v1086, 96
      %v1122 = vpop.permute.xlu0 %1121
      %1123 = vrot.lane.b32.xlu0 %v1087, 96
      %v1124 = vpop.permute.xlu0 %1123
      %1125 = vrot.lane.b32.xlu0 %v1088, 96
      %v1126 = vpop.permute.xlu0 %1125
      %1127 = vrot.lane.b32.xlu0 %v1089, 96
      %v1128 = vpop.permute.xlu0 %1127
      %1129 = vrot.lane.b32.xlu0 %v1090, 96
      %v1130 = vpop.permute.xlu0 %1129
      %1131 = vrot.lane.b32.xlu0 %v1091, 96
      %v1132 = vpop.permute.xlu0 %1131
      %1133 = vrot.lane.b32.xlu0 %v1092, 96
      %v1134 = vpop.permute.xlu0 %1133
      %1135 = vrot.lane.b32.xlu0 %v1093, 96
      %v1136 = vpop.permute.xlu0 %1135
      %1137 = vrot.lane.b32.xlu0 %v1094, 96
      %v1138 = vpop.permute.xlu0 %1137
      %1139 = vrot.lane.b32.xlu0 %v1095, 96
      %v1140 = vpop.permute.xlu0 %1139
      %1141 = vrot.lane.b32.xlu0 %v1096, 96
      %v1142 = vpop.permute.xlu0 %1141
      %1143 = vrot.lane.b32.xlu0 %v1097, 96
      %v1144 = vpop.permute.xlu0 %1143
      %1145 = vrot.lane.b32.xlu0 %v1098, 96
      %v1146 = vpop.permute.xlu0 %1145
      %1163 = vst.msk [vmem:[#allocation3 + $0x8] sm:$0xff] %vm713, %v1116
      %1164 = vst.msk [vmem:[#allocation3 + $0x20] sm:$0xff] %vm713, %v1118
      %1165 = vst.msk [vmem:[#allocation3 + $0x38] sm:$0xff] %vm713, %v1120
      %1166 = vst.msk [vmem:[#allocation3 + $0x50] sm:$0xff] %vm713, %v1122
      %1167 = vst.msk [vmem:[#allocation3 + $0x68] sm:$0xff] %vm713, %v1124
      %1168 = vst.msk [vmem:[#allocation3 + $0x80] sm:$0xff] %vm713, %v1126
      %1169 = vst.msk [vmem:[#allocation3 + $0x98] sm:$0xff] %vm713, %v1128
      %1170 = vst.msk [vmem:[#allocation3 + $0xb0] sm:$0xff] %vm713, %v1130
      %1171 = vst.msk [vmem:[#allocation3 + $0xc8] sm:$0xff] %vm713, %v1132
      %1172 = vst.msk [vmem:[#allocation3 + $0xe0] sm:$0xff] %vm713, %v1134
      %1173 = vst.msk [vmem:[#allocation3 + $0xf8] sm:$0xff] %vm713, %v1136
      %1174 = vst.msk [vmem:[#allocation3 + $0x110] sm:$0xff] %vm713, %v1138
      %1175 = vst.msk [vmem:[#allocation3 + $0x128] sm:$0xff] %vm713, %v1140
      %1176 = vst.msk [vmem:[#allocation3 + $0x140] sm:$0xff] %vm713, %v1142
      %1177 = vst.msk [vmem:[#allocation3 + $0x158] sm:$0xff] %vm713, %v1144
      %1178 = vst.msk [vmem:[#allocation3 + $0x170] sm:$0xff] %vm713, %v1146
      %v1179 = vld [vmem:[%s922 + $0x2] sm:$0xff]
      %v1180 = vld [vmem:[%s922 + $0xa] sm:$0xff]
      %v1181 = vld [vmem:[%s922 + $0x1a] sm:$0xff]
      %v1182 = vld [vmem:[%s922 + $0x22] sm:$0xff]
      %v1183 = vld [vmem:[%s922 + $0x32] sm:$0xff]
      %v1184 = vld [vmem:[%s922 + $0x3a] sm:$0xff]
      %v1185 = vld [vmem:[%s922 + $0x4a] sm:$0xff]
      %v1186 = vld [vmem:[%s922 + $0x52] sm:$0xff]
      %v1187 = vld [vmem:[%s922 + $0x62] sm:$0xff]
      %v1188 = vld [vmem:[%s922 + $0x6a] sm:$0xff]
      %v1189 = vld [vmem:[%s922 + $0x7a] sm:$0xff]
      %v1190 = vld [vmem:[%s922 + $0x82] sm:$0xff]
      %v1191 = vld [vmem:[%s922 + $0x92] sm:$0xff]
      %v1192 = vld [vmem:[%s922 + $0x9a] sm:$0xff]
      %v1193 = vld [vmem:[%s922 + $0xaa] sm:$0xff]
      %v1194 = vld [vmem:[%s922 + $0xb2] sm:$0xff]
      %v1195 = vld [vmem:[%s922 + $0xc2] sm:$0xff]
      %v1196 = vld [vmem:[%s922 + $0xca] sm:$0xff]
      %v1197 = vld [vmem:[%s922 + $0xda] sm:$0xff]
      %v1198 = vld [vmem:[%s922 + $0xe2] sm:$0xff]
      %v1199 = vld [vmem:[%s922 + $0xf2] sm:$0xff]
      %v1200 = vld [vmem:[%s922 + $0xfa] sm:$0xff]
      %v1201 = vld [vmem:[%s922 + $0x10a] sm:$0xff]
      %v1202 = vld [vmem:[%s922 + $0x112] sm:$0xff]
      %v1203 = vld [vmem:[%s922 + $0x122] sm:$0xff]
      %v1204 = vld [vmem:[%s922 + $0x12a] sm:$0xff]
      %v1205 = vld [vmem:[%s922 + $0x13a] sm:$0xff]
      %v1206 = vld [vmem:[%s922 + $0x142] sm:$0xff]
      %v1207 = vld [vmem:[%s922 + $0x152] sm:$0xff]
      %v1208 = vld [vmem:[%s922 + $0x15a] sm:$0xff]
      %v1209 = vld [vmem:[%s922 + $0x16a] sm:$0xff]
      %v1210 = vld [vmem:[%s922 + $0x172] sm:$0xff]
      %v1211 = vpack.c.bf16 %v1180, %v1179
      %v1212 = vpack.c.bf16 %v1182, %v1181
      %v1213 = vpack.c.bf16 %v1184, %v1183
      %v1214 = vpack.c.bf16 %v1186, %v1185
      %v1215 = vpack.c.bf16 %v1188, %v1187
      %v1216 = vpack.c.bf16 %v1190, %v1189
      %v1217 = vpack.c.bf16 %v1192, %v1191
      %v1218 = vpack.c.bf16 %v1194, %v1193
      %v1219 = vpack.c.bf16 %v1196, %v1195
      %v1220 = vpack.c.bf16 %v1198, %v1197
      %v1221 = vpack.c.bf16 %v1200, %v1199
      %v1222 = vpack.c.bf16 %v1202, %v1201
      %v1223 = vpack.c.bf16 %v1204, %v1203
      %v1224 = vpack.c.bf16 %v1206, %v1205
      %v1225 = vpack.c.bf16 %v1208, %v1207
      %v1226 = vpack.c.bf16 %v1210, %v1209
      %1227 = vst.msk [vmem:[#allocation3 + $0x10] sm:$0xff] %vm172, %v1211
      %1228 = vst.msk [vmem:[#allocation3 + $0x28] sm:$0xff] %vm172, %v1212
      %1229 = vst.msk [vmem:[#allocation3 + $0x40] sm:$0xff] %vm172, %v1213
      %1230 = vst.msk [vmem:[#allocation3 + $0x58] sm:$0xff] %vm172, %v1214
      %1231 = vst.msk [vmem:[#allocation3 + $0x70] sm:$0xff] %vm172, %v1215
      %1232 = vst.msk [vmem:[#allocation3 + $0x88] sm:$0xff] %vm172, %v1216
      %1233 = vst.msk [vmem:[#allocation3 + $0xa0] sm:$0xff] %vm172, %v1217
      %1234 = vst.msk [vmem:[#allocation3 + $0xb8] sm:$0xff] %vm172, %v1218
      %1235 = vst.msk [vmem:[#allocation3 + $0xd0] sm:$0xff] %vm172, %v1219
      %1236 = vst.msk [vmem:[#allocation3 + $0xe8] sm:$0xff] %vm172, %v1220
      %1237 = vst.msk [vmem:[#allocation3 + $0x100] sm:$0xff] %vm172, %v1221
      %1238 = vst.msk [vmem:[#allocation3 + $0x118] sm:$0xff] %vm172, %v1222
      %1239 = vst.msk [vmem:[#allocation3 + $0x130] sm:$0xff] %vm172, %v1223
      %1240 = vst.msk [vmem:[#allocation3 + $0x148] sm:$0xff] %vm172, %v1224
      %1241 = vst.msk [vmem:[#allocation3 + $0x160] sm:$0xff] %vm172, %v1225
      %1242 = vst.msk [vmem:[#allocation3 + $0x178] sm:$0xff] %vm172, %v1226
      %v1243 = vld [vmem:[#allocation3] sm:$0xff]
      %v1244 = vld [vmem:[#allocation3 + $0x8] sm:$0xff]
      %v1245 = vld [vmem:[#allocation3 + $0x10] sm:$0xff]
      %v1246 = vld [vmem:[#allocation3 + $0x18] sm:$0xff]
      %v1247 = vld [vmem:[#allocation3 + $0x20] sm:$0xff]
      %v1248 = vld [vmem:[#allocation3 + $0x28] sm:$0xff]
      %v1249 = vld [vmem:[#allocation3 + $0x30] sm:$0xff]
      %v1250 = vld [vmem:[#allocation3 + $0x38] sm:$0xff]
      %v1251 = vld [vmem:[#allocation3 + $0x40] sm:$0xff]
      %v1252 = vld [vmem:[#allocation3 + $0x48] sm:$0xff]
      %v1253 = vld [vmem:[#allocation3 + $0x50] sm:$0xff]
      %v1254 = vld [vmem:[#allocation3 + $0x58] sm:$0xff]
      %v1255 = vld [vmem:[#allocation3 + $0x60] sm:$0xff]
      %v1256 = vld [vmem:[#allocation3 + $0x68] sm:$0xff]
      %v1257 = vld [vmem:[#allocation3 + $0x70] sm:$0xff]
      %v1258 = vld [vmem:[#allocation3 + $0x78] sm:$0xff]
      %v1259 = vld [vmem:[#allocation3 + $0x80] sm:$0xff]
      %v1260 = vld [vmem:[#allocation3 + $0x88] sm:$0xff]
      %v1261 = vld [vmem:[#allocation3 + $0x90] sm:$0xff]
      %v1262 = vld [vmem:[#allocation3 + $0x98] sm:$0xff]
      %v1263 = vld [vmem:[#allocation3 + $0xa0] sm:$0xff]
      %v1264 = vld [vmem:[#allocation3 + $0xa8] sm:$0xff]
      %v1265 = vld [vmem:[#allocation3 + $0xb0] sm:$0xff]
      %v1266 = vld [vmem:[#allocation3 + $0xb8] sm:$0xff]
      %v1267 = vld [vmem:[#allocation3 + $0xc0] sm:$0xff]
      %v1268 = vld [vmem:[#allocation3 + $0xc8] sm:$0xff]
      %v1269 = vld [vmem:[#allocation3 + $0xd0] sm:$0xff]
      %v1270 = vld [vmem:[#allocation3 + $0xd8] sm:$0xff]
      %v1271 = vld [vmem:[#allocation3 + $0xe0] sm:$0xff]
      %v1272 = vld [vmem:[#allocation3 + $0xe8] sm:$0xff]
      %v1273 = vld [vmem:[#allocation3 + $0xf0] sm:$0xff]
      %v1274 = vld [vmem:[#allocation3 + $0xf8] sm:$0xff]
      %v1275 = vld [vmem:[#allocation3 + $0x100] sm:$0xff]
      %v1276 = vld [vmem:[#allocation3 + $0x108] sm:$0xff]
      %v1277 = vld [vmem:[#allocation3 + $0x110] sm:$0xff]
      %v1278 = vld [vmem:[#allocation3 + $0x118] sm:$0xff]
      %v1279 = vld [vmem:[#allocation3 + $0x120] sm:$0xff]
      %v1280 = vld [vmem:[#allocation3 + $0x128] sm:$0xff]
      %v1281 = vld [vmem:[#allocation3 + $0x130] sm:$0xff]
      %v1282 = vld [vmem:[#allocation3 + $0x138] sm:$0xff]
      %v1283 = vld [vmem:[#allocation3 + $0x140] sm:$0xff]
      %v1284 = vld [vmem:[#allocation3 + $0x148] sm:$0xff]
      %v1285 = vld [vmem:[#allocation3 + $0x150] sm:$0xff]
      %v1286 = vld [vmem:[#allocation3 + $0x158] sm:$0xff]
      %v1287 = vld [vmem:[#allocation3 + $0x160] sm:$0xff]
      %v1288 = vld [vmem:[#allocation3 + $0x168] sm:$0xff]
      %v1289 = vld [vmem:[#allocation3 + $0x170] sm:$0xff]
      %v1290 = vld [vmem:[#allocation3 + $0x178] sm:$0xff]
      %v1291 = vld [vmem:[%s1] sm:$0xf]
      %v1292 = vld [vmem:[%s1 + $0x4] sm:$0xf]
      %v1293 = vld [vmem:[%s1 + $0x8] sm:$0xf]
      %v1294 = vld [vmem:[%s1 + $0xc] sm:$0xf]
      %v1295 = vld [vmem:[%s1 + $0x10] sm:$0xf]
      %v1296 = vld [vmem:[%s1 + $0x14] sm:$0xf]
      %v1297 = vld [vmem:[%s1 + $0x18] sm:$0xf]
      %v1298 = vld [vmem:[%s1 + $0x1c] sm:$0xf]
      %v1299 = vld [vmem:[%s1 + $0x20] sm:$0xf]
      %v1300 = vld [vmem:[%s1 + $0x24] sm:$0xf]
      %v1301 = vld [vmem:[%s1 + $0x28] sm:$0xf]
      %v1302 = vld [vmem:[%s1 + $0x2c] sm:$0xf]
      %v1303 = vld [vmem:[%s1 + $0x30] sm:$0xf]
      %v1304 = vld [vmem:[%s1 + $0x34] sm:$0xf]
      %v1305 = vld [vmem:[%s1 + $0x38] sm:$0xf]
      %v1306 = vld [vmem:[%s1 + $0x3c] sm:$0xf]
      %v1307 = vld [vmem:[%s1 + $0x40] sm:$0xf]
      %v1308 = vld [vmem:[%s1 + $0x44] sm:$0xf]
      %v1309 = vld [vmem:[%s1 + $0x48] sm:$0xf]
      %v1310 = vld [vmem:[%s1 + $0x4c] sm:$0xf]
      %v1311 = vld [vmem:[%s1 + $0x50] sm:$0xf]
      %v1312 = vld [vmem:[%s1 + $0x54] sm:$0xf]
      %v1313 = vld [vmem:[%s1 + $0x58] sm:$0xf]
      %v1314 = vld [vmem:[%s1 + $0x5c] sm:$0xf]
      %v1315 = vld [vmem:[%s1 + $0x60] sm:$0xf]
      %v1316 = vld [vmem:[%s1 + $0x64] sm:$0xf]
      %v1317 = vld [vmem:[%s1 + $0x68] sm:$0xf]
      %v1318 = vld [vmem:[%s1 + $0x6c] sm:$0xf]
      %v1319 = vld [vmem:[%s1 + $0x70] sm:$0xf]
      %v1320 = vld [vmem:[%s1 + $0x74] sm:$0xf]
      %v1321 = vld [vmem:[%s1 + $0x78] sm:$0xf]
      %v1322 = vld [vmem:[%s1 + $0x7c] sm:$0xf]
      %v1323 = vld [vmem:[%s1 + $0x80] sm:$0xf]
      %v1324 = vld [vmem:[%s1 + $0x84] sm:$0xf]
      %v1325 = vld [vmem:[%s1 + $0x88] sm:$0xf]
      %v1326 = vld [vmem:[%s1 + $0x8c] sm:$0xf]
      %v1327 = vld [vmem:[%s2] sm:$0x1]
      %v1329 = vlaneseq
      %v1330 = vshrl.u32 %v1329, 7
      %v1331 = vsub.s32 0, %v1330
      %v1332 = vrot.slane %v1327, %v1331
      %v1370 = vunpack.c.l.b16 %v1291
      %v1371 = vunpack.c.l.b16 %v1292
      %v1372 = vunpack.c.l.b16 %v1293
      %v1373 = vunpack.c.l.b16 %v1294
      %v1374 = vunpack.c.l.b16 %v1295
      %v1375 = vunpack.c.l.b16 %v1296
      %v1376 = vunpack.c.l.b16 %v1297
      %v1377 = vunpack.c.l.b16 %v1298
      %v1378 = vunpack.c.l.b16 %v1299
      %v1379 = vunpack.c.l.b16 %v1300
      %v1380 = vunpack.c.l.b16 %v1301
      %v1381 = vunpack.c.l.b16 %v1302
      %v1382 = vunpack.c.l.b16 %v1303
      %v1383 = vunpack.c.l.b16 %v1304
      %v1384 = vunpack.c.l.b16 %v1305
      %v1385 = vunpack.c.l.b16 %v1306
      %v1386 = vunpack.c.l.b16 %v1307
      %v1387 = vunpack.c.l.b16 %v1308
      %v1388 = vunpack.c.l.b16 %v1309
      %v1389 = vunpack.c.l.b16 %v1310
      %v1390 = vunpack.c.l.b16 %v1311
      %v1391 = vunpack.c.l.b16 %v1312
      %v1392 = vunpack.c.l.b16 %v1313
      %v1393 = vunpack.c.l.b16 %v1314
      %v1394 = vunpack.c.l.b16 %v1315
      %v1395 = vunpack.c.l.b16 %v1316
      %v1396 = vunpack.c.l.b16 %v1317
      %v1397 = vunpack.c.l.b16 %v1318
      %v1398 = vunpack.c.l.b16 %v1319
      %v1399 = vunpack.c.l.b16 %v1320
      %v1400 = vunpack.c.l.b16 %v1321
      %v1401 = vunpack.c.l.b16 %v1322
      %v1402 = vunpack.c.l.b16 %v1323
      %v1403 = vunpack.c.l.b16 %v1324
      %v1404 = vunpack.c.l.b16 %v1325
      %v1405 = vunpack.c.l.b16 %v1326
      %v1406 = vpack.c.b16 %v1371, %v1370
      %v1407 = vpack.c.b16 %v1373, %v1372
      %v1408 = vpack.c.b16 %v1375, %v1374
      %v1409 = vpack.c.b16 %v1377, %v1376
      %v1410 = vpack.c.b16 %v1379, %v1378
      %v1411 = vpack.c.b16 %v1381, %v1380
      %v1412 = vpack.c.b16 %v1383, %v1382
      %v1413 = vpack.c.b16 %v1385, %v1384
      %v1414 = vpack.c.b16 %v1387, %v1386
      %v1415 = vpack.c.b16 %v1389, %v1388
      %v1416 = vpack.c.b16 %v1391, %v1390
      %v1417 = vpack.c.b16 %v1393, %v1392
      %v1418 = vpack.c.b16 %v1395, %v1394
      %v1419 = vpack.c.b16 %v1397, %v1396
      %v1420 = vpack.c.b16 %v1399, %v1398
      %v1421 = vpack.c.b16 %v1401, %v1400
      %v1422 = vpack.c.b16 %v1403, %v1402
      %v1423 = vpack.c.b16 %v1405, %v1404
      %v1443 = vsel %vm172, %v1245, 0
      %v1446 = vsel %vm172, %v1248, 0
      %v1449 = vsel %vm172, %v1251, 0
      %v1452 = vsel %vm172, %v1254, 0
      %v1455 = vsel %vm172, %v1257, 0
      %v1458 = vsel %vm172, %v1260, 0
      %v1461 = vsel %vm172, %v1263, 0
      %v1464 = vsel %vm172, %v1266, 0
      %v1467 = vsel %vm172, %v1269, 0
      %v1470 = vsel %vm172, %v1272, 0
      %v1473 = vsel %vm172, %v1275, 0
      %v1476 = vsel %vm172, %v1278, 0
      %v1479 = vsel %vm172, %v1281, 0
      %v1482 = vsel %vm172, %v1284, 0
      %v1485 = vsel %vm172, %v1287, 0
      %v1488 = vsel %vm172, %v1290, 0
      %1490 = vmatprep.subr.bf16.mxu0 0
      %1491 = vmatpush1.bf16.msra.mxu0 %v1406
      %1492 = vmatprep.subr.bf16.mxu0 0
      %1493 = vmatpush1.bf16.msra.mxu0 %v1407
      %1494 = vmatprep.subr.bf16.mxu0 0
      %1495 = vmatpush1.bf16.msra.mxu0 %v1408
      %1496 = vmatprep.subr.bf16.mxu0 0
      %1497 = vmatpush1.bf16.msra.mxu0 %v1409
      %1498 = vmatprep.subr.bf16.mxu0 0
      %1499 = vmatpush1.bf16.msra.mxu0 %v1410
      %1500 = vmatprep.subr.bf16.mxu0 0
      %1501 = vmatpush1.bf16.msra.mxu0 %v1411
      %1502 = vmatprep.subr.bf16.mxu0 0
      %1503 = vmatpush1.bf16.msra.mxu0 %v1412
      %1504 = vmatprep.subr.bf16.mxu0 0
      %1505 = vmatpush1.bf16.msra.mxu0 %v1413
      %1506 = vmatprep.subr.bf16.mxu0 0
      %1507 = vmatpush1.bf16.msra.mxu0 %v1414
      %1508 = vmatprep.subr.bf16.mxu0 0
      %1509 = vmatpush1.bf16.msra.mxu0 %v1415
      %1510 = vmatprep.subr.bf16.mxu0 0
      %1511 = vmatpush1.bf16.msra.mxu0 %v1416
      %1512 = vmatprep.subr.bf16.mxu0 0
      %1513 = vmatpush1.bf16.msra.mxu0 %v1417
      %1514 = vmatprep.subr.bf16.mxu0 0
      %1515 = vmatpush1.bf16.msra.mxu0 %v1418
      %1516 = vmatprep.subr.bf16.mxu0 0
      %1517 = vmatpush1.bf16.msra.mxu0 %v1419
      %1518 = vmatprep.subr.bf16.mxu0 0
      %1519 = vmatpush1.bf16.msra.mxu0 %v1420
      %1520 = vmatprep.subr.bf16.mxu0 0
      %1521 = vmatpush1.bf16.msra.mxu0 %v1421
      %1522 = vmatprep.mubr.bf16.mxu0 %v1244
      %1523 = vmatmul.mubr.bf16.gmra.mrb[0].mxu0 %v1243
      %v1524 = vpop.f32.mrb[0].mxu0
      %v1525 = vadd.f32 %v1332, %v1524
      %v1526 = vpop.f32.mrb[0].mxu0
      %v1527 = vpop.f32.mrb[0].mxu0
      %v1528 = vadd.f32 %v1332, %v1527
      %v1529 = vpop.f32.mrb[0].mxu0
      %1530 = vmatprep.mubr.bf16.mxu0 %v1247
      %1531 = vmatmul.mubr.bf16.gmra.mrb[0].mxu0 %v1246
      %v1532 = vpop.f32.mrb[0].mxu0
      %v1533 = vadd.f32 %v1332, %v1532
      %v1534 = vpop.f32.mrb[0].mxu0
      %v1535 = vpop.f32.mrb[0].mxu0
      %v1536 = vadd.f32 %v1332, %v1535
      %v1537 = vpop.f32.mrb[0].mxu0
      %1538 = vmatprep.mubr.bf16.mxu0 %v1250
      %1539 = vmatmul.mubr.bf16.gmra.mrb[0].mxu0 %v1249
      %v1540 = vpop.f32.mrb[0].mxu0
      %v1541 = vadd.f32 %v1332, %v1540
      %v1542 = vpop.f32.mrb[0].mxu0
      %v1543 = vpop.f32.mrb[0].mxu0
      %v1544 = vadd.f32 %v1332, %v1543
      %v1545 = vpop.f32.mrb[0].mxu0
      %1546 = vmatprep.mubr.bf16.mxu0 %v1253
      %1547 = vmatmul.mubr.bf16.gmra.mrb[0].mxu0 %v1252
      %v1548 = vpop.f32.mrb[0].mxu0
      %v1549 = vadd.f32 %v1332, %v1548
      %v1550 = vpop.f32.mrb[0].mxu0
      %v1551 = vpop.f32.mrb[0].mxu0
      %v1552 = vadd.f32 %v1332, %v1551
      %v1553 = vpop.f32.mrb[0].mxu0
      %1554 = vmatprep.mubr.bf16.mxu0 %v1256
      %1555 = vmatmul.mubr.bf16.gmra.mrb[0].mxu0 %v1255
      %v1556 = vpop.f32.mrb[0].mxu0
      %v1557 = vadd.f32 %v1332, %v1556
      %v1558 = vpop.f32.mrb[0].mxu0
      %v1559 = vpop.f32.mrb[0].mxu0
      %v1560 = vadd.f32 %v1332, %v1559
      %v1561 = vpop.f32.mrb[0].mxu0
      %1562 = vmatprep.mubr.bf16.mxu0 %v1259
      %1563 = vmatmul.mubr.bf16.gmra.mrb[0].mxu0 %v1258
      %v1564 = vpop.f32.mrb[0].mxu0
      %v1565 = vadd.f32 %v1332, %v1564
      %v1566 = vpop.f32.mrb[0].mxu0
      %v1567 = vpop.f32.mrb[0].mxu0
      %v1568 = vadd.f32 %v1332, %v1567
      %v1569 = vpop.f32.mrb[0].mxu0
      %1570 = vmatprep.mubr.bf16.mxu0 %v1262
      %1571 = vmatmul.mubr.bf16.gmra.mrb[0].mxu0 %v1261
      %v1572 = vpop.f32.mrb[0].mxu0
      %v1573 = vadd.f32 %v1332, %v1572
      %v1574 = vpop.f32.mrb[0].mxu0
      %v1575 = vpop.f32.mrb[0].mxu0
      %v1576 = vadd.f32 %v1332, %v1575
      %v1577 = vpop.f32.mrb[0].mxu0
      %1578 = vmatprep.mubr.bf16.mxu0 %v1265
      %1579 = vmatmul.mubr.bf16.gmra.mrb[0].mxu0 %v1264
      %v1580 = vpop.f32.mrb[0].mxu0
      %v1581 = vadd.f32 %v1332, %v1580
      %v1582 = vpop.f32.mrb[0].mxu0
      %v1583 = vpop.f32.mrb[0].mxu0
      %v1584 = vadd.f32 %v1332, %v1583
      %v1585 = vpop.f32.mrb[0].mxu0
      %1586 = vmatprep.mubr.bf16.mxu0 %v1268
      %1587 = vmatmul.mubr.bf16.gmra.mrb[0].mxu0 %v1267
      %v1588 = vpop.f32.mrb[0].mxu0
      %v1589 = vadd.f32 %v1332, %v1588
      %v1590 = vpop.f32.mrb[0].mxu0
      %v1591 = vpop.f32.mrb[0].mxu0
      %v1592 = vadd.f32 %v1332, %v1591
      %v1593 = vpop.f32.mrb[0].mxu0
      %1594 = vmatprep.mubr.bf16.mxu0 %v1271
      %1595 = vmatmul.mubr.bf16.gmra.mrb[0].mxu0 %v1270
      %v1596 = vpop.f32.mrb[0].mxu0
      %v1597 = vadd.f32 %v1332, %v1596
      %v1598 = vpop.f32.mrb[0].mxu0
      %v1599 = vpop.f32.mrb[0].mxu0
      %v1600 = vadd.f32 %v1332, %v1599
      %v1601 = vpop.f32.mrb[0].mxu0
      %1602 = vmatprep.mubr.bf16.mxu0 %v1274
      %1603 = vmatmul.mubr.bf16.gmra.mrb[0].mxu0 %v1273
      %v1604 = vpop.f32.mrb[0].mxu0
      %v1605 = vadd.f32 %v1332, %v1604
      %v1606 = vpop.f32.mrb[0].mxu0
      %v1607 = vpop.f32.mrb[0].mxu0
      %v1608 = vadd.f32 %v1332, %v1607
      %v1609 = vpop.f32.mrb[0].mxu0
      %1610 = vmatprep.mubr.bf16.mxu0 %v1277
      %1611 = vmatmul.mubr.bf16.gmra.mrb[0].mxu0 %v1276
      %v1612 = vpop.f32.mrb[0].mxu0
      %v1613 = vadd.f32 %v1332, %v1612
      %v1614 = vpop.f32.mrb[0].mxu0
      %v1615 = vpop.f32.mrb[0].mxu0
      %v1616 = vadd.f32 %v1332, %v1615
      %v1617 = vpop.f32.mrb[0].mxu0
      %1618 = vmatprep.mubr.bf16.mxu0 %v1280
      %1619 = vmatmul.mubr.bf16.gmra.mrb[0].mxu0 %v1279
      %v1620 = vpop.f32.mrb[0].mxu0
      %v1621 = vadd.f32 %v1332, %v1620
      %v1622 = vpop.f32.mrb[0].mxu0
      %v1623 = vpop.f32.mrb[0].mxu0
      %v1624 = vadd.f32 %v1332, %v1623
      %v1625 = vpop.f32.mrb[0].mxu0
      %1626 = vmatprep.mubr.bf16.mxu0 %v1283
      %1627 = vmatmul.mubr.bf16.gmra.mrb[0].mxu0 %v1282
      %v1628 = vpop.f32.mrb[0].mxu0
      %v1629 = vadd.f32 %v1332, %v1628
      %v1630 = vpop.f32.mrb[0].mxu0
      %v1631 = vpop.f32.mrb[0].mxu0
      %v1632 = vadd.f32 %v1332, %v1631
      %v1633 = vpop.f32.mrb[0].mxu0
      %1634 = vmatprep.mubr.bf16.mxu0 %v1286
      %1635 = vmatmul.mubr.bf16.gmra.mrb[0].mxu0 %v1285
      %v1636 = vpop.f32.mrb[0].mxu0
      %v1637 = vadd.f32 %v1332, %v1636
      %v1638 = vpop.f32.mrb[0].mxu0
      %v1639 = vpop.f32.mrb[0].mxu0
      %v1640 = vadd.f32 %v1332, %v1639
      %v1641 = vpop.f32.mrb[0].mxu0
      %1642 = vmatprep.mubr.bf16.mxu0 %v1289
      %1643 = vmatmul.mubr.bf16.gmra.mrb[0].mxu0 %v1288
      %v1644 = vpop.f32.mrb[0].mxu0
      %v1645 = vadd.f32 %v1332, %v1644
      %v1646 = vpop.f32.mrb[0].mxu0
      %v1647 = vpop.f32.mrb[0].mxu0
      %v1648 = vadd.f32 %v1332, %v1647
      %v1649 = vpop.f32.mrb[0].mxu0
      %1650 = vdwg.mxu0
      %1651 = vmatprep.subr.bf16.mxu0 0
      %1652 = vmatpush1.bf16.msra.mxu0 %v1422
      %1653 = vmatprep.subr.bf16.mxu0 0
      %1654 = vmatpush1.bf16.msra.mxu0 %v1423
      %1655 = vmatprep.subr.bf16.mxu0 0
      %1656 = vmatpush1.bf16.msra.mxu0 0
      %1657 = vmatprep.subr.bf16.mxu0 0
      %1658 = vmatpush1.bf16.msra.mxu0 0
      %1659 = vmatprep.subr.bf16.mxu0 0
      %1660 = vmatpush1.bf16.msra.mxu0 0
      %1661 = vmatprep.subr.bf16.mxu0 0
      %1662 = vmatpush1.bf16.msra.mxu0 0
      %1663 = vmatprep.subr.bf16.mxu0 0
      %1664 = vmatpush1.bf16.msra.mxu0 0
      %1665 = vmatprep.subr.bf16.mxu0 0
      %1666 = vmatpush1.bf16.msra.mxu0 0
      %1667 = vmatprep.subr.bf16.mxu0 0
      %1668 = vmatpush1.bf16.msra.mxu0 0
      %1669 = vmatprep.subr.bf16.mxu0 0
      %1670 = vmatpush1.bf16.msra.mxu0 0
      %1671 = vmatprep.subr.bf16.mxu0 0
      %1672 = vmatpush1.bf16.msra.mxu0 0
      %1673 = vmatprep.subr.bf16.mxu0 0
      %1674 = vmatpush1.bf16.msra.mxu0 0
      %1675 = vmatprep.subr.bf16.mxu0 0
      %1676 = vmatpush1.bf16.msra.mxu0 0
      %1677 = vmatprep.subr.bf16.mxu0 0
      %1678 = vmatpush1.bf16.msra.mxu0 0
      %1679 = vmatprep.subr.bf16.mxu0 0
      %1680 = vmatpush1.bf16.msra.mxu0 0
      %1681 = vmatprep.subr.bf16.mxu0 0
      %1682 = vmatpush1.bf16.msra.mxu0 0
      %1683 = vmatprep.mubr.bf16.mxu0 0
      %1684 = vmatmul.mubr.bf16.gmra.mrb[0].mxu0 %v1443
      %v1685 = vpop.f32.mrb[0].mxu0
      %v1686 = vadd.f32 %v1525, %v1685
      %v1687 = vpop.f32.mrb[0].mxu0
      %v1688 = vpop.f32.mrb[0].mxu0
      %v1689 = vadd.f32 %v1528, %v1688
      %v1690 = vpop.f32.mrb[0].mxu0
      %1691 = vmatprep.mubr.bf16.mxu0 0
      %1692 = vmatmul.mubr.bf16.gmra.mrb[0].mxu0 %v1446
      %v1693 = vpop.f32.mrb[0].mxu0
      %v1694 = vadd.f32 %v1533, %v1693
      %v1695 = vpop.f32.mrb[0].mxu0
      %v1696 = vpop.f32.mrb[0].mxu0
      %v1697 = vadd.f32 %v1536, %v1696
      %v1698 = vpop.f32.mrb[0].mxu0
      %1699 = vmatprep.mubr.bf16.mxu0 0
      %1700 = vmatmul.mubr.bf16.gmra.mrb[0].mxu0 %v1449
      %v1701 = vpop.f32.mrb[0].mxu0
      %v1702 = vadd.f32 %v1541, %v1701
      %v1703 = vpop.f32.mrb[0].mxu0
      %v1704 = vpop.f32.mrb[0].mxu0
      %v1705 = vadd.f32 %v1544, %v1704
      %v1706 = vpop.f32.mrb[0].mxu0
      %1707 = vmatprep.mubr.bf16.mxu0 0
      %1708 = vmatmul.mubr.bf16.gmra.mrb[0].mxu0 %v1452
      %v1709 = vpop.f32.mrb[0].mxu0
      %v1710 = vadd.f32 %v1549, %v1709
      %v1711 = vpop.f32.mrb[0].mxu0
      %v1712 = vpop.f32.mrb[0].mxu0
      %v1713 = vadd.f32 %v1552, %v1712
      %v1714 = vpop.f32.mrb[0].mxu0
      %1715 = vmatprep.mubr.bf16.mxu0 0
      %1716 = vmatmul.mubr.bf16.gmra.mrb[0].mxu0 %v1455
      %v1717 = vpop.f32.mrb[0].mxu0
      %v1718 = vadd.f32 %v1557, %v1717
      %v1719 = vpop.f32.mrb[0].mxu0
      %v1720 = vpop.f32.mrb[0].mxu0
      %v1721 = vadd.f32 %v1560, %v1720
      %v1722 = vpop.f32.mrb[0].mxu0
      %1723 = vmatprep.mubr.bf16.mxu0 0
      %1724 = vmatmul.mubr.bf16.gmra.mrb[0].mxu0 %v1458
      %v1725 = vpop.f32.mrb[0].mxu0
      %v1726 = vadd.f32 %v1565, %v1725
      %v1727 = vpop.f32.mrb[0].mxu0
      %v1728 = vpop.f32.mrb[0].mxu0
      %v1729 = vadd.f32 %v1568, %v1728
      %v1730 = vpop.f32.mrb[0].mxu0
      %1731 = vmatprep.mubr.bf16.mxu0 0
      %1732 = vmatmul.mubr.bf16.gmra.mrb[0].mxu0 %v1461
      %v1733 = vpop.f32.mrb[0].mxu0
      %v1734 = vadd.f32 %v1573, %v1733
      %v1735 = vpop.f32.mrb[0].mxu0
      %v1736 = vpop.f32.mrb[0].mxu0
      %v1737 = vadd.f32 %v1576, %v1736
      %v1738 = vpop.f32.mrb[0].mxu0
      %1739 = vmatprep.mubr.bf16.mxu0 0
      %1740 = vmatmul.mubr.bf16.gmra.mrb[0].mxu0 %v1464
      %v1741 = vpop.f32.mrb[0].mxu0
      %v1742 = vadd.f32 %v1581, %v1741
      %v1743 = vpop.f32.mrb[0].mxu0
      %v1744 = vpop.f32.mrb[0].mxu0
      %v1745 = vadd.f32 %v1584, %v1744
      %v1746 = vpop.f32.mrb[0].mxu0
      %1747 = vmatprep.mubr.bf16.mxu0 0
      %1748 = vmatmul.mubr.bf16.gmra.mrb[0].mxu0 %v1467
      %v1749 = vpop.f32.mrb[0].mxu0
      %v1750 = vadd.f32 %v1589, %v1749
      %v1751 = vpop.f32.mrb[0].mxu0
      %v1752 = vpop.f32.mrb[0].mxu0
      %v1753 = vadd.f32 %v1592, %v1752
      %v1754 = vpop.f32.mrb[0].mxu0
      %1755 = vmatprep.mubr.bf16.mxu0 0
      %1756 = vmatmul.mubr.bf16.gmra.mrb[0].mxu0 %v1470
      %v1757 = vpop.f32.mrb[0].mxu0
      %v1758 = vadd.f32 %v1597, %v1757
      %v1759 = vpop.f32.mrb[0].mxu0
      %v1760 = vpop.f32.mrb[0].mxu0
      %v1761 = vadd.f32 %v1600, %v1760
      %v1762 = vpop.f32.mrb[0].mxu0
      %1763 = vmatprep.mubr.bf16.mxu0 0
      %1764 = vmatmul.mubr.bf16.gmra.mrb[0].mxu0 %v1473
      %v1765 = vpop.f32.mrb[0].mxu0
      %v1766 = vadd.f32 %v1605, %v1765
      %v1767 = vpop.f32.mrb[0].mxu0
      %v1768 = vpop.f32.mrb[0].mxu0
      %v1769 = vadd.f32 %v1608, %v1768
      %v1770 = vpop.f32.mrb[0].mxu0
      %1771 = vmatprep.mubr.bf16.mxu0 0
      %1772 = vmatmul.mubr.bf16.gmra.mrb[0].mxu0 %v1476
      %v1773 = vpop.f32.mrb[0].mxu0
      %v1774 = vadd.f32 %v1613, %v1773
      %v1775 = vpop.f32.mrb[0].mxu0
      %v1776 = vpop.f32.mrb[0].mxu0
      %v1777 = vadd.f32 %v1616, %v1776
      %v1778 = vpop.f32.mrb[0].mxu0
      %1779 = vmatprep.mubr.bf16.mxu0 0
      %1780 = vmatmul.mubr.bf16.gmra.mrb[0].mxu0 %v1479
      %v1781 = vpop.f32.mrb[0].mxu0
      %v1782 = vadd.f32 %v1621, %v1781
      %v1783 = vpop.f32.mrb[0].mxu0
      %v1784 = vpop.f32.mrb[0].mxu0
      %v1785 = vadd.f32 %v1624, %v1784
      %v1786 = vpop.f32.mrb[0].mxu0
      %1787 = vmatprep.mubr.bf16.mxu0 0
      %1788 = vmatmul.mubr.bf16.gmra.mrb[0].mxu0 %v1482
      %v1789 = vpop.f32.mrb[0].mxu0
      %v1790 = vadd.f32 %v1629, %v1789
      %v1791 = vpop.f32.mrb[0].mxu0
      %v1792 = vpop.f32.mrb[0].mxu0
      %v1793 = vadd.f32 %v1632, %v1792
      %v1794 = vpop.f32.mrb[0].mxu0
      %1795 = vmatprep.mubr.bf16.mxu0 0
      %1796 = vmatmul.mubr.bf16.gmra.mrb[0].mxu0 %v1485
      %v1797 = vpop.f32.mrb[0].mxu0
      %v1798 = vadd.f32 %v1637, %v1797
      %v1799 = vpop.f32.mrb[0].mxu0
      %v1800 = vpop.f32.mrb[0].mxu0
      %v1801 = vadd.f32 %v1640, %v1800
      %v1802 = vpop.f32.mrb[0].mxu0
      %1803 = vmatprep.mubr.bf16.mxu0 0
      %1804 = vmatmul.mubr.bf16.gmra.mrb[0].mxu0 %v1488
      %v1805 = vpop.f32.mrb[0].mxu0
      %v1806 = vadd.f32 %v1645, %v1805
      %v1807 = vpop.f32.mrb[0].mxu0
      %v1808 = vpop.f32.mrb[0].mxu0
      %v1809 = vadd.f32 %v1648, %v1808
      %v1810 = vpop.f32.mrb[0].mxu0
      %1811 = vdwg.mxu0
      %1812 = vst [vmem:[%s170] sm:$0xff] %v1686
      %1813 = vst [vmem:[%s170 + $0x8] sm:$0xff] %v1689
      %1814 = vst [vmem:[%s170 + $0x10] sm:$0xff] %v1694
      %1815 = vst [vmem:[%s170 + $0x18] sm:$0xff] %v1697
      %1816 = vst [vmem:[%s170 + $0x20] sm:$0xff] %v1702
      %1817 = vst [vmem:[%s170 + $0x28] sm:$0xff] %v1705
      %1818 = vst [vmem:[%s170 + $0x30] sm:$0xff] %v1710
      %1819 = vst [vmem:[%s170 + $0x38] sm:$0xff] %v1713
      %1820 = vst [vmem:[%s170 + $0x40] sm:$0xff] %v1718
      %1821 = vst [vmem:[%s170 + $0x48] sm:$0xff] %v1721
      %1822 = vst [vmem:[%s170 + $0x50] sm:$0xff] %v1726
      %1823 = vst [vmem:[%s170 + $0x58] sm:$0xff] %v1729
      %1824 = vst [vmem:[%s170 + $0x60] sm:$0xff] %v1734
      %1825 = vst [vmem:[%s170 + $0x68] sm:$0xff] %v1737
      %1826 = vst [vmem:[%s170 + $0x70] sm:$0xff] %v1742
      %1827 = vst [vmem:[%s170 + $0x78] sm:$0xff] %v1745
      %1828 = vst [vmem:[%s170 + $0x80] sm:$0xff] %v1750
      %1829 = vst [vmem:[%s170 + $0x88] sm:$0xff] %v1753
      %1830 = vst [vmem:[%s170 + $0x90] sm:$0xff] %v1758
      %1831 = vst [vmem:[%s170 + $0x98] sm:$0xff] %v1761
      %1832 = vst [vmem:[%s170 + $0xa0] sm:$0xff] %v1766
      %1833 = vst [vmem:[%s170 + $0xa8] sm:$0xff] %v1769
      %1834 = vst [vmem:[%s170 + $0xb0] sm:$0xff] %v1774
      %1835 = vst [vmem:[%s170 + $0xb8] sm:$0xff] %v1777
      %1836 = vst [vmem:[%s170 + $0xc0] sm:$0xff] %v1782
      %1837 = vst [vmem:[%s170 + $0xc8] sm:$0xff] %v1785
      %1838 = vst [vmem:[%s170 + $0xd0] sm:$0xff] %v1790
      %1839 = vst [vmem:[%s170 + $0xd8] sm:$0xff] %v1793
      %1840 = vst [vmem:[%s170 + $0xe0] sm:$0xff] %v1798
      %1841 = vst [vmem:[%s170 + $0xe8] sm:$0xff] %v1801
      %1842 = vst [vmem:[%s170 + $0xf0] sm:$0xff] %v1806
      %1843 = vst [vmem:[%s170 + $0xf8] sm:$0xff] %v1809
      %p1844 = scmp.lt.s32.totalorder %s14, 1
      %s1845 = scalar_select %p1844, %s14, 1
      %s1846 = smul.addr %s1845, 32
      %s1847 = smul.addr %s1846, 8
      %s1848 = scalar_lea.vmem %s3, %s1847
      // Predicated region
      $region33: #{decoder_forward.5} parent=31 // pred_check
        %p1849 = pneg %p100
      $region34: #{decoder_forward.5} parent=31 // pred_check_branch
        %1851 = sbr.rel (%p1849) target = $region36
      $region35: #{decoder_forward.5} parent=31 // pred_region
        _
      $region36: #{decoder_forward.5} parent=31 // pred_fallthru
        _
    $region32: #{decoder_forward.5} parent=5 // pred_fallthru
      _
    %p1852 = scmp.le.s32.totalorder 2, %s9
    // Predicated region
    $region37: #{decoder_forward.5} parent=5 // pred_check
      %p1853 = pneg %p1852
    $region38: #{decoder_forward.5} parent=5 // pred_check_branch
      %1855 = sbr.rel (%p1853) target = $region40
    $region39: #{decoder_forward.5} parent=5 // pred_region
      %s1856 = ssub.s32 %s9, 2
      // Predicated region
      $region41: #{decoder_forward.5} parent=39 // pred_check
        %p1857 = pneg %p106
      $region42: #{decoder_forward.5} parent=39 // pred_check_branch
        %1859 = sbr.rel (%p1857) target = $region44
      $region43: #{decoder_forward.5} parent=39 // pred_region
        %p1860 = scmp.lt.s32.totalorder %s15, 1
        %s1861 = scalar_select %p1860, %s15, 1
        %s1862 = smul.addr %s1861, 32
        %s1863 = smul.addr %s1862, 8
        %s1864 = scalar_lea.vmem %s3, %s1863
      $region44: #{decoder_forward.5} parent=39 // pred_fallthru
        _
    $region40: #{decoder_forward.5} parent=5 // pred_fallthru
      _
  $region6: #{decoder_forward.5} parent=0 // loop_footer
    %s13 = sadd.s32 1, %s9
  $region7: #{decoder_forward.5} parent=0 // loop_footer_branch
    %8 = sbr.rel target = $region3
  $region8: #{decoder_forward.5} parent=0 // loop_exit
    _

</llo_original>
